<compile_context>
chip_gen: v5e
topology: v5e:2x2
jax: 0.10.0
libtpu: 0.0.40
codegen_flags: <defaults>
</compile_context>

<pallas_src>
import jax
import jax.numpy as jnp
from jax import lax
from jax.experimental import pallas as pl
from jax.experimental.pallas import tpu as pltpu


# ---------------------------------------------------------------- kernel ----

def _make_fused_kernel(num_layers, num_heads, project):
    """Whole PerceiverResampler forward for one batch element per grid step."""

    def kernel(*refs):
        if project:
            (lat0_ref, x_ref, pw_ref, pb_ref,
             wqkv_ref, wo_ref, bqkv_ref, bvec_ref, o_ref) = refs
        else:
            (lat0_ref, x_ref,
             wqkv_ref, wo_ref, bqkv_ref, bvec_ref, o_ref) = refs

        bf, f32 = jnp.bfloat16, jnp.float32
        L, D = lat0_ref.shape
        H = num_heads
        hd = D // H

        # -- fused input projection (once per batch); K/V source in bf16 -----
        if project:
            xx = (jnp.dot(x_ref[0], pw_ref[...], preferred_element_type=f32)
                  + pb_ref[...]).astype(bf)                       # (S, D)
        else:
            xx = x_ref[0]                                         # (S, D) bf16
        S = xx.shape[0]

        # K/V source broadcast over heads once (constant across layers; hoisted
        # out of the layer loop so it is not re-broadcast per iteration).
        x_b = jnp.broadcast_to(xx[None], (H, S, D))               # (H, S, D)

        def layer_body(i, lat):
            # lat: (L, D) f32 carried latent state.
            w = wqkv_ref[i]            # (3, H, D, hd) bf16; scale folded in Wq
            wo = wo_ref[i]             # (H, hd, D)    bf16
            bqkv = bqkv_ref[i]         # (3, H, hd)    f32; scale folded in bq
            bvec = bvec_ref[i]         # (3, D)        f32: bo, gamma, beta
            bo, gamma, beta = bvec[0:1], bvec[1:2], bvec[2:3]

            lat_b = jnp.broadcast_to(lat.astype(bf)[None], (H, L, D))

            # Per-head QKV projections: leading-batch batched matmuls, no
            # transposes.  bf16 operands, f32 MXU accumulation.
            qh = (jnp.einsum("hld,hdk->hlk", lat_b, w[0],
                             preferred_element_type=f32)
                  + bqkv[0][:, None, :]).astype(bf)               # (H, L, hd)
            kh = (jnp.einsum("hsd,hdk->hsk", x_b, w[1],
                             preferred_element_type=f32)
                  + bqkv[1][:, None, :]).astype(bf)               # (H, S, hd)
            vh = (jnp.einsum("hsd,hdk->hsk", x_b, w[2],
                             preferred_element_type=f32)
                  + bqkv[2][:, None, :]).astype(bf)               # (H, S, hd)

            # Attention scores (1/sqrt(hd) already folded into Wq / bq).
            s = jnp.einsum("hlk,hsk->hls", qh, kh,
                           preferred_element_type=f32)            # (H, L, S)
            s = s - jnp.max(s, axis=-1, keepdims=True)
            p = jnp.exp(s)                                        # f32
            l_sum = jnp.sum(p, axis=-1, keepdims=True)            # (H, L, 1)

            ctx = jnp.einsum("hls,hsk->hlk", p.astype(bf), vh,
                             preferred_element_type=f32)          # (H, L, hd)
            # Deferred softmax normalization; approx reciprocal on the EUP.
            ctx = ctx * pl.reciprocal(l_sum, approx=True)

            # Output projection: per-head partials summed over the head axis
            # (== concat(heads) @ Wo, since Wo rows are grouped per head).
            attn = jnp.sum(
                jnp.einsum("hlk,hkd->hld", ctx.astype(bf), wo,
                           preferred_element_type=f32), axis=0) + bo   # (L, D)

            # Residual + LayerNorm in f32 (eps = 1e-5, PyTorch default).
            resid = lat + attn
            mean = jnp.mean(resid, axis=-1, keepdims=True)
            var = jnp.mean((resid - mean) ** 2, axis=-1, keepdims=True)
            return (resid - mean) * lax.rsqrt(var + 1e-5) * gamma + beta

        lat = lax.fori_loop(0, num_layers, layer_body, lat0_ref[...],
                            unroll=True)

        # Single store per batch (latent state was carried as a value).
        o_ref[0] = lat

    return kernel


# --------------------------------------------------------------- packing ----

def _pack_layer_params(layers, num_heads):
    """Per-head weight stacks; attention scale folded into Wq/bq at pack time."""
    D = layers[0][0].shape[0]
    H = num_heads
    hd = D // H
    scale = 1.0 / float(hd) ** 0.5

    def heads(w):                        # (D, D) -> (H, D, hd), head-major out
        return jnp.transpose(w.reshape(D, H, hd), (1, 0, 2))

    wqkv, wo_s, bqkv, bvec = [], [], [], []
    for (wq, wk, wv, wo, bq, bk, bv, bo, g, beta) in layers:
        wqkv.append(jnp.stack([heads(wq * scale), heads(wk), heads(wv)], axis=0))
        wo_s.append(wo.reshape(H, hd, D))
        bqkv.append(jnp.stack([(bq * scale).reshape(H, hd),
                               bk.reshape(H, hd),
                               bv.reshape(H, hd)], axis=0))
        bvec.append(jnp.concatenate([bo, g, beta], axis=0))      # (3, D)
    return (jnp.stack(wqkv).astype(jnp.bfloat16),   # (NL, 3, H, D, hd)
            jnp.stack(wo_s).astype(jnp.bfloat16),   # (NL, H, hd, D)
            jnp.stack(bqkv).astype(jnp.float32),    # (NL, 3, H, hd)
            jnp.stack(bvec).astype(jnp.float32))    # (NL, 3, D)


# ----------------------------------------------------------------- VMEM -----

def _vmem_limit_bytes(resident_bytes):
    """Generation-aware scoped-VMEM limit with headroom for Mosaic scratch."""
    try:
        cap = int(pltpu.get_tpu_info().vmem_capacity_bytes)
    except Exception:                         # query unavailable: assume v7x
        cap = 64 << 20
    ceiling = int(0.75 * cap)                 # ~48 MiB on v7x, ~96 MiB on v5e/v6e
    want = 2 * resident_bytes + (8 << 20)     # double-buffered blocks + temporaries
    return max(min(want, ceiling), min(16 << 20, ceiling))


# --------------------------------------------------------------- wrapper ----

def perceiver_resampler_forward(x, params, num_heads):
    """Pallas implementation of PerceiverResampler.forward (mixed precision)."""
    latents = params["latents"].astype(jnp.float32)      # (L, D)
    L, D = latents.shape
    assert D % num_heads == 0, "latent_dim must be divisible by num_heads"
    B, S, Cin = x.shape
    project = Cin != D
    num_layers = len(params["layers"])
    assert num_layers >= 1

    wqkv, wo_s, bqkv, bvec = _pack_layer_params(params["layers"], num_heads)
    x_bf = x.astype(jnp.bfloat16)

    inputs = [latents, x_bf]
    in_specs = [
        pl.BlockSpec((L, D), lambda b: (0, 0)),               # latents (resident)
        pl.BlockSpec((1, S, Cin), lambda b: (b, 0, 0)),       # x, one batch/step
    ]
    if project:
        inputs += [params["proj_w"].astype(jnp.bfloat16),     # (Cin, D)
                   params["proj_b"].astype(jnp.float32)]      # (1, D)
        in_specs += [pl.BlockSpec((Cin, D), lambda b: (0, 0)),
                     pl.BlockSpec((1, D), lambda b: (0, 0))]
    inputs += [wqkv, wo_s, bqkv, bvec]
    in_specs += [
        pl.BlockSpec(wqkv.shape, lambda b: (0, 0, 0, 0, 0)),  # resident weights
        pl.BlockSpec(wo_s.shape, lambda b: (0, 0, 0, 0)),
        pl.BlockSpec(bqkv.shape, lambda b: (0, 0, 0, 0)),
        pl.BlockSpec(bvec.shape, lambda b: (0, 0, 0)),
    ]

    resident_bytes = (sum(int(a.size) * a.dtype.itemsize for a in inputs)
                      + B * L * D * 4)
    kernel = _make_fused_kernel(num_layers, num_heads, project)

    return pl.pallas_call(
        kernel,
        out_shape=jax.ShapeDtypeStruct((B, L, D), jnp.float32),
        grid=(B,),                                            # one batch / step
        in_specs=in_specs,
        out_specs=pl.BlockSpec((1, L, D), lambda b: (b, 0, 0)),
        compiler_params=pltpu.CompilerParams(
            dimension_semantics=("parallel",),                # v7x megacore over B
            vmem_limit_bytes=_vmem_limit_bytes(resident_bytes),
        ),
    )(*inputs)


# ---------------------------------------------------------- init & checks ---

def init_params(key, input_dim, latent_dim, num_latents, num_layers):
    keys = jax.random.split(key, 3 + num_layers)
    D = latent_dim
    params = {
        "latents": jax.random.normal(keys[0], (num_latents, D), jnp.float32) * 0.02,
        "proj_w": jax.random.normal(keys[1], (input_dim, D), jnp.float32)
                  * (1.0 / input_dim ** 0.5),
        "proj_b": jax.random.normal(keys[2], (1, D), jnp.float32) * 0.01,
        "layers": [],
    }
    for i in range(num_layers):
        lk = jax.random.split(keys[3 + i], 8)
        sc = 1.0 / D ** 0.5
        wq = jax.random.normal(lk[0], (D, D), jnp.float32) * sc
        wk = jax.random.normal(lk[1], (D, D), jnp.float32) * sc
        wv = jax.random.normal(lk[2], (D, D), jnp.float32) * sc
        wo = jax.random.normal(lk[3], (D, D), jnp.float32) * sc
        bq = jax.random.normal(lk[4], (1, D), jnp.float32) * 0.01
        bk = jax.random.normal(lk[5], (1, D), jnp.float32) * 0.01
        bv = jax.random.normal(lk[6], (1, D), jnp.float32) * 0.01
        bo = jax.random.normal(lk[7], (1, D), jnp.float32) * 0.01
        g = jnp.ones((1, D), jnp.float32)      # LayerNorm weight (PyTorch default)
        beta = jnp.zeros((1, D), jnp.float32)  # LayerNorm bias   (PyTorch default)
        params["layers"].append((wq, wk, wv, wo, bq, bk, bv, bo, g, beta))
    return params


def reference_forward_mixed(x, params, num_heads):
    """Pure-JAX near-mirror of the kernel's mixed-precision math.

    Same bf16 cast points, f32 accumulation, and pack-time scale folding as the
    kernel; the only intentional difference is exact division for the softmax
    denominator where the kernel uses pl.reciprocal(approx=True) (~1e-3 rel).
    """
    bf, f32 = jnp.bfloat16, jnp.float32
    latents = params["latents"]
    L, D = latents.shape
    B = x.shape[0]
    H = num_heads
    hd = D // H
    scale = 1.0 / float(hd) ** 0.5
    if x.shape[-1] != D:
        x = (jnp.einsum("bsc,cd->bsd", x.astype(bf), params["proj_w"].astype(bf),
                        preferred_element_type=f32) + params["proj_b"]).astype(bf)
    else:
        x = x.astype(bf)
    S = x.shape[1]
    lat = jnp.broadcast_to(latents[None], (B, L, D)).astype(f32)
    for (wq, wk, wv, wo, bq, bk, bv, bo, g, beta) in params["layers"]:
        wq_s = (wq * scale).astype(bf)          # folded exactly like the kernel
        bq_s = bq * scale
        wk_, wv_, wo_ = (w.astype(bf) for w in (wk, wv, wo))
        q = jnp.einsum("bld,de->ble", lat.astype(bf), wq_s,
                       preferred_element_type=f32) + bq_s
        k = jnp.einsum("bsd,de->bse", x, wk_, preferred_element_type=f32) + bk
        v = jnp.einsum("bsd,de->bse", x, wv_, preferred_element_type=f32) + bv
        qh = q.reshape(B, L, H, hd).transpose(0, 2, 1, 3).astype(bf)
        kh = k.reshape(B, S, H, hd).transpose(0, 2, 1, 3).astype(bf)
        vh = v.reshape(B, S, H, hd).transpose(0, 2, 1, 3).astype(bf)
        s = jnp.einsum("bhld,bhsd->bhls", qh, kh, preferred_element_type=f32)
        s = s - jnp.max(s, axis=-1, keepdims=True)
        p = jnp.exp(s)
        l_sum = jnp.sum(p, axis=-1, keepdims=True)
        ctx = jnp.einsum("bhls,bhsd->bhld", p.astype(bf), vh,
                         preferred_element_type=f32)
        ctx = (ctx / l_sum).transpose(0, 2, 1, 3).reshape(B, L, D)
        attn = jnp.einsum("bld,de->ble", ctx.astype(bf), wo_,
                          preferred_element_type=f32) + bo
        resid = lat + attn
        mean = resid.mean(-1, keepdims=True)
        var = ((resid - mean) ** 2).mean(-1, keepdims=True)
        lat = (resid - mean) * lax.rsqrt(var + 1e-5) * g + beta
    return lat


def reference_forward_f32(x, params, num_heads):
    """Pure-f32 reference replicating PyTorch MultiheadAttention semantics."""
    latents = params["latents"]
    L, D = latents.shape
    B = x.shape[0]
    if x.shape[-1] != D:
        x = x @ params["proj_w"] + params["proj_b"][0]
    lat = jnp.broadcast_to(latents[None], (B, L, D))
    hd = D // num_heads
    scale = 1.0 / hd ** 0.5
    for (wq, wk, wv, wo, bq, bk, bv, bo, g, beta) in params["layers"]:
        q = lat @ wq + bq[0]
        k = x @ wk + bk[0]
        v = x @ wv + bv[0]
        S = x.shape[1]
        qh = q.reshape(B, L, num_heads, hd).transpose(0, 2, 1, 3)
        kh = k.reshape(B, S, num_heads, hd).transpose(0, 2, 1, 3)
        vh = v.reshape(B, S, num_heads, hd).transpose(0, 2, 1, 3)
        s = jnp.einsum("bhld,bhsd->bhls", qh, kh) * scale
        p = jax.nn.softmax(s, axis=-1)
        ctx = jnp.einsum("bhls,bhsd->bhld", p, vh).transpose(0, 2, 1, 3).reshape(B, L, D)
        attn = ctx @ wo + bo[0]
        resid = lat + attn
        mean = resid.mean(-1, keepdims=True)
        var = ((resid - mean) ** 2).mean(-1, keepdims=True)
        lat = (resid - mean) * lax.rsqrt(var + 1e-5) * g[0] + beta[0]
    return lat


# -------------------------------------------------------------------- main ---

if __name__ == "__main__":
    B, S = 2, 8
    input_dim, latent_dim = 16, 32
    num_latents, num_layers, num_heads = 8, 4, 8

    key = jax.random.PRNGKey(0)
    k_x, k_p = jax.random.split(key)
    x = jax.random.normal(k_x, (B, S, input_dim), jnp.float32)
    params = init_params(k_p, input_dim, latent_dim, num_latents, num_layers)

    out = jax.block_until_ready(perceiver_resampler_forward(x, params, num_heads))
    assert out.shape == (B, num_latents, latent_dim)

    # Structural check: near-mirror of the kernel's mixed-precision math
    # (kernel uses approx reciprocal for the softmax denominator).
    ref_mixed = jax.block_until_ready(reference_forward_mixed(x, params, num_heads))
    err_mixed = float(jnp.max(jnp.abs(out - ref_mixed)))
    assert jnp.allclose(out, ref_mixed, rtol=2e-2, atol=2e-2), (
        f"mixed-precision ref max abs err {err_mixed}")

    # Semantic check vs. the original f32 module (loose tol covers bf16 rounding).
    ref_f32 = jax.block_until_ready(reference_forward_f32(x, params, num_heads))
    err_f32 = float(jnp.max(jnp.abs(out - ref_f32)))
    assert jnp.allclose(out, ref_f32, rtol=1e-1, atol=1e-1), (
        f"f32 ref max abs err {err_f32}")

    print("KERNEL_OK")
</pallas_src>

<mosaic_0001>
module attributes {stable_mosaic.version = 11 : i64} {
  func.func @kernel(%arg0: i32, %arg1: memref<8x32xf32, #tpu.memory_space<vmem>>, %arg2: memref<1x8x16xbf16, #tpu.memory_space<vmem>>, %arg3: memref<16x32xbf16, #tpu.memory_space<vmem>>, %arg4: memref<1x32xf32, #tpu.memory_space<vmem>>, %arg5: memref<4x3x8x32x4xbf16, #tpu.memory_space<vmem>>, %arg6: memref<4x8x4x32xbf16, #tpu.memory_space<vmem>>, %arg7: memref<4x3x8x4xf32, #tpu.memory_space<vmem>>, %arg8: memref<4x3x32xf32, #tpu.memory_space<vmem>>, %arg9: memref<1x8x32xf32, #tpu.memory_space<vmem>>) attributes {dimension_semantics = [#tpu.dimension_semantics<parallel>], iteration_bounds = array<i64: 2>, scalar_prefetch = 0 : i64, scratch_operands = 0 : i64, tpu.core_type = #tpu.core_type<tc>, window_params = [{pipeline_mode = #tpu.pipeline_mode<synchronous>, transform_indices = @transform_0, window_bounds = array<i64: 8, 32>}, {transform_indices = @transform_1, window_bounds = array<i64: 1, 8, 16>}, {pipeline_mode = #tpu.pipeline_mode<synchronous>, transform_indices = @transform_2, window_bounds = array<i64: 16, 32>}, {pipeline_mode = #tpu.pipeline_mode<synchronous>, transform_indices = @transform_3, window_bounds = array<i64: 1, 32>}, {pipeline_mode = #tpu.pipeline_mode<synchronous>, transform_indices = @transform_4, window_bounds = array<i64: 4, 3, 8, 32, 4>}, {pipeline_mode = #tpu.pipeline_mode<synchronous>, transform_indices = @transform_5, window_bounds = array<i64: 4, 8, 4, 32>}, {pipeline_mode = #tpu.pipeline_mode<synchronous>, transform_indices = @transform_6, window_bounds = array<i64: 4, 3, 8, 4>}, {pipeline_mode = #tpu.pipeline_mode<synchronous>, transform_indices = @transform_7, window_bounds = array<i64: 4, 3, 32>}, {transform_indices = @transform_8, window_bounds = array<i64: 1, 8, 32>}]} {
    %c0 = arith.constant 0 : index
    %c0_0 = arith.constant 0 : index
    %c0_1 = arith.constant 0 : index
    %0 = vector.load %arg2[%c0, %c0_0, %c0_1] : memref<1x8x16xbf16, #tpu.memory_space<vmem>>, vector<1x8x16xbf16>
    %1 = vector.shape_cast %0 : vector<1x8x16xbf16> to vector<8x16xbf16>
    %c0_2 = arith.constant 0 : index
    %c0_3 = arith.constant 0 : index
    %2 = vector.load %arg3[%c0_2, %c0_3] : memref<16x32xbf16, #tpu.memory_space<vmem>>, vector<16x32xbf16>
    %cst = arith.constant dense<0.000000e+00> : vector<8x32xf32>
    %3 = tpu.matmul %1, %2, %cst {dimension_numbers = #tpu.dot_dimension_numbers<[1], [0], [0], [1], [0, 0, 1, 1], [], []>} : vector<8x16xbf16>, vector<16x32xbf16>, vector<8x32xf32> -> vector<8x32xf32>
    %c0_4 = arith.constant 0 : index
    %c0_5 = arith.constant 0 : index
    %4 = vector.load %arg4[%c0_4, %c0_5] : memref<1x32xf32, #tpu.memory_space<vmem>>, vector<1x32xf32>
    %5 = vector.broadcast %4 : vector<1x32xf32> to vector<8x32xf32>
    %6 = arith.addf %3, %5 : vector<8x32xf32>
    %7 = arith.truncf %6 : vector<8x32xf32> to vector<8x32xbf16>
    %8 = vector.shape_cast %7 : vector<8x32xbf16> to vector<1x8x32xbf16>
    %9 = vector.shape_cast %8 : vector<1x8x32xbf16> to vector<1x8x32xbf16>
    %10 = vector.broadcast %9 : vector<1x8x32xbf16> to vector<8x8x32xbf16>
    %c0_6 = arith.constant 0 : index
    %c0_7 = arith.constant 0 : index
    %11 = vector.load %arg1[%c0_6, %c0_7] : memref<8x32xf32, #tpu.memory_space<vmem>>, vector<8x32xf32>
    %c0_i32 = arith.constant 0 : i32
    %12 = arith.index_cast %c0_i32 : i32 to index
    %c0_8 = arith.constant 0 : index
    %c0_9 = arith.constant 0 : index
    %c0_10 = arith.constant 0 : index
    %c0_11 = arith.constant 0 : index
    %13 = vector.load %arg5[%12, %c0_8, %c0_9, %c0_10, %c0_11] : memref<4x3x8x32x4xbf16, #tpu.memory_space<vmem>>, vector<1x3x8x32x4xbf16>
    %14 = vector.shape_cast %13 : vector<1x3x8x32x4xbf16> to vector<3x8x32x4xbf16>
    %15 = arith.index_cast %c0_i32 : i32 to index
    %c0_12 = arith.constant 0 : index
    %c0_13 = arith.constant 0 : index
    %c0_14 = arith.constant 0 : index
    %16 = vector.load %arg6[%15, %c0_12, %c0_13, %c0_14] : memref<4x8x4x32xbf16, #tpu.memory_space<vmem>>, vector<1x8x4x32xbf16>
    %17 = vector.shape_cast %16 : vector<1x8x4x32xbf16> to vector<8x4x32xbf16>
    %18 = arith.index_cast %c0_i32 : i32 to index
    %c0_15 = arith.constant 0 : index
    %c0_16 = arith.constant 0 : index
    %c0_17 = arith.constant 0 : index
    %19 = vector.load %arg7[%18, %c0_15, %c0_16, %c0_17] : memref<4x3x8x4xf32, #tpu.memory_space<vmem>>, vector<1x3x8x4xf32>
    %20 = vector.shape_cast %19 : vector<1x3x8x4xf32> to vector<3x8x4xf32>
    %21 = arith.index_cast %c0_i32 : i32 to index
    %c0_18 = arith.constant 0 : index
    %c0_19 = arith.constant 0 : index
    %22 = vector.load %arg8[%21, %c0_18, %c0_19] : memref<4x3x32xf32, #tpu.memory_space<vmem>>, vector<1x3x32xf32>
    %23 = vector.shape_cast %22 : vector<1x3x32xf32> to vector<3x32xf32>
    %24 = vector.extract_strided_slice %23 {offsets = [0, 0], sizes = [1, 32], strides = [1, 1]} : vector<3x32xf32> to vector<1x32xf32>
    %25 = vector.extract_strided_slice %23 {offsets = [1, 0], sizes = [1, 32], strides = [1, 1]} : vector<3x32xf32> to vector<1x32xf32>
    %26 = vector.extract_strided_slice %23 {offsets = [2, 0], sizes = [1, 32], strides = [1, 1]} : vector<3x32xf32> to vector<1x32xf32>
    %27 = arith.truncf %11 : vector<8x32xf32> to vector<8x32xbf16>
    %28 = vector.shape_cast %27 : vector<8x32xbf16> to vector<1x8x32xbf16>
    %29 = vector.shape_cast %28 : vector<1x8x32xbf16> to vector<1x8x32xbf16>
    %30 = vector.broadcast %29 : vector<1x8x32xbf16> to vector<8x8x32xbf16>
    %31 = vector.extract_strided_slice %14 {offsets = [0, 0, 0, 0], sizes = [1, 8, 32, 4], strides = [1, 1, 1, 1]} : vector<3x8x32x4xbf16> to vector<1x8x32x4xbf16>
    %32 = vector.shape_cast %31 : vector<1x8x32x4xbf16> to vector<8x32x4xbf16>
    "tpu.trace_start"() <{level = 10 : i32, message = "hld,hdk->hlk"}> : () -> ()
    %cst_20 = arith.constant dense<0.000000e+00> : vector<8x8x4xf32>
    %33 = tpu.matmul %30, %32, %cst_20 {dimension_numbers = #tpu.dot_dimension_numbers<[2], [1], [1], [2], [0, 0, 0, 1, 1, 2], [0], [0]>} : vector<8x8x32xbf16>, vector<8x32x4xbf16>, vector<8x8x4xf32> -> vector<8x8x4xf32>
    "tpu.trace_stop"() : () -> ()
    %34 = vector.extract_strided_slice %20 {offsets = [0, 0, 0], sizes = [1, 8, 4], strides = [1, 1, 1]} : vector<3x8x4xf32> to vector<1x8x4xf32>
    %35 = vector.shape_cast %34 : vector<1x8x4xf32> to vector<8x4xf32>
    %36 = vector.shape_cast %35 : vector<8x4xf32> to vector<8x1x4xf32>
    %37 = vector.broadcast %36 : vector<8x1x4xf32> to vector<8x8x4xf32>
    %38 = arith.addf %33, %37 : vector<8x8x4xf32>
    %39 = arith.truncf %38 : vector<8x8x4xf32> to vector<8x8x4xbf16>
    %40 = vector.extract_strided_slice %14 {offsets = [1, 0, 0, 0], sizes = [1, 8, 32, 4], strides = [1, 1, 1, 1]} : vector<3x8x32x4xbf16> to vector<1x8x32x4xbf16>
    %41 = vector.shape_cast %40 : vector<1x8x32x4xbf16> to vector<8x32x4xbf16>
    "tpu.trace_start"() <{level = 10 : i32, message = "hsd,hdk->hsk"}> : () -> ()
    %cst_21 = arith.constant dense<0.000000e+00> : vector<8x8x4xf32>
    %42 = tpu.matmul %10, %41, %cst_21 {dimension_numbers = #tpu.dot_dimension_numbers<[2], [1], [1], [2], [0, 0, 0, 1, 1, 2], [0], [0]>} : vector<8x8x32xbf16>, vector<8x32x4xbf16>, vector<8x8x4xf32> -> vector<8x8x4xf32>
    "tpu.trace_stop"() : () -> ()
    %43 = vector.extract_strided_slice %20 {offsets = [1, 0, 0], sizes = [1, 8, 4], strides = [1, 1, 1]} : vector<3x8x4xf32> to vector<1x8x4xf32>
    %44 = vector.shape_cast %43 : vector<1x8x4xf32> to vector<8x4xf32>
    %45 = vector.shape_cast %44 : vector<8x4xf32> to vector<8x1x4xf32>
    %46 = vector.broadcast %45 : vector<8x1x4xf32> to vector<8x8x4xf32>
    %47 = arith.addf %42, %46 : vector<8x8x4xf32>
    %48 = arith.truncf %47 : vector<8x8x4xf32> to vector<8x8x4xbf16>
    %49 = vector.extract_strided_slice %14 {offsets = [2, 0, 0, 0], sizes = [1, 8, 32, 4], strides = [1, 1, 1, 1]} : vector<3x8x32x4xbf16> to vector<1x8x32x4xbf16>
    %50 = vector.shape_cast %49 : vector<1x8x32x4xbf16> to vector<8x32x4xbf16>
    "tpu.trace_start"() <{level = 10 : i32, message = "hsd,hdk->hsk"}> : () -> ()
    %cst_22 = arith.constant dense<0.000000e+00> : vector<8x8x4xf32>
    %51 = tpu.matmul %10, %50, %cst_22 {dimension_numbers = #tpu.dot_dimension_numbers<[2], [1], [1], [2], [0, 0, 0, 1, 1, 2], [0], [0]>} : vector<8x8x32xbf16>, vector<8x32x4xbf16>, vector<8x8x4xf32> -> vector<8x8x4xf32>
    "tpu.trace_stop"() : () -> ()
    %52 = vector.extract_strided_slice %20 {offsets = [2, 0, 0], sizes = [1, 8, 4], strides = [1, 1, 1]} : vector<3x8x4xf32> to vector<1x8x4xf32>
    %53 = vector.shape_cast %52 : vector<1x8x4xf32> to vector<8x4xf32>
    %54 = vector.shape_cast %53 : vector<8x4xf32> to vector<8x1x4xf32>
    %55 = vector.broadcast %54 : vector<8x1x4xf32> to vector<8x8x4xf32>
    %56 = arith.addf %51, %55 : vector<8x8x4xf32>
    %57 = arith.truncf %56 : vector<8x8x4xf32> to vector<8x8x4xbf16>
    "tpu.trace_start"() <{level = 10 : i32, message = "hlk,hsk->hls"}> : () -> ()
    %cst_23 = arith.constant dense<0.000000e+00> : vector<8x8x8xf32>
    %58 = tpu.matmul %39, %48, %cst_23 {dimension_numbers = #tpu.dot_dimension_numbers<[2], [2], [1], [1], [0, 0, 0, 1, 1, 1], [0], [0]>} : vector<8x8x4xbf16>, vector<8x8x4xbf16>, vector<8x8x8xf32> -> vector<8x8x8xf32>
    "tpu.trace_stop"() : () -> ()
    %cst_24 = arith.constant dense<0xFF800000> : vector<8x8xf32>
    %59 = vector.multi_reduction <maximumf>, %58, %cst_24 [2] : vector<8x8x8xf32> to vector<8x8xf32>
    %60 = vector.shape_cast %59 : vector<8x8xf32> to vector<8x8x1xf32>
    %61 = vector.broadcast %60 : vector<8x8x1xf32> to vector<8x8x8xf32>
    %62 = arith.subf %58, %61 : vector<8x8x8xf32>
    %63 = math.exp %62 : vector<8x8x8xf32>
    %cst_25 = arith.constant dense<0.000000e+00> : vector<8x8xf32>
    %64 = vector.multi_reduction <add>, %63, %cst_25 [2] : vector<8x8x8xf32> to vector<8x8xf32>
    %65 = vector.shape_cast %64 : vector<8x8xf32> to vector<8x8x1xf32>
    %66 = arith.truncf %63 : vector<8x8x8xf32> to vector<8x8x8xbf16>
    "tpu.trace_start"() <{level = 10 : i32, message = "hls,hsk->hlk"}> : () -> ()
    %cst_26 = arith.constant dense<0.000000e+00> : vector<8x8x4xf32>
    %67 = tpu.matmul %66, %57, %cst_26 {dimension_numbers = #tpu.dot_dimension_numbers<[2], [1], [1], [2], [0, 0, 0, 1, 1, 2], [0], [0]>} : vector<8x8x8xbf16>, vector<8x8x4xbf16>, vector<8x8x4xf32> -> vector<8x8x4xf32>
    "tpu.trace_stop"() : () -> ()
    %68 = tpu.reciprocal %65 {approx = true} : vector<8x8x1xf32> -> vector<8x8x1xf32>
    %69 = vector.broadcast %68 : vector<8x8x1xf32> to vector<8x8x4xf32>
    %70 = arith.mulf %67, %69 : vector<8x8x4xf32>
    %71 = arith.truncf %70 : vector<8x8x4xf32> to vector<8x8x4xbf16>
    "tpu.trace_start"() <{level = 10 : i32, message = "hlk,hkd->hld"}> : () -> ()
    %cst_27 = arith.constant dense<0.000000e+00> : vector<8x8x32xf32>
    %72 = tpu.matmul %71, %17, %cst_27 {dimension_numbers = #tpu.dot_dimension_numbers<[2], [1], [1], [2], [0, 0, 0, 1, 1, 2], [0], [0]>} : vector<8x8x4xbf16>, vector<8x4x32xbf16>, vector<8x8x32xf32> -> vector<8x8x32xf32>
    "tpu.trace_stop"() : () -> ()
    %cst_28 = arith.constant dense<0.000000e+00> : vector<8x32xf32>
    %73 = vector.multi_reduction <add>, %72, %cst_28 [0] : vector<8x8x32xf32> to vector<8x32xf32>
    %74 = vector.broadcast %24 : vector<1x32xf32> to vector<8x32xf32>
    %75 = arith.addf %73, %74 : vector<8x32xf32>
    %76 = arith.addf %11, %75 : vector<8x32xf32>
    %cst_29 = arith.constant dense<0.000000e+00> : vector<8xf32>
    %77 = vector.multi_reduction <add>, %76, %cst_29 [1] : vector<8x32xf32> to vector<8xf32>
    %78 = vector.shape_cast %77 : vector<8xf32> to vector<8x1xf32>
    %cst_30 = arith.constant 3.200000e+01 : f32
    %79 = vector.broadcast %cst_30 : f32 to vector<8x1xf32>
    %80 = arith.divf %78, %79 : vector<8x1xf32>
    %81 = vector.broadcast %80 : vector<8x1xf32> to vector<8x32xf32>
    %82 = arith.subf %76, %81 : vector<8x32xf32>
    %83 = arith.mulf %82, %82 : vector<8x32xf32>
    %cst_31 = arith.constant dense<0.000000e+00> : vector<8xf32>
    %84 = vector.multi_reduction <add>, %83, %cst_31 [1] : vector<8x32xf32> to vector<8xf32>
    %85 = vector.shape_cast %84 : vector<8xf32> to vector<8x1xf32>
    %cst_32 = arith.constant 3.200000e+01 : f32
    %86 = vector.broadcast %cst_32 : f32 to vector<8x1xf32>
    %87 = arith.divf %85, %86 : vector<8x1xf32>
    %88 = vector.broadcast %80 : vector<8x1xf32> to vector<8x32xf32>
    %89 = arith.subf %76, %88 : vector<8x32xf32>
    %cst_33 = arith.constant 9.99999974E-6 : f32
    %90 = vector.broadcast %cst_33 : f32 to vector<8x1xf32>
    %91 = arith.addf %87, %90 : vector<8x1xf32>
    %92 = math.rsqrt %91 : vector<8x1xf32>
    %93 = vector.broadcast %92 : vector<8x1xf32> to vector<8x32xf32>
    %94 = arith.mulf %89, %93 : vector<8x32xf32>
    %95 = vector.broadcast %25 : vector<1x32xf32> to vector<8x32xf32>
    %96 = arith.mulf %94, %95 : vector<8x32xf32>
    %97 = vector.broadcast %26 : vector<1x32xf32> to vector<8x32xf32>
    %98 = arith.addf %96, %97 : vector<8x32xf32>
    %c1_i32 = arith.constant 1 : i32
    %99 = arith.index_cast %c1_i32 : i32 to index
    %c0_34 = arith.constant 0 : index
    %c0_35 = arith.constant 0 : index
    %c0_36 = arith.constant 0 : index
    %c0_37 = arith.constant 0 : index
    %100 = vector.load %arg5[%99, %c0_34, %c0_35, %c0_36, %c0_37] : memref<4x3x8x32x4xbf16, #tpu.memory_space<vmem>>, vector<1x3x8x32x4xbf16>
    %101 = vector.shape_cast %100 : vector<1x3x8x32x4xbf16> to vector<3x8x32x4xbf16>
    %102 = arith.index_cast %c1_i32 : i32 to index
    %c0_38 = arith.constant 0 : index
    %c0_39 = arith.constant 0 : index
    %c0_40 = arith.constant 0 : index
    %103 = vector.load %arg6[%102, %c0_38, %c0_39, %c0_40] : memref<4x8x4x32xbf16, #tpu.memory_space<vmem>>, vector<1x8x4x32xbf16>
    %104 = vector.shape_cast %103 : vector<1x8x4x32xbf16> to vector<8x4x32xbf16>
    %105 = arith.index_cast %c1_i32 : i32 to index
    %c0_41 = arith.constant 0 : index
    %c0_42 = arith.constant 0 : index
    %c0_43 = arith.constant 0 : index
    %106 = vector.load %arg7[%105, %c0_41, %c0_42, %c0_43] : memref<4x3x8x4xf32, #tpu.memory_space<vmem>>, vector<1x3x8x4xf32>
    %107 = vector.shape_cast %106 : vector<1x3x8x4xf32> to vector<3x8x4xf32>
    %108 = arith.index_cast %c1_i32 : i32 to index
    %c0_44 = arith.constant 0 : index
    %c0_45 = arith.constant 0 : index
    %109 = vector.load %arg8[%108, %c0_44, %c0_45] : memref<4x3x32xf32, #tpu.memory_space<vmem>>, vector<1x3x32xf32>
    %110 = vector.shape_cast %109 : vector<1x3x32xf32> to vector<3x32xf32>
    %111 = vector.extract_strided_slice %110 {offsets = [0, 0], sizes = [1, 32], strides = [1, 1]} : vector<3x32xf32> to vector<1x32xf32>
    %112 = vector.extract_strided_slice %110 {offsets = [1, 0], sizes = [1, 32], strides = [1, 1]} : vector<3x32xf32> to vector<1x32xf32>
    %113 = vector.extract_strided_slice %110 {offsets = [2, 0], sizes = [1, 32], strides = [1, 1]} : vector<3x32xf32> to vector<1x32xf32>
    %114 = arith.truncf %98 : vector<8x32xf32> to vector<8x32xbf16>
    %115 = vector.shape_cast %114 : vector<8x32xbf16> to vector<1x8x32xbf16>
    %116 = vector.shape_cast %115 : vector<1x8x32xbf16> to vector<1x8x32xbf16>
    %117 = vector.broadcast %116 : vector<1x8x32xbf16> to vector<8x8x32xbf16>
    %118 = vector.extract_strided_slice %101 {offsets = [0, 0, 0, 0], sizes = [1, 8, 32, 4], strides = [1, 1, 1, 1]} : vector<3x8x32x4xbf16> to vector<1x8x32x4xbf16>
    %119 = vector.shape_cast %118 : vector<1x8x32x4xbf16> to vector<8x32x4xbf16>
    "tpu.trace_start"() <{level = 10 : i32, message = "hld,hdk->hlk"}> : () -> ()
    %cst_46 = arith.constant dense<0.000000e+00> : vector<8x8x4xf32>
    %120 = tpu.matmul %117, %119, %cst_46 {dimension_numbers = #tpu.dot_dimension_numbers<[2], [1], [1], [2], [0, 0, 0, 1, 1, 2], [0], [0]>} : vector<8x8x32xbf16>, vector<8x32x4xbf16>, vector<8x8x4xf32> -> vector<8x8x4xf32>
    "tpu.trace_stop"() : () -> ()
    %121 = vector.extract_strided_slice %107 {offsets = [0, 0, 0], sizes = [1, 8, 4], strides = [1, 1, 1]} : vector<3x8x4xf32> to vector<1x8x4xf32>
    %122 = vector.shape_cast %121 : vector<1x8x4xf32> to vector<8x4xf32>
    %123 = vector.shape_cast %122 : vector<8x4xf32> to vector<8x1x4xf32>
    %124 = vector.broadcast %123 : vector<8x1x4xf32> to vector<8x8x4xf32>
    %125 = arith.addf %120, %124 : vector<8x8x4xf32>
    %126 = arith.truncf %125 : vector<8x8x4xf32> to vector<8x8x4xbf16>
    %127 = vector.extract_strided_slice %101 {offsets = [1, 0, 0, 0], sizes = [1, 8, 32, 4], strides = [1, 1, 1, 1]} : vector<3x8x32x4xbf16> to vector<1x8x32x4xbf16>
    %128 = vector.shape_cast %127 : vector<1x8x32x4xbf16> to vector<8x32x4xbf16>
    "tpu.trace_start"() <{level = 10 : i32, message = "hsd,hdk->hsk"}> : () -> ()
    %cst_47 = arith.constant dense<0.000000e+00> : vector<8x8x4xf32>
    %129 = tpu.matmul %10, %128, %cst_47 {dimension_numbers = #tpu.dot_dimension_numbers<[2], [1], [1], [2], [0, 0, 0, 1, 1, 2], [0], [0]>} : vector<8x8x32xbf16>, vector<8x32x4xbf16>, vector<8x8x4xf32> -> vector<8x8x4xf32>
    "tpu.trace_stop"() : () -> ()
    %130 = vector.extract_strided_slice %107 {offsets = [1, 0, 0], sizes = [1, 8, 4], strides = [1, 1, 1]} : vector<3x8x4xf32> to vector<1x8x4xf32>
    %131 = vector.shape_cast %130 : vector<1x8x4xf32> to vector<8x4xf32>
    %132 = vector.shape_cast %131 : vector<8x4xf32> to vector<8x1x4xf32>
    %133 = vector.broadcast %132 : vector<8x1x4xf32> to vector<8x8x4xf32>
    %134 = arith.addf %129, %133 : vector<8x8x4xf32>
    %135 = arith.truncf %134 : vector<8x8x4xf32> to vector<8x8x4xbf16>
    %136 = vector.extract_strided_slice %101 {offsets = [2, 0, 0, 0], sizes = [1, 8, 32, 4], strides = [1, 1, 1, 1]} : vector<3x8x32x4xbf16> to vector<1x8x32x4xbf16>
    %137 = vector.shape_cast %136 : vector<1x8x32x4xbf16> to vector<8x32x4xbf16>
    "tpu.trace_start"() <{level = 10 : i32, message = "hsd,hdk->hsk"}> : () -> ()
    %cst_48 = arith.constant dense<0.000000e+00> : vector<8x8x4xf32>
    %138 = tpu.matmul %10, %137, %cst_48 {dimension_numbers = #tpu.dot_dimension_numbers<[2], [1], [1], [2], [0, 0, 0, 1, 1, 2], [0], [0]>} : vector<8x8x32xbf16>, vector<8x32x4xbf16>, vector<8x8x4xf32> -> vector<8x8x4xf32>
    "tpu.trace_stop"() : () -> ()
    %139 = vector.extract_strided_slice %107 {offsets = [2, 0, 0], sizes = [1, 8, 4], strides = [1, 1, 1]} : vector<3x8x4xf32> to vector<1x8x4xf32>
    %140 = vector.shape_cast %139 : vector<1x8x4xf32> to vector<8x4xf32>
    %141 = vector.shape_cast %140 : vector<8x4xf32> to vector<8x1x4xf32>
    %142 = vector.broadcast %141 : vector<8x1x4xf32> to vector<8x8x4xf32>
    %143 = arith.addf %138, %142 : vector<8x8x4xf32>
    %144 = arith.truncf %143 : vector<8x8x4xf32> to vector<8x8x4xbf16>
    "tpu.trace_start"() <{level = 10 : i32, message = "hlk,hsk->hls"}> : () -> ()
    %cst_49 = arith.constant dense<0.000000e+00> : vector<8x8x8xf32>
    %145 = tpu.matmul %126, %135, %cst_49 {dimension_numbers = #tpu.dot_dimension_numbers<[2], [2], [1], [1], [0, 0, 0, 1, 1, 1], [0], [0]>} : vector<8x8x4xbf16>, vector<8x8x4xbf16>, vector<8x8x8xf32> -> vector<8x8x8xf32>
    "tpu.trace_stop"() : () -> ()
    %cst_50 = arith.constant dense<0xFF800000> : vector<8x8xf32>
    %146 = vector.multi_reduction <maximumf>, %145, %cst_50 [2] : vector<8x8x8xf32> to vector<8x8xf32>
    %147 = vector.shape_cast %146 : vector<8x8xf32> to vector<8x8x1xf32>
    %148 = vector.broadcast %147 : vector<8x8x1xf32> to vector<8x8x8xf32>
    %149 = arith.subf %145, %148 : vector<8x8x8xf32>
    %150 = math.exp %149 : vector<8x8x8xf32>
    %cst_51 = arith.constant dense<0.000000e+00> : vector<8x8xf32>
    %151 = vector.multi_reduction <add>, %150, %cst_51 [2] : vector<8x8x8xf32> to vector<8x8xf32>
    %152 = vector.shape_cast %151 : vector<8x8xf32> to vector<8x8x1xf32>
    %153 = arith.truncf %150 : vector<8x8x8xf32> to vector<8x8x8xbf16>
    "tpu.trace_start"() <{level = 10 : i32, message = "hls,hsk->hlk"}> : () -> ()
    %cst_52 = arith.constant dense<0.000000e+00> : vector<8x8x4xf32>
    %154 = tpu.matmul %153, %144, %cst_52 {dimension_numbers = #tpu.dot_dimension_numbers<[2], [1], [1], [2], [0, 0, 0, 1, 1, 2], [0], [0]>} : vector<8x8x8xbf16>, vector<8x8x4xbf16>, vector<8x8x4xf32> -> vector<8x8x4xf32>
    "tpu.trace_stop"() : () -> ()
    %155 = tpu.reciprocal %152 {approx = true} : vector<8x8x1xf32> -> vector<8x8x1xf32>
    %156 = vector.broadcast %155 : vector<8x8x1xf32> to vector<8x8x4xf32>
    %157 = arith.mulf %154, %156 : vector<8x8x4xf32>
    %158 = arith.truncf %157 : vector<8x8x4xf32> to vector<8x8x4xbf16>
    "tpu.trace_start"() <{level = 10 : i32, message = "hlk,hkd->hld"}> : () -> ()
    %cst_53 = arith.constant dense<0.000000e+00> : vector<8x8x32xf32>
    %159 = tpu.matmul %158, %104, %cst_53 {dimension_numbers = #tpu.dot_dimension_numbers<[2], [1], [1], [2], [0, 0, 0, 1, 1, 2], [0], [0]>} : vector<8x8x4xbf16>, vector<8x4x32xbf16>, vector<8x8x32xf32> -> vector<8x8x32xf32>
    "tpu.trace_stop"() : () -> ()
    %cst_54 = arith.constant dense<0.000000e+00> : vector<8x32xf32>
    %160 = vector.multi_reduction <add>, %159, %cst_54 [0] : vector<8x8x32xf32> to vector<8x32xf32>
    %161 = vector.broadcast %111 : vector<1x32xf32> to vector<8x32xf32>
    %162 = arith.addf %160, %161 : vector<8x32xf32>
    %163 = arith.addf %98, %162 : vector<8x32xf32>
    %cst_55 = arith.constant dense<0.000000e+00> : vector<8xf32>
    %164 = vector.multi_reduction <add>, %163, %cst_55 [1] : vector<8x32xf32> to vector<8xf32>
    %165 = vector.shape_cast %164 : vector<8xf32> to vector<8x1xf32>
    %cst_56 = arith.constant 3.200000e+01 : f32
    %166 = vector.broadcast %cst_56 : f32 to vector<8x1xf32>
    %167 = arith.divf %165, %166 : vector<8x1xf32>
    %168 = vector.broadcast %167 : vector<8x1xf32> to vector<8x32xf32>
    %169 = arith.subf %163, %168 : vector<8x32xf32>
    %170 = arith.mulf %169, %169 : vector<8x32xf32>
    %cst_57 = arith.constant dense<0.000000e+00> : vector<8xf32>
    %171 = vector.multi_reduction <add>, %170, %cst_57 [1] : vector<8x32xf32> to vector<8xf32>
    %172 = vector.shape_cast %171 : vector<8xf32> to vector<8x1xf32>
    %cst_58 = arith.constant 3.200000e+01 : f32
    %173 = vector.broadcast %cst_58 : f32 to vector<8x1xf32>
    %174 = arith.divf %172, %173 : vector<8x1xf32>
    %175 = vector.broadcast %167 : vector<8x1xf32> to vector<8x32xf32>
    %176 = arith.subf %163, %175 : vector<8x32xf32>
    %cst_59 = arith.constant 9.99999974E-6 : f32
    %177 = vector.broadcast %cst_59 : f32 to vector<8x1xf32>
    %178 = arith.addf %174, %177 : vector<8x1xf32>
    %179 = math.rsqrt %178 : vector<8x1xf32>
    %180 = vector.broadcast %179 : vector<8x1xf32> to vector<8x32xf32>
    %181 = arith.mulf %176, %180 : vector<8x32xf32>
    %182 = vector.broadcast %112 : vector<1x32xf32> to vector<8x32xf32>
    %183 = arith.mulf %181, %182 : vector<8x32xf32>
    %184 = vector.broadcast %113 : vector<1x32xf32> to vector<8x32xf32>
    %185 = arith.addf %183, %184 : vector<8x32xf32>
    %c2_i32 = arith.constant 2 : i32
    %186 = arith.index_cast %c2_i32 : i32 to index
    %c0_60 = arith.constant 0 : index
    %c0_61 = arith.constant 0 : index
    %c0_62 = arith.constant 0 : index
    %c0_63 = arith.constant 0 : index
    %187 = vector.load %arg5[%186, %c0_60, %c0_61, %c0_62, %c0_63] : memref<4x3x8x32x4xbf16, #tpu.memory_space<vmem>>, vector<1x3x8x32x4xbf16>
    %188 = vector.shape_cast %187 : vector<1x3x8x32x4xbf16> to vector<3x8x32x4xbf16>
    %189 = arith.index_cast %c2_i32 : i32 to index
    %c0_64 = arith.constant 0 : index
    %c0_65 = arith.constant 0 : index
    %c0_66 = arith.constant 0 : index
    %190 = vector.load %arg6[%189, %c0_64, %c0_65, %c0_66] : memref<4x8x4x32xbf16, #tpu.memory_space<vmem>>, vector<1x8x4x32xbf16>
    %191 = vector.shape_cast %190 : vector<1x8x4x32xbf16> to vector<8x4x32xbf16>
    %192 = arith.index_cast %c2_i32 : i32 to index
    %c0_67 = arith.constant 0 : index
    %c0_68 = arith.constant 0 : index
    %c0_69 = arith.constant 0 : index
    %193 = vector.load %arg7[%192, %c0_67, %c0_68, %c0_69] : memref<4x3x8x4xf32, #tpu.memory_space<vmem>>, vector<1x3x8x4xf32>
    %194 = vector.shape_cast %193 : vector<1x3x8x4xf32> to vector<3x8x4xf32>
    %195 = arith.index_cast %c2_i32 : i32 to index
    %c0_70 = arith.constant 0 : index
    %c0_71 = arith.constant 0 : index
    %196 = vector.load %arg8[%195, %c0_70, %c0_71] : memref<4x3x32xf32, #tpu.memory_space<vmem>>, vector<1x3x32xf32>
    %197 = vector.shape_cast %196 : vector<1x3x32xf32> to vector<3x32xf32>
    %198 = vector.extract_strided_slice %197 {offsets = [0, 0], sizes = [1, 32], strides = [1, 1]} : vector<3x32xf32> to vector<1x32xf32>
    %199 = vector.extract_strided_slice %197 {offsets = [1, 0], sizes = [1, 32], strides = [1, 1]} : vector<3x32xf32> to vector<1x32xf32>
    %200 = vector.extract_strided_slice %197 {offsets = [2, 0], sizes = [1, 32], strides = [1, 1]} : vector<3x32xf32> to vector<1x32xf32>
    %201 = arith.truncf %185 : vector<8x32xf32> to vector<8x32xbf16>
    %202 = vector.shape_cast %201 : vector<8x32xbf16> to vector<1x8x32xbf16>
    %203 = vector.shape_cast %202 : vector<1x8x32xbf16> to vector<1x8x32xbf16>
    %204 = vector.broadcast %203 : vector<1x8x32xbf16> to vector<8x8x32xbf16>
    %205 = vector.extract_strided_slice %188 {offsets = [0, 0, 0, 0], sizes = [1, 8, 32, 4], strides = [1, 1, 1, 1]} : vector<3x8x32x4xbf16> to vector<1x8x32x4xbf16>
    %206 = vector.shape_cast %205 : vector<1x8x32x4xbf16> to vector<8x32x4xbf16>
    "tpu.trace_start"() <{level = 10 : i32, message = "hld,hdk->hlk"}> : () -> ()
    %cst_72 = arith.constant dense<0.000000e+00> : vector<8x8x4xf32>
    %207 = tpu.matmul %204, %206, %cst_72 {dimension_numbers = #tpu.dot_dimension_numbers<[2], [1], [1], [2], [0, 0, 0, 1, 1, 2], [0], [0]>} : vector<8x8x32xbf16>, vector<8x32x4xbf16>, vector<8x8x4xf32> -> vector<8x8x4xf32>
    "tpu.trace_stop"() : () -> ()
    %208 = vector.extract_strided_slice %194 {offsets = [0, 0, 0], sizes = [1, 8, 4], strides = [1, 1, 1]} : vector<3x8x4xf32> to vector<1x8x4xf32>
    %209 = vector.shape_cast %208 : vector<1x8x4xf32> to vector<8x4xf32>
    %210 = vector.shape_cast %209 : vector<8x4xf32> to vector<8x1x4xf32>
    %211 = vector.broadcast %210 : vector<8x1x4xf32> to vector<8x8x4xf32>
    %212 = arith.addf %207, %211 : vector<8x8x4xf32>
    %213 = arith.truncf %212 : vector<8x8x4xf32> to vector<8x8x4xbf16>
    %214 = vector.extract_strided_slice %188 {offsets = [1, 0, 0, 0], sizes = [1, 8, 32, 4], strides = [1, 1, 1, 1]} : vector<3x8x32x4xbf16> to vector<1x8x32x4xbf16>
    %215 = vector.shape_cast %214 : vector<1x8x32x4xbf16> to vector<8x32x4xbf16>
    "tpu.trace_start"() <{level = 10 : i32, message = "hsd,hdk->hsk"}> : () -> ()
    %cst_73 = arith.constant dense<0.000000e+00> : vector<8x8x4xf32>
    %216 = tpu.matmul %10, %215, %cst_73 {dimension_numbers = #tpu.dot_dimension_numbers<[2], [1], [1], [2], [0, 0, 0, 1, 1, 2], [0], [0]>} : vector<8x8x32xbf16>, vector<8x32x4xbf16>, vector<8x8x4xf32> -> vector<8x8x4xf32>
    "tpu.trace_stop"() : () -> ()
    %217 = vector.extract_strided_slice %194 {offsets = [1, 0, 0], sizes = [1, 8, 4], strides = [1, 1, 1]} : vector<3x8x4xf32> to vector<1x8x4xf32>
    %218 = vector.shape_cast %217 : vector<1x8x4xf32> to vector<8x4xf32>
    %219 = vector.shape_cast %218 : vector<8x4xf32> to vector<8x1x4xf32>
    %220 = vector.broadcast %219 : vector<8x1x4xf32> to vector<8x8x4xf32>
    %221 = arith.addf %216, %220 : vector<8x8x4xf32>
    %222 = arith.truncf %221 : vector<8x8x4xf32> to vector<8x8x4xbf16>
    %223 = vector.extract_strided_slice %188 {offsets = [2, 0, 0, 0], sizes = [1, 8, 32, 4], strides = [1, 1, 1, 1]} : vector<3x8x32x4xbf16> to vector<1x8x32x4xbf16>
    %224 = vector.shape_cast %223 : vector<1x8x32x4xbf16> to vector<8x32x4xbf16>
    "tpu.trace_start"() <{level = 10 : i32, message = "hsd,hdk->hsk"}> : () -> ()
    %cst_74 = arith.constant dense<0.000000e+00> : vector<8x8x4xf32>
    %225 = tpu.matmul %10, %224, %cst_74 {dimension_numbers = #tpu.dot_dimension_numbers<[2], [1], [1], [2], [0, 0, 0, 1, 1, 2], [0], [0]>} : vector<8x8x32xbf16>, vector<8x32x4xbf16>, vector<8x8x4xf32> -> vector<8x8x4xf32>
    "tpu.trace_stop"() : () -> ()
    %226 = vector.extract_strided_slice %194 {offsets = [2, 0, 0], sizes = [1, 8, 4], strides = [1, 1, 1]} : vector<3x8x4xf32> to vector<1x8x4xf32>
    %227 = vector.shape_cast %226 : vector<1x8x4xf32> to vector<8x4xf32>
    %228 = vector.shape_cast %227 : vector<8x4xf32> to vector<8x1x4xf32>
    %229 = vector.broadcast %228 : vector<8x1x4xf32> to vector<8x8x4xf32>
    %230 = arith.addf %225, %229 : vector<8x8x4xf32>
    %231 = arith.truncf %230 : vector<8x8x4xf32> to vector<8x8x4xbf16>
    "tpu.trace_start"() <{level = 10 : i32, message = "hlk,hsk->hls"}> : () -> ()
    %cst_75 = arith.constant dense<0.000000e+00> : vector<8x8x8xf32>
    %232 = tpu.matmul %213, %222, %cst_75 {dimension_numbers = #tpu.dot_dimension_numbers<[2], [2], [1], [1], [0, 0, 0, 1, 1, 1], [0], [0]>} : vector<8x8x4xbf16>, vector<8x8x4xbf16>, vector<8x8x8xf32> -> vector<8x8x8xf32>
    "tpu.trace_stop"() : () -> ()
    %cst_76 = arith.constant dense<0xFF800000> : vector<8x8xf32>
    %233 = vector.multi_reduction <maximumf>, %232, %cst_76 [2] : vector<8x8x8xf32> to vector<8x8xf32>
    %234 = vector.shape_cast %233 : vector<8x8xf32> to vector<8x8x1xf32>
    %235 = vector.broadcast %234 : vector<8x8x1xf32> to vector<8x8x8xf32>
    %236 = arith.subf %232, %235 : vector<8x8x8xf32>
    %237 = math.exp %236 : vector<8x8x8xf32>
    %cst_77 = arith.constant dense<0.000000e+00> : vector<8x8xf32>
    %238 = vector.multi_reduction <add>, %237, %cst_77 [2] : vector<8x8x8xf32> to vector<8x8xf32>
    %239 = vector.shape_cast %238 : vector<8x8xf32> to vector<8x8x1xf32>
    %240 = arith.truncf %237 : vector<8x8x8xf32> to vector<8x8x8xbf16>
    "tpu.trace_start"() <{level = 10 : i32, message = "hls,hsk->hlk"}> : () -> ()
    %cst_78 = arith.constant dense<0.000000e+00> : vector<8x8x4xf32>
    %241 = tpu.matmul %240, %231, %cst_78 {dimension_numbers = #tpu.dot_dimension_numbers<[2], [1], [1], [2], [0, 0, 0, 1, 1, 2], [0], [0]>} : vector<8x8x8xbf16>, vector<8x8x4xbf16>, vector<8x8x4xf32> -> vector<8x8x4xf32>
    "tpu.trace_stop"() : () -> ()
    %242 = tpu.reciprocal %239 {approx = true} : vector<8x8x1xf32> -> vector<8x8x1xf32>
    %243 = vector.broadcast %242 : vector<8x8x1xf32> to vector<8x8x4xf32>
    %244 = arith.mulf %241, %243 : vector<8x8x4xf32>
    %245 = arith.truncf %244 : vector<8x8x4xf32> to vector<8x8x4xbf16>
    "tpu.trace_start"() <{level = 10 : i32, message = "hlk,hkd->hld"}> : () -> ()
    %cst_79 = arith.constant dense<0.000000e+00> : vector<8x8x32xf32>
    %246 = tpu.matmul %245, %191, %cst_79 {dimension_numbers = #tpu.dot_dimension_numbers<[2], [1], [1], [2], [0, 0, 0, 1, 1, 2], [0], [0]>} : vector<8x8x4xbf16>, vector<8x4x32xbf16>, vector<8x8x32xf32> -> vector<8x8x32xf32>
    "tpu.trace_stop"() : () -> ()
    %cst_80 = arith.constant dense<0.000000e+00> : vector<8x32xf32>
    %247 = vector.multi_reduction <add>, %246, %cst_80 [0] : vector<8x8x32xf32> to vector<8x32xf32>
    %248 = vector.broadcast %198 : vector<1x32xf32> to vector<8x32xf32>
    %249 = arith.addf %247, %248 : vector<8x32xf32>
    %250 = arith.addf %185, %249 : vector<8x32xf32>
    %cst_81 = arith.constant dense<0.000000e+00> : vector<8xf32>
    %251 = vector.multi_reduction <add>, %250, %cst_81 [1] : vector<8x32xf32> to vector<8xf32>
    %252 = vector.shape_cast %251 : vector<8xf32> to vector<8x1xf32>
    %cst_82 = arith.constant 3.200000e+01 : f32
    %253 = vector.broadcast %cst_82 : f32 to vector<8x1xf32>
    %254 = arith.divf %252, %253 : vector<8x1xf32>
    %255 = vector.broadcast %254 : vector<8x1xf32> to vector<8x32xf32>
    %256 = arith.subf %250, %255 : vector<8x32xf32>
    %257 = arith.mulf %256, %256 : vector<8x32xf32>
    %cst_83 = arith.constant dense<0.000000e+00> : vector<8xf32>
    %258 = vector.multi_reduction <add>, %257, %cst_83 [1] : vector<8x32xf32> to vector<8xf32>
    %259 = vector.shape_cast %258 : vector<8xf32> to vector<8x1xf32>
    %cst_84 = arith.constant 3.200000e+01 : f32
    %260 = vector.broadcast %cst_84 : f32 to vector<8x1xf32>
    %261 = arith.divf %259, %260 : vector<8x1xf32>
    %262 = vector.broadcast %254 : vector<8x1xf32> to vector<8x32xf32>
    %263 = arith.subf %250, %262 : vector<8x32xf32>
    %cst_85 = arith.constant 9.99999974E-6 : f32
    %264 = vector.broadcast %cst_85 : f32 to vector<8x1xf32>
    %265 = arith.addf %261, %264 : vector<8x1xf32>
    %266 = math.rsqrt %265 : vector<8x1xf32>
    %267 = vector.broadcast %266 : vector<8x1xf32> to vector<8x32xf32>
    %268 = arith.mulf %263, %267 : vector<8x32xf32>
    %269 = vector.broadcast %199 : vector<1x32xf32> to vector<8x32xf32>
    %270 = arith.mulf %268, %269 : vector<8x32xf32>
    %271 = vector.broadcast %200 : vector<1x32xf32> to vector<8x32xf32>
    %272 = arith.addf %270, %271 : vector<8x32xf32>
    %c3_i32 = arith.constant 3 : i32
    %273 = arith.index_cast %c3_i32 : i32 to index
    %c0_86 = arith.constant 0 : index
    %c0_87 = arith.constant 0 : index
    %c0_88 = arith.constant 0 : index
    %c0_89 = arith.constant 0 : index
    %274 = vector.load %arg5[%273, %c0_86, %c0_87, %c0_88, %c0_89] : memref<4x3x8x32x4xbf16, #tpu.memory_space<vmem>>, vector<1x3x8x32x4xbf16>
    %275 = vector.shape_cast %274 : vector<1x3x8x32x4xbf16> to vector<3x8x32x4xbf16>
    %276 = arith.index_cast %c3_i32 : i32 to index
    %c0_90 = arith.constant 0 : index
    %c0_91 = arith.constant 0 : index
    %c0_92 = arith.constant 0 : index
    %277 = vector.load %arg6[%276, %c0_90, %c0_91, %c0_92] : memref<4x8x4x32xbf16, #tpu.memory_space<vmem>>, vector<1x8x4x32xbf16>
    %278 = vector.shape_cast %277 : vector<1x8x4x32xbf16> to vector<8x4x32xbf16>
    %279 = arith.index_cast %c3_i32 : i32 to index
    %c0_93 = arith.constant 0 : index
    %c0_94 = arith.constant 0 : index
    %c0_95 = arith.constant 0 : index
    %280 = vector.load %arg7[%279, %c0_93, %c0_94, %c0_95] : memref<4x3x8x4xf32, #tpu.memory_space<vmem>>, vector<1x3x8x4xf32>
    %281 = vector.shape_cast %280 : vector<1x3x8x4xf32> to vector<3x8x4xf32>
    %282 = arith.index_cast %c3_i32 : i32 to index
    %c0_96 = arith.constant 0 : index
    %c0_97 = arith.constant 0 : index
    %283 = vector.load %arg8[%282, %c0_96, %c0_97] : memref<4x3x32xf32, #tpu.memory_space<vmem>>, vector<1x3x32xf32>
    %284 = vector.shape_cast %283 : vector<1x3x32xf32> to vector<3x32xf32>
    %285 = vector.extract_strided_slice %284 {offsets = [0, 0], sizes = [1, 32], strides = [1, 1]} : vector<3x32xf32> to vector<1x32xf32>
    %286 = vector.extract_strided_slice %284 {offsets = [1, 0], sizes = [1, 32], strides = [1, 1]} : vector<3x32xf32> to vector<1x32xf32>
    %287 = vector.extract_strided_slice %284 {offsets = [2, 0], sizes = [1, 32], strides = [1, 1]} : vector<3x32xf32> to vector<1x32xf32>
    %288 = arith.truncf %272 : vector<8x32xf32> to vector<8x32xbf16>
    %289 = vector.shape_cast %288 : vector<8x32xbf16> to vector<1x8x32xbf16>
    %290 = vector.shape_cast %289 : vector<1x8x32xbf16> to vector<1x8x32xbf16>
    %291 = vector.broadcast %290 : vector<1x8x32xbf16> to vector<8x8x32xbf16>
    %292 = vector.extract_strided_slice %275 {offsets = [0, 0, 0, 0], sizes = [1, 8, 32, 4], strides = [1, 1, 1, 1]} : vector<3x8x32x4xbf16> to vector<1x8x32x4xbf16>
    %293 = vector.shape_cast %292 : vector<1x8x32x4xbf16> to vector<8x32x4xbf16>
    "tpu.trace_start"() <{level = 10 : i32, message = "hld,hdk->hlk"}> : () -> ()
    %cst_98 = arith.constant dense<0.000000e+00> : vector<8x8x4xf32>
    %294 = tpu.matmul %291, %293, %cst_98 {dimension_numbers = #tpu.dot_dimension_numbers<[2], [1], [1], [2], [0, 0, 0, 1, 1, 2], [0], [0]>} : vector<8x8x32xbf16>, vector<8x32x4xbf16>, vector<8x8x4xf32> -> vector<8x8x4xf32>
    "tpu.trace_stop"() : () -> ()
    %295 = vector.extract_strided_slice %281 {offsets = [0, 0, 0], sizes = [1, 8, 4], strides = [1, 1, 1]} : vector<3x8x4xf32> to vector<1x8x4xf32>
    %296 = vector.shape_cast %295 : vector<1x8x4xf32> to vector<8x4xf32>
    %297 = vector.shape_cast %296 : vector<8x4xf32> to vector<8x1x4xf32>
    %298 = vector.broadcast %297 : vector<8x1x4xf32> to vector<8x8x4xf32>
    %299 = arith.addf %294, %298 : vector<8x8x4xf32>
    %300 = arith.truncf %299 : vector<8x8x4xf32> to vector<8x8x4xbf16>
    %301 = vector.extract_strided_slice %275 {offsets = [1, 0, 0, 0], sizes = [1, 8, 32, 4], strides = [1, 1, 1, 1]} : vector<3x8x32x4xbf16> to vector<1x8x32x4xbf16>
    %302 = vector.shape_cast %301 : vector<1x8x32x4xbf16> to vector<8x32x4xbf16>
    "tpu.trace_start"() <{level = 10 : i32, message = "hsd,hdk->hsk"}> : () -> ()
    %cst_99 = arith.constant dense<0.000000e+00> : vector<8x8x4xf32>
    %303 = tpu.matmul %10, %302, %cst_99 {dimension_numbers = #tpu.dot_dimension_numbers<[2], [1], [1], [2], [0, 0, 0, 1, 1, 2], [0], [0]>} : vector<8x8x32xbf16>, vector<8x32x4xbf16>, vector<8x8x4xf32> -> vector<8x8x4xf32>
    "tpu.trace_stop"() : () -> ()
    %304 = vector.extract_strided_slice %281 {offsets = [1, 0, 0], sizes = [1, 8, 4], strides = [1, 1, 1]} : vector<3x8x4xf32> to vector<1x8x4xf32>
    %305 = vector.shape_cast %304 : vector<1x8x4xf32> to vector<8x4xf32>
    %306 = vector.shape_cast %305 : vector<8x4xf32> to vector<8x1x4xf32>
    %307 = vector.broadcast %306 : vector<8x1x4xf32> to vector<8x8x4xf32>
    %308 = arith.addf %303, %307 : vector<8x8x4xf32>
    %309 = arith.truncf %308 : vector<8x8x4xf32> to vector<8x8x4xbf16>
    %310 = vector.extract_strided_slice %275 {offsets = [2, 0, 0, 0], sizes = [1, 8, 32, 4], strides = [1, 1, 1, 1]} : vector<3x8x32x4xbf16> to vector<1x8x32x4xbf16>
    %311 = vector.shape_cast %310 : vector<1x8x32x4xbf16> to vector<8x32x4xbf16>
    "tpu.trace_start"() <{level = 10 : i32, message = "hsd,hdk->hsk"}> : () -> ()
    %cst_100 = arith.constant dense<0.000000e+00> : vector<8x8x4xf32>
    %312 = tpu.matmul %10, %311, %cst_100 {dimension_numbers = #tpu.dot_dimension_numbers<[2], [1], [1], [2], [0, 0, 0, 1, 1, 2], [0], [0]>} : vector<8x8x32xbf16>, vector<8x32x4xbf16>, vector<8x8x4xf32> -> vector<8x8x4xf32>
    "tpu.trace_stop"() : () -> ()
    %313 = vector.extract_strided_slice %281 {offsets = [2, 0, 0], sizes = [1, 8, 4], strides = [1, 1, 1]} : vector<3x8x4xf32> to vector<1x8x4xf32>
    %314 = vector.shape_cast %313 : vector<1x8x4xf32> to vector<8x4xf32>
    %315 = vector.shape_cast %314 : vector<8x4xf32> to vector<8x1x4xf32>
    %316 = vector.broadcast %315 : vector<8x1x4xf32> to vector<8x8x4xf32>
    %317 = arith.addf %312, %316 : vector<8x8x4xf32>
    %318 = arith.truncf %317 : vector<8x8x4xf32> to vector<8x8x4xbf16>
    "tpu.trace_start"() <{level = 10 : i32, message = "hlk,hsk->hls"}> : () -> ()
    %cst_101 = arith.constant dense<0.000000e+00> : vector<8x8x8xf32>
    %319 = tpu.matmul %300, %309, %cst_101 {dimension_numbers = #tpu.dot_dimension_numbers<[2], [2], [1], [1], [0, 0, 0, 1, 1, 1], [0], [0]>} : vector<8x8x4xbf16>, vector<8x8x4xbf16>, vector<8x8x8xf32> -> vector<8x8x8xf32>
    "tpu.trace_stop"() : () -> ()
    %cst_102 = arith.constant dense<0xFF800000> : vector<8x8xf32>
    %320 = vector.multi_reduction <maximumf>, %319, %cst_102 [2] : vector<8x8x8xf32> to vector<8x8xf32>
    %321 = vector.shape_cast %320 : vector<8x8xf32> to vector<8x8x1xf32>
    %322 = vector.broadcast %321 : vector<8x8x1xf32> to vector<8x8x8xf32>
    %323 = arith.subf %319, %322 : vector<8x8x8xf32>
    %324 = math.exp %323 : vector<8x8x8xf32>
    %cst_103 = arith.constant dense<0.000000e+00> : vector<8x8xf32>
    %325 = vector.multi_reduction <add>, %324, %cst_103 [2] : vector<8x8x8xf32> to vector<8x8xf32>
    %326 = vector.shape_cast %325 : vector<8x8xf32> to vector<8x8x1xf32>
    %327 = arith.truncf %324 : vector<8x8x8xf32> to vector<8x8x8xbf16>
    "tpu.trace_start"() <{level = 10 : i32, message = "hls,hsk->hlk"}> : () -> ()
    %cst_104 = arith.constant dense<0.000000e+00> : vector<8x8x4xf32>
    %328 = tpu.matmul %327, %318, %cst_104 {dimension_numbers = #tpu.dot_dimension_numbers<[2], [1], [1], [2], [0, 0, 0, 1, 1, 2], [0], [0]>} : vector<8x8x8xbf16>, vector<8x8x4xbf16>, vector<8x8x4xf32> -> vector<8x8x4xf32>
    "tpu.trace_stop"() : () -> ()
    %329 = tpu.reciprocal %326 {approx = true} : vector<8x8x1xf32> -> vector<8x8x1xf32>
    %330 = vector.broadcast %329 : vector<8x8x1xf32> to vector<8x8x4xf32>
    %331 = arith.mulf %328, %330 : vector<8x8x4xf32>
    %332 = arith.truncf %331 : vector<8x8x4xf32> to vector<8x8x4xbf16>
    "tpu.trace_start"() <{level = 10 : i32, message = "hlk,hkd->hld"}> : () -> ()
    %cst_105 = arith.constant dense<0.000000e+00> : vector<8x8x32xf32>
    %333 = tpu.matmul %332, %278, %cst_105 {dimension_numbers = #tpu.dot_dimension_numbers<[2], [1], [1], [2], [0, 0, 0, 1, 1, 2], [0], [0]>} : vector<8x8x4xbf16>, vector<8x4x32xbf16>, vector<8x8x32xf32> -> vector<8x8x32xf32>
    "tpu.trace_stop"() : () -> ()
    %cst_106 = arith.constant dense<0.000000e+00> : vector<8x32xf32>
    %334 = vector.multi_reduction <add>, %333, %cst_106 [0] : vector<8x8x32xf32> to vector<8x32xf32>
    %335 = vector.broadcast %285 : vector<1x32xf32> to vector<8x32xf32>
    %336 = arith.addf %334, %335 : vector<8x32xf32>
    %337 = arith.addf %272, %336 : vector<8x32xf32>
    %cst_107 = arith.constant dense<0.000000e+00> : vector<8xf32>
    %338 = vector.multi_reduction <add>, %337, %cst_107 [1] : vector<8x32xf32> to vector<8xf32>
    %339 = vector.shape_cast %338 : vector<8xf32> to vector<8x1xf32>
    %cst_108 = arith.constant 3.200000e+01 : f32
    %340 = vector.broadcast %cst_108 : f32 to vector<8x1xf32>
    %341 = arith.divf %339, %340 : vector<8x1xf32>
    %342 = vector.broadcast %341 : vector<8x1xf32> to vector<8x32xf32>
    %343 = arith.subf %337, %342 : vector<8x32xf32>
    %344 = arith.mulf %343, %343 : vector<8x32xf32>
    %cst_109 = arith.constant dense<0.000000e+00> : vector<8xf32>
    %345 = vector.multi_reduction <add>, %344, %cst_109 [1] : vector<8x32xf32> to vector<8xf32>
    %346 = vector.shape_cast %345 : vector<8xf32> to vector<8x1xf32>
    %cst_110 = arith.constant 3.200000e+01 : f32
    %347 = vector.broadcast %cst_110 : f32 to vector<8x1xf32>
    %348 = arith.divf %346, %347 : vector<8x1xf32>
    %349 = vector.broadcast %341 : vector<8x1xf32> to vector<8x32xf32>
    %350 = arith.subf %337, %349 : vector<8x32xf32>
    %cst_111 = arith.constant 9.99999974E-6 : f32
    %351 = vector.broadcast %cst_111 : f32 to vector<8x1xf32>
    %352 = arith.addf %348, %351 : vector<8x1xf32>
    %353 = math.rsqrt %352 : vector<8x1xf32>
    %354 = vector.broadcast %353 : vector<8x1xf32> to vector<8x32xf32>
    %355 = arith.mulf %350, %354 : vector<8x32xf32>
    %356 = vector.broadcast %286 : vector<1x32xf32> to vector<8x32xf32>
    %357 = arith.mulf %355, %356 : vector<8x32xf32>
    %358 = vector.broadcast %287 : vector<1x32xf32> to vector<8x32xf32>
    %359 = arith.addf %357, %358 : vector<8x32xf32>
    %c4_i32 = arith.constant 4 : i32
    %c0_112 = arith.constant 0 : index
    %c0_113 = arith.constant 0 : index
    %c0_114 = arith.constant 0 : index
    %360 = vector.load %arg9[%c0_112, %c0_113, %c0_114] : memref<1x8x32xf32, #tpu.memory_space<vmem>>, vector<1x8x32xf32>
    %361 = vector.shape_cast %360 : vector<1x8x32xf32> to vector<8x32xf32>
    %362 = vector.shape_cast %359 : vector<8x32xf32> to vector<1x8x32xf32>
    tpu.vector_store %arg9[%c0_112, %c0_113, %c0_114], %362 {strides = array<i32>} : memref<1x8x32xf32, #tpu.memory_space<vmem>>, vector<1x8x32xf32>,
    return
  }
  func.func @transform_0(%arg0: i32) -> (i32, i32) {
    %c0_i32 = arith.constant 0 : i32
    %c0_i32_0 = arith.constant 0 : i32
    %c0_i32_1 = arith.constant 0 : i32
    return %c0_i32, %c0_i32_0 : i32, i32
  }
  func.func @transform_1(%arg0: i32) -> (i32, i32, i32) {
    %c0_i32 = arith.constant 0 : i32
    %c0_i32_0 = arith.constant 0 : i32
    %c0_i32_1 = arith.constant 0 : i32
    return %arg0, %c0_i32, %c0_i32_0 : i32, i32, i32
  }
  func.func @transform_2(%arg0: i32) -> (i32, i32) {
    %c0_i32 = arith.constant 0 : i32
    %c0_i32_0 = arith.constant 0 : i32
    %c0_i32_1 = arith.constant 0 : i32
    return %c0_i32, %c0_i32_0 : i32, i32
  }
  func.func @transform_3(%arg0: i32) -> (i32, i32) {
    %c0_i32 = arith.constant 0 : i32
    %c0_i32_0 = arith.constant 0 : i32
    %c0_i32_1 = arith.constant 0 : i32
    return %c0_i32, %c0_i32_0 : i32, i32
  }
  func.func @transform_4(%arg0: i32) -> (i32, i32, i32, i32, i32) {
    %c0_i32 = arith.constant 0 : i32
    %c0_i32_0 = arith.constant 0 : i32
    %c0_i32_1 = arith.constant 0 : i32
    %c0_i32_2 = arith.constant 0 : i32
    %c0_i32_3 = arith.constant 0 : i32
    %c0_i32_4 = arith.constant 0 : i32
    return %c0_i32, %c0_i32_0, %c0_i32_1, %c0_i32_2, %c0_i32_3 : i32, i32, i32, i32, i32
  }
  func.func @transform_5(%arg0: i32) -> (i32, i32, i32, i32) {
    %c0_i32 = arith.constant 0 : i32
    %c0_i32_0 = arith.constant 0 : i32
    %c0_i32_1 = arith.constant 0 : i32
    %c0_i32_2 = arith.constant 0 : i32
    %c0_i32_3 = arith.constant 0 : i32
    return %c0_i32, %c0_i32_0, %c0_i32_1, %c0_i32_2 : i32, i32, i32, i32
  }
  func.func @transform_6(%arg0: i32) -> (i32, i32, i32, i32) {
    %c0_i32 = arith.constant 0 : i32
    %c0_i32_0 = arith.constant 0 : i32
    %c0_i32_1 = arith.constant 0 : i32
    %c0_i32_2 = arith.constant 0 : i32
    %c0_i32_3 = arith.constant 0 : i32
    return %c0_i32, %c0_i32_0, %c0_i32_1, %c0_i32_2 : i32, i32, i32, i32
  }
  func.func @transform_7(%arg0: i32) -> (i32, i32, i32) {
    %c0_i32 = arith.constant 0 : i32
    %c0_i32_0 = arith.constant 0 : i32
    %c0_i32_1 = arith.constant 0 : i32
    %c0_i32_2 = arith.constant 0 : i32
    return %c0_i32, %c0_i32_0, %c0_i32_1 : i32, i32, i32
  }
  func.func @transform_8(%arg0: i32) -> (i32, i32, i32) {
    %c0_i32 = arith.constant 0 : i32
    %c0_i32_0 = arith.constant 0 : i32
    %c0_i32_1 = arith.constant 0 : i32
    return %arg0, %c0_i32, %c0_i32_0 : i32, i32, i32
  }
}

</mosaic_0001>

<llo_original>
// kernel: tpu_custom_call.1
$region0: #{tpu_custom_call.1}
  #allocation0 [shape = 'u32[]', space=smem, size = 0x4, offset = 0x4, fixed_abs, tag = 'smem constant byte address 0x4 - core index']
  #allocation1 [shape = 'u32[72,128]{1,0:T(1,128)}', space=vmem, size = 0x9000, scoped, tag = 'internal scratch']
  %s0 = inlined_call_operand.vmem [shape: f32[8,32], index: 0, kind: input, shape index: {}]
  %s1 = inlined_call_operand.vmem [shape: bf16[2,8,16], index: 1, kind: input, shape index: {}]
  %s2 = inlined_call_operand.vmem [shape: bf16[16,32], index: 2, kind: input, shape index: {}]
  %s3 = inlined_call_operand.vmem [shape: f32[1,32], index: 3, kind: input, shape index: {}]
  %s4 = inlined_call_operand.vmem [shape: bf16[4,3,8,32,4], index: 4, kind: input, shape index: {}]
  %s5 = inlined_call_operand.vmem [shape: bf16[4,8,4,32], index: 5, kind: input, shape index: {}]
  %s6 = inlined_call_operand.vmem [shape: f32[4,3,8,4], index: 6, kind: input, shape index: {}]
  %s7 = inlined_call_operand.vmem [shape: f32[4,3,32], index: 7, kind: input, shape index: {}]
  %s8 = inlined_call_operand.hbm [shape: f32[2,8,32], index: 8, kind: output, shape index: {}]
  %s9 = sld [smem:[#allocation0]]
  $region65: #{tpu_custom_call.1} parent=0
    _
  %s11 = ssub.s32 1, %s9
  %s12 = scalar_select 0, %s11, %s9
  $region1: #{tpu_custom_call.1} parent=0
    #allocation2 [shape = 'u8[8192]{0}', space=vmem, size = 0x2000, scoped, tag = 'output window, operand 0']
    #allocation3 [shape = 's32[2]{0}', space=sflag, size = 0x8, scoped, tag = 'scoped memory for tpu_custom_call.1']
    %13 = vsyncpa [#allocation3], 0
    %s14 = scalar_lea.sflag [#allocation3], 1
    %15 = vsyncpa %s14, 0
    loop: start=0, step=1, limit=4
    $region2: #{tpu_custom_call.1} parent=1 // loop_pre_header
      _
    $region3: #{tpu_custom_call.1} parent=1 // loop_header
      %s17 = sphi 0, %s21
      %p18 = scmp.ge.s32.totalorder %s17, 4
      %s25 = sphi 0, %s25
      %s27 = sphi 0, %s25
      %s28 = sphi 0, %s27
      %s42 = sphi 0, %s28
      %s48 = sphi 0, %s50
      %s51 = sphi 0, %s48
      %s52 = sphi 0, %s51
      %s68 = sphi 0, %s52
      %s72 = sphi 0, %s72
      %s74 = sphi 0, %s72
      %s75 = sphi 0, %s74
      %s89 = sphi 0, %s75
      %s93 = sphi 0, %s93
      %s95 = sphi 0, %s93
      %s96 = sphi 0, %s95
      %s110 = sphi 0, %s96
      %s114 = sphi 0, %s114
      %s116 = sphi 0, %s114
      %s117 = sphi 0, %s116
      %s131 = sphi 0, %s117
      %s135 = sphi 0, %s135
      %s137 = sphi 0, %s135
      %s138 = sphi 0, %s137
      %s152 = sphi 0, %s138
      %s156 = sphi 0, %s156
      %s158 = sphi 0, %s156
      %s159 = sphi 0, %s158
      %s173 = sphi 0, %s159
      %s177 = sphi 0, %s177
      %s179 = sphi 0, %s177
      %s180 = sphi 0, %s179
      %s194 = sphi 0, %s180
      %s200 = sphi 0, %s202
      %s203 = sphi 0, %s200
      %s204 = sphi 0, %s203
      %s220 = sphi 0, %s204
    $region4: #{tpu_custom_call.1} parent=1 // loop_header_branch
      %20 = sbr.rel (%p18) target = $region8
    $region5: #{tpu_custom_call.1} parent=1 // loop_body
      %s22 = ssub.s32 %s17, 1
      %s23 = ssub.s32 %s17, 2
      %s24 = sadd.s32 %s17, 1
      %s26 = sadd.s32 %s25, 1
      %p29 = scmp.eq.s32.totalorder %s17, 1
      %p30 = scmp.ne.s32.totalorder %s25, %s27
      %p31 = scmp.eq.s32.totalorder %s17, 0
      %p32 = por %p30, %p31
      %p33 = scmp.ne.s32.totalorder %s25, %s27
      %p34 = scmp.eq.s32.totalorder %s22, 1
      %p35 = por %p33, %p34
      %p36 = scmp.ne.s32.totalorder %s27, %s28
      %p37 = scmp.eq.s32.totalorder %s22, 0
      %p38 = por %p36, %p37
      %p39 = scmp.ne.s32.totalorder %s27, %s28
      %p40 = scmp.eq.s32.totalorder %s23, 1
      %p41 = por %p39, %p40
      %p43 = scmp.ne.s32.totalorder %s28, %s42
      %p44 = scmp.eq.s32.totalorder %s23, 0
      %p45 = por %p43, %p44
      %s46 = ssub.s32 %s17, %s24
      %p47 = scmp.eq.s32.totalorder %s46, 0
      %s49 = sadd.s32 %s48, 1
      %s50 = scalar_select %p47, %s48, %s49
      %p53 = pneg %p47
      %p54 = scmp.eq.s32.totalorder %s17, 1
      %p55 = por %p53, %p54
      %p56 = scmp.ne.s32.totalorder %s48, %s51
      %p57 = scmp.eq.s32.totalorder %s17, 0
      %p58 = por %p56, %p57
      %p59 = scmp.ne.s32.totalorder %s48, %s51
      %p60 = scmp.eq.s32.totalorder %s22, 1
      %p61 = por %p59, %p60
      %p62 = scmp.ne.s32.totalorder %s51, %s52
      %p63 = scmp.eq.s32.totalorder %s22, 0
      %p64 = por %p62, %p63
      %p65 = scmp.ne.s32.totalorder %s51, %s52
      %p66 = scmp.eq.s32.totalorder %s23, 1
      %p67 = por %p65, %p66
      %p69 = scmp.ne.s32.totalorder %s52, %s68
      %p70 = scmp.eq.s32.totalorder %s23, 0
      %p71 = por %p69, %p70
      %s73 = sadd.s32 %s72, 1
      %p76 = scmp.eq.s32.totalorder %s17, 1
      %p77 = scmp.ne.s32.totalorder %s72, %s74
      %p78 = scmp.eq.s32.totalorder %s17, 0
      %p79 = por %p77, %p78
      %p80 = scmp.ne.s32.totalorder %s72, %s74
      %p81 = scmp.eq.s32.totalorder %s22, 1
      %p82 = por %p80, %p81
      %p83 = scmp.ne.s32.totalorder %s74, %s75
      %p84 = scmp.eq.s32.totalorder %s22, 0
      %p85 = por %p83, %p84
      %p86 = scmp.ne.s32.totalorder %s74, %s75
      %p87 = scmp.eq.s32.totalorder %s23, 1
      %p88 = por %p86, %p87
      %p90 = scmp.ne.s32.totalorder %s75, %s89
      %p91 = scmp.eq.s32.totalorder %s23, 0
      %p92 = por %p90, %p91
      %s94 = sadd.s32 %s93, 1
      %p97 = scmp.eq.s32.totalorder %s17, 1
      %p98 = scmp.ne.s32.totalorder %s93, %s95
      %p99 = scmp.eq.s32.totalorder %s17, 0
      %p100 = por %p98, %p99
      %p101 = scmp.ne.s32.totalorder %s93, %s95
      %p102 = scmp.eq.s32.totalorder %s22, 1
      %p103 = por %p101, %p102
      %p104 = scmp.ne.s32.totalorder %s95, %s96
      %p105 = scmp.eq.s32.totalorder %s22, 0
      %p106 = por %p104, %p105
      %p107 = scmp.ne.s32.totalorder %s95, %s96
      %p108 = scmp.eq.s32.totalorder %s23, 1
      %p109 = por %p107, %p108
      %p111 = scmp.ne.s32.totalorder %s96, %s110
      %p112 = scmp.eq.s32.totalorder %s23, 0
      %p113 = por %p111, %p112
      %s115 = sadd.s32 %s114, 1
      %p118 = scmp.eq.s32.totalorder %s17, 1
      %p119 = scmp.ne.s32.totalorder %s114, %s116
      %p120 = scmp.eq.s32.totalorder %s17, 0
      %p121 = por %p119, %p120
      %p122 = scmp.ne.s32.totalorder %s114, %s116
      %p123 = scmp.eq.s32.totalorder %s22, 1
      %p124 = por %p122, %p123
      %p125 = scmp.ne.s32.totalorder %s116, %s117
      %p126 = scmp.eq.s32.totalorder %s22, 0
      %p127 = por %p125, %p126
      %p128 = scmp.ne.s32.totalorder %s116, %s117
      %p129 = scmp.eq.s32.totalorder %s23, 1
      %p130 = por %p128, %p129
      %p132 = scmp.ne.s32.totalorder %s117, %s131
      %p133 = scmp.eq.s32.totalorder %s23, 0
      %p134 = por %p132, %p133
      %s136 = sadd.s32 %s135, 1
      %p139 = scmp.eq.s32.totalorder %s17, 1
      %p140 = scmp.ne.s32.totalorder %s135, %s137
      %p141 = scmp.eq.s32.totalorder %s17, 0
      %p142 = por %p140, %p141
      %p143 = scmp.ne.s32.totalorder %s135, %s137
      %p144 = scmp.eq.s32.totalorder %s22, 1
      %p145 = por %p143, %p144
      %p146 = scmp.ne.s32.totalorder %s137, %s138
      %p147 = scmp.eq.s32.totalorder %s22, 0
      %p148 = por %p146, %p147
      %p149 = scmp.ne.s32.totalorder %s137, %s138
      %p150 = scmp.eq.s32.totalorder %s23, 1
      %p151 = por %p149, %p150
      %p153 = scmp.ne.s32.totalorder %s138, %s152
      %p154 = scmp.eq.s32.totalorder %s23, 0
      %p155 = por %p153, %p154
      %s157 = sadd.s32 %s156, 1
      %p160 = scmp.eq.s32.totalorder %s17, 1
      %p161 = scmp.ne.s32.totalorder %s156, %s158
      %p162 = scmp.eq.s32.totalorder %s17, 0
      %p163 = por %p161, %p162
      %p164 = scmp.ne.s32.totalorder %s156, %s158
      %p165 = scmp.eq.s32.totalorder %s22, 1
      %p166 = por %p164, %p165
      %p167 = scmp.ne.s32.totalorder %s158, %s159
      %p168 = scmp.eq.s32.totalorder %s22, 0
      %p169 = por %p167, %p168
      %p170 = scmp.ne.s32.totalorder %s158, %s159
      %p171 = scmp.eq.s32.totalorder %s23, 1
      %p172 = por %p170, %p171
      %p174 = scmp.ne.s32.totalorder %s159, %s173
      %p175 = scmp.eq.s32.totalorder %s23, 0
      %p176 = por %p174, %p175
      %s178 = sadd.s32 %s177, 1
      %p181 = scmp.eq.s32.totalorder %s17, 1
      %p182 = scmp.ne.s32.totalorder %s177, %s179
      %p183 = scmp.eq.s32.totalorder %s17, 0
      %p184 = por %p182, %p183
      %p185 = scmp.ne.s32.totalorder %s177, %s179
      %p186 = scmp.eq.s32.totalorder %s22, 1
      %p187 = por %p185, %p186
      %p188 = scmp.ne.s32.totalorder %s179, %s180
      %p189 = scmp.eq.s32.totalorder %s22, 0
      %p190 = por %p188, %p189
      %p191 = scmp.ne.s32.totalorder %s179, %s180
      %p192 = scmp.eq.s32.totalorder %s23, 1
      %p193 = por %p191, %p192
      %p195 = scmp.ne.s32.totalorder %s180, %s194
      %p196 = scmp.eq.s32.totalorder %s23, 0
      %p197 = por %p195, %p196
      %s198 = ssub.s32 %s17, %s24
      %p199 = scmp.eq.s32.totalorder %s198, 0
      %s201 = sadd.s32 %s200, 1
      %s202 = scalar_select %p199, %s200, %s201
      %p205 = pneg %p199
      %p206 = scmp.eq.s32.totalorder %s17, 1
      %p207 = por %p205, %p206
      %p208 = scmp.ne.s32.totalorder %s200, %s203
      %p209 = scmp.eq.s32.totalorder %s17, 0
      %p210 = por %p208, %p209
      %p211 = scmp.ne.s32.totalorder %s200, %s203
      %p212 = scmp.eq.s32.totalorder %s22, 1
      %p213 = por %p211, %p212
      %p214 = scmp.ne.s32.totalorder %s203, %s204
      %p215 = scmp.eq.s32.totalorder %s22, 0
      %p216 = por %p214, %p215
      %p217 = scmp.ne.s32.totalorder %s203, %s204
      %p218 = scmp.eq.s32.totalorder %s23, 1
      %p219 = por %p217, %p218
      %p221 = scmp.ne.s32.totalorder %s204, %s220
      %p222 = scmp.eq.s32.totalorder %s23, 0
      %p223 = por %p221, %p222
      %p224 = scmp.le.s32.totalorder 1, %s17
      %p225 = scmp.lt.s32.totalorder %s17, 3
      %p226 = pnand %p224, %p225
      %p227 = pneg %p226
      // Predicated region
      $region9: #{tpu_custom_call.1} parent=5 // pred_check
        _
      $region10: #{tpu_custom_call.1} parent=5 // pred_check_branch
        %229 = sbr.rel (%p226) target = $region12
      $region11: #{tpu_custom_call.1} parent=5 // pred_region
        %s230 = ssub.s32 %s17, 1
        // Predicated region
        $region13: #{tpu_custom_call.1} parent=11 // pred_check
          %p231 = pneg %p38
        $region14: #{tpu_custom_call.1} parent=11 // pred_check_branch
          %233 = sbr.rel (%p231) target = $region16
        $region15: #{tpu_custom_call.1} parent=11 // pred_region
          _
        $region16: #{tpu_custom_call.1} parent=11 // pred_fallthru
          _
        // Predicated region
        $region17: #{tpu_custom_call.1} parent=11 // pred_check
          %p234 = pneg %p85
        $region18: #{tpu_custom_call.1} parent=11 // pred_check_branch
          %236 = sbr.rel (%p234) target = $region20
        $region19: #{tpu_custom_call.1} parent=11 // pred_region
          _
        $region20: #{tpu_custom_call.1} parent=11 // pred_fallthru
          _
        // Predicated region
        $region21: #{tpu_custom_call.1} parent=11 // pred_check
          %p237 = pneg %p106
        $region22: #{tpu_custom_call.1} parent=11 // pred_check_branch
          %239 = sbr.rel (%p237) target = $region24
        $region23: #{tpu_custom_call.1} parent=11 // pred_region
          _
        $region24: #{tpu_custom_call.1} parent=11 // pred_fallthru
          _
        // Predicated region
        $region25: #{tpu_custom_call.1} parent=11 // pred_check
          %p240 = pneg %p127
        $region26: #{tpu_custom_call.1} parent=11 // pred_check_branch
          %242 = sbr.rel (%p240) target = $region28
        $region27: #{tpu_custom_call.1} parent=11 // pred_region
          _
        $region28: #{tpu_custom_call.1} parent=11 // pred_fallthru
          _
        // Predicated region
        $region29: #{tpu_custom_call.1} parent=11 // pred_check
          %p243 = pneg %p148
        $region30: #{tpu_custom_call.1} parent=11 // pred_check_branch
          %245 = sbr.rel (%p243) target = $region32
        $region31: #{tpu_custom_call.1} parent=11 // pred_region
          _
        $region32: #{tpu_custom_call.1} parent=11 // pred_fallthru
          _
        // Predicated region
        $region33: #{tpu_custom_call.1} parent=11 // pred_check
          %p246 = pneg %p169
        $region34: #{tpu_custom_call.1} parent=11 // pred_check_branch
          %248 = sbr.rel (%p246) target = $region36
        $region35: #{tpu_custom_call.1} parent=11 // pred_region
          _
        $region36: #{tpu_custom_call.1} parent=11 // pred_fallthru
          _
        // Predicated region
        $region37: #{tpu_custom_call.1} parent=11 // pred_check
          %p249 = pneg %p190
        $region38: #{tpu_custom_call.1} parent=11 // pred_check_branch
          %251 = sbr.rel (%p249) target = $region40
        $region39: #{tpu_custom_call.1} parent=11 // pred_region
          _
        $region40: #{tpu_custom_call.1} parent=11 // pred_fallthru
          _
      $region12: #{tpu_custom_call.1} parent=5 // pred_fallthru
        _
      %p252 = scmp.lt.s32.totalorder %s17, 2
      // Predicated region
      $region41: #{tpu_custom_call.1} parent=5 // pred_check
        %p253 = pneg %p252
      $region42: #{tpu_custom_call.1} parent=5 // pred_check_branch
        %255 = sbr.rel (%p253) target = $region44
      $region43: #{tpu_custom_call.1} parent=5 // pred_region
        // Predicated region
        $region45: #{tpu_custom_call.1} parent=43 // pred_check
          %p256 = pneg %p58
        $region46: #{tpu_custom_call.1} parent=43 // pred_check_branch
          %258 = sbr.rel (%p256) target = $region48
        $region47: #{tpu_custom_call.1} parent=43 // pred_region
          %p259 = scmp.lt.s32.totalorder %s17, 1
          %s260 = scalar_select %p259, %s17, 1
          %s261 = smul.addr %s260, 4
          %s262 = scalar_lea.vmem %s1, %s261
        $region48: #{tpu_custom_call.1} parent=43 // pred_fallthru
          _
      $region44: #{tpu_custom_call.1} parent=5 // pred_fallthru
        _
      %p263 = scmp.le.s32.totalorder 1, %s17
      %p264 = scmp.lt.s32.totalorder %s17, 3
      %p265 = pnand %p263, %p264
      %p266 = pneg %p265
      // Predicated region
      $region49: #{tpu_custom_call.1} parent=5 // pred_check
        _
      $region50: #{tpu_custom_call.1} parent=5 // pred_check_branch
        %268 = sbr.rel (%p265) target = $region52
      $region51: #{tpu_custom_call.1} parent=5 // pred_region
        %s269 = ssub.s32 %s17, 1
        %p270 = pneg %p38
        %p271 = pneg %p35
        %p272 = scmp.lt.s32.totalorder %s22, 1
        %s273 = scalar_select %p272, %s22, 1
        %s274 = smul.addr %s273, 4
        %s275 = scalar_lea.vmem %s1, %s274
        %p276 = pneg %p64
        %p277 = pneg %p61
        %p278 = pneg %p85
        %p279 = pneg %p82
        %p280 = pneg %p106
        %p281 = pneg %p103
        %p282 = pneg %p127
        %p283 = pneg %p124
        %p284 = pneg %p148
        %p285 = pneg %p145
        %p286 = pneg %p169
        %p287 = pneg %p166
        %p288 = pneg %p190
        %p289 = pneg %p187
        %p290 = pneg %p216
        %p291 = pneg %p213
        %s292 = sand.u32 %s203, 1
        %s293 = scalar_lea.sflag [#allocation3], %s292
        %s294 = sand.u32 %s203, 1
        %s295 = smul.addr %s294, 8
        %s296 = scalar_lea.vmem [#allocation2], %s295
        %p297 = scmp.lt.s32.totalorder %s22, 1
        %s298 = scalar_select %p297, %s22, 1
        %s299 = smul.addr %s298, 4
        %s300 = scalar_lea.vmem %s1, %s299
        %v302 = vld [vmem:[%s300] sm:$0xf]
        %v303 = vld [vmem:[%s2] sm:$0xf]
        %v304 = vld [vmem:[%s2 + $0x4] sm:$0xf]
        %v305 = vld [vmem:[%s3] sm:$0x1]
        %v307 = vperm.slane %v305, 0
        %v311 = vunpack.c.l.b16 %v303
        %v312 = vunpack.c.l.b16 %v304
        %v313 = vpack.c.b16 %v312, %v311
        %vm315 = vcmask 130048
        %v317 = vsel %vm315, %v302, 0
        %319 = vmatpush.bf16.msra.mxu0 0
        %320 = vmatpush.bf16.msra.mxu0 0
        %321 = vmatpush.bf16.msra.mxu0 0
        %322 = vmatpush.bf16.msra.mxu0 0
        %323 = vmatpush.bf16.msra.mxu0 0
        %324 = vmatpush.bf16.msra.mxu0 0
        %325 = vmatpush.bf16.msra.mxu0 0
        %326 = vmatpush.bf16.msra.mxu0 %v313
        %327 = vmatmul.bf16.gmra.mxu0 %v317
        %v328 = vpop.f32.mrf.mxu0
        %v329 = vadd.f32 %v307, %v328
        %v330 = vpop.f32.mrf.mxu0
        %331 = vdwg.mxu0
        %v332 = vpack.c.bf16 %v329, %v329
        %v333 = vld [vmem:[%s0] sm:$0xff]
        %v334 = vld [vmem:[%s4] sm:$0xf]
        %v335 = vld [vmem:[%s4 + $0x4] sm:$0xf]
        %v336 = vld [vmem:[%s4 + $0x8] sm:$0xf]
        %v337 = vld [vmem:[%s4 + $0xc] sm:$0xf]
        %v338 = vld [vmem:[%s4 + $0x10] sm:$0xf]
        %v339 = vld [vmem:[%s4 + $0x14] sm:$0xf]
        %v340 = vld [vmem:[%s4 + $0x18] sm:$0xf]
        %v341 = vld [vmem:[%s4 + $0x1c] sm:$0xf]
        %v342 = vld [vmem:[%s4 + $0x20] sm:$0xf]
        %v343 = vld [vmem:[%s4 + $0x24] sm:$0xf]
        %v344 = vld [vmem:[%s4 + $0x28] sm:$0xf]
        %v345 = vld [vmem:[%s4 + $0x2c] sm:$0xf]
        %v346 = vld [vmem:[%s4 + $0x30] sm:$0xf]
        %v347 = vld [vmem:[%s4 + $0x34] sm:$0xf]
        %v348 = vld [vmem:[%s4 + $0x38] sm:$0xf]
        %v349 = vld [vmem:[%s4 + $0x3c] sm:$0xf]
        %v350 = vld [vmem:[%s4 + $0x40] sm:$0xf]
        %v351 = vld [vmem:[%s4 + $0x44] sm:$0xf]
        %v352 = vld [vmem:[%s4 + $0x48] sm:$0xf]
        %v353 = vld [vmem:[%s4 + $0x4c] sm:$0xf]
        %v354 = vld [vmem:[%s4 + $0x50] sm:$0xf]
        %v355 = vld [vmem:[%s4 + $0x54] sm:$0xf]
        %v356 = vld [vmem:[%s4 + $0x58] sm:$0xf]
        %v357 = vld [vmem:[%s4 + $0x5c] sm:$0xf]
        %v358 = vld [vmem:[%s4 + $0x60] sm:$0xf]
        %v359 = vld [vmem:[%s4 + $0x64] sm:$0xf]
        %v360 = vld [vmem:[%s4 + $0x68] sm:$0xf]
        %v361 = vld [vmem:[%s4 + $0x6c] sm:$0xf]
        %v362 = vld [vmem:[%s4 + $0x70] sm:$0xf]
        %v363 = vld [vmem:[%s4 + $0x74] sm:$0xf]
        %v364 = vld [vmem:[%s4 + $0x78] sm:$0xf]
        %v365 = vld [vmem:[%s4 + $0x7c] sm:$0xf]
        %v366 = vld [vmem:[%s4 + $0x80] sm:$0xf]
        %v367 = vld [vmem:[%s4 + $0x84] sm:$0xf]
        %v368 = vld [vmem:[%s4 + $0x88] sm:$0xf]
        %v369 = vld [vmem:[%s4 + $0x8c] sm:$0xf]
        %v370 = vld [vmem:[%s4 + $0x90] sm:$0xf]
        %v371 = vld [vmem:[%s4 + $0x94] sm:$0xf]
        %v372 = vld [vmem:[%s4 + $0x98] sm:$0xf]
        %v373 = vld [vmem:[%s4 + $0x9c] sm:$0xf]
        %v374 = vld [vmem:[%s4 + $0xa0] sm:$0xf]
        %v375 = vld [vmem:[%s4 + $0xa4] sm:$0xf]
        %v376 = vld [vmem:[%s4 + $0xa8] sm:$0xf]
        %v377 = vld [vmem:[%s4 + $0xac] sm:$0xf]
        %v378 = vld [vmem:[%s4 + $0xb0] sm:$0xf]
        %v379 = vld [vmem:[%s4 + $0xb4] sm:$0xf]
        %v380 = vld [vmem:[%s4 + $0xb8] sm:$0xf]
        %v381 = vld [vmem:[%s4 + $0xbc] sm:$0xf]
        %v382 = vld [vmem:[%s4 + $0xc0] sm:$0xf]
        %v383 = vld [vmem:[%s4 + $0xc4] sm:$0xf]
        %v384 = vld [vmem:[%s4 + $0xc8] sm:$0xf]
        %v385 = vld [vmem:[%s4 + $0xcc] sm:$0xf]
        %v386 = vld [vmem:[%s4 + $0xd0] sm:$0xf]
        %v387 = vld [vmem:[%s4 + $0xd4] sm:$0xf]
        %v388 = vld [vmem:[%s4 + $0xd8] sm:$0xf]
        %v389 = vld [vmem:[%s4 + $0xdc] sm:$0xf]
        %v390 = vld [vmem:[%s4 + $0xe0] sm:$0xf]
        %v391 = vld [vmem:[%s4 + $0xe4] sm:$0xf]
        %v392 = vld [vmem:[%s4 + $0xe8] sm:$0xf]
        %v393 = vld [vmem:[%s4 + $0xec] sm:$0xf]
        %v394 = vld [vmem:[%s4 + $0xf0] sm:$0xf]
        %v395 = vld [vmem:[%s4 + $0xf4] sm:$0xf]
        %v396 = vld [vmem:[%s4 + $0xf8] sm:$0xf]
        %v397 = vld [vmem:[%s4 + $0xfc] sm:$0xf]
        %v398 = vld [vmem:[%s4 + $0x100] sm:$0xf]
        %v399 = vld [vmem:[%s4 + $0x104] sm:$0xf]
        %v400 = vld [vmem:[%s4 + $0x108] sm:$0xf]
        %v401 = vld [vmem:[%s4 + $0x10c] sm:$0xf]
        %v402 = vld [vmem:[%s4 + $0x110] sm:$0xf]
        %v403 = vld [vmem:[%s4 + $0x114] sm:$0xf]
        %v404 = vld [vmem:[%s4 + $0x118] sm:$0xf]
        %v405 = vld [vmem:[%s4 + $0x11c] sm:$0xf]
        %v406 = vld [vmem:[%s4 + $0x120] sm:$0xf]
        %v407 = vld [vmem:[%s4 + $0x124] sm:$0xf]
        %v408 = vld [vmem:[%s4 + $0x128] sm:$0xf]
        %v409 = vld [vmem:[%s4 + $0x12c] sm:$0xf]
        %v410 = vld [vmem:[%s4 + $0x130] sm:$0xf]
        %v411 = vld [vmem:[%s4 + $0x134] sm:$0xf]
        %v412 = vld [vmem:[%s4 + $0x138] sm:$0xf]
        %v413 = vld [vmem:[%s4 + $0x13c] sm:$0xf]
        %v414 = vld [vmem:[%s4 + $0x140] sm:$0xf]
        %v415 = vld [vmem:[%s4 + $0x144] sm:$0xf]
        %v416 = vld [vmem:[%s4 + $0x148] sm:$0xf]
        %v417 = vld [vmem:[%s4 + $0x14c] sm:$0xf]
        %v418 = vld [vmem:[%s4 + $0x150] sm:$0xf]
        %v419 = vld [vmem:[%s4 + $0x154] sm:$0xf]
        %v420 = vld [vmem:[%s4 + $0x158] sm:$0xf]
        %v421 = vld [vmem:[%s4 + $0x15c] sm:$0xf]
        %v422 = vld [vmem:[%s4 + $0x160] sm:$0xf]
        %v423 = vld [vmem:[%s4 + $0x164] sm:$0xf]
        %v424 = vld [vmem:[%s4 + $0x168] sm:$0xf]
        %v425 = vld [vmem:[%s4 + $0x16c] sm:$0xf]
        %v426 = vld [vmem:[%s4 + $0x170] sm:$0xf]
        %v427 = vld [vmem:[%s4 + $0x174] sm:$0xf]
        %v428 = vld [vmem:[%s4 + $0x178] sm:$0xf]
        %v429 = vld [vmem:[%s4 + $0x17c] sm:$0xf]
        %v430 = vld [vmem:[%s5] sm:$0x3]
        %v431 = vld [vmem:[%s5 + $0x2] sm:$0x3]
        %v432 = vld [vmem:[%s5 + $0x4] sm:$0x3]
        %v433 = vld [vmem:[%s5 + $0x6] sm:$0x3]
        %v434 = vld [vmem:[%s5 + $0x8] sm:$0x3]
        %v435 = vld [vmem:[%s5 + $0xa] sm:$0x3]
        %v436 = vld [vmem:[%s5 + $0xc] sm:$0x3]
        %v437 = vld [vmem:[%s5 + $0xe] sm:$0x3]
        %v438 = vld [vmem:[%s6] sm:$0xff]
        %v439 = vld [vmem:[%s6 + $0x8] sm:$0xff]
        %v440 = vld [vmem:[%s6 + $0x10] sm:$0xff]
        %v441 = vld [vmem:[%s7] sm:$0x7]
        %v442 = vpack.c.bf16 %v333, %v333
        %v444 = vrot.slane %v438, 1
        %v445 = vrot.slane %v438, 2
        %v446 = vrot.slane %v438, 3
        %v447 = vrot.slane %v438, 4
        %v448 = vrot.slane %v438, 5
        %v449 = vrot.slane %v438, 6
        %v450 = vrot.slane %v438, 7
        %v451 = vperm.slane %v438, 0
        %v452 = vperm.slane %v444, 0
        %v453 = vperm.slane %v445, 0
        %v454 = vperm.slane %v446, 0
        %v455 = vperm.slane %v447, 0
        %v456 = vperm.slane %v448, 0
        %v457 = vperm.slane %v449, 0
        %v458 = vperm.slane %v450, 0
        %v471 = vunpack.c.l.b16 %v334
        %v472 = vunpack.c.l.b16 %v335
        %v473 = vunpack.c.l.b16 %v336
        %v474 = vunpack.c.l.b16 %v337
        %v475 = vpack.c.b16 %v472, %v471
        %v476 = vpack.c.b16 %v474, %v473
        %vm479 = vcmask 261120
        %v481 = vsel %vm479, %v442, 0
        %483 = vmatpush.bf16.msra.mxu0 0
        %484 = vmatpush.bf16.msra.mxu0 0
        %485 = vmatpush.bf16.msra.mxu0 0
        %486 = vmatpush.bf16.msra.mxu0 0
        %487 = vmatpush.bf16.msra.mxu0 0
        %488 = vmatpush.bf16.msra.mxu0 0
        %489 = vmatpush.bf16.msra.mxu0 %v476
        %490 = vmatpush.bf16.msra.mxu0 %v475
        %491 = vmatmul.bf16.gmra.mxu0 %v481
        %v492 = vpop.f32.mrf.mxu0
        %v493 = vadd.f32 %v451, %v492
        %v494 = vpop.f32.mrf.mxu0
        %495 = vdwg.mxu0
        %v500 = vunpack.c.l.b16 %v338
        %v501 = vunpack.c.l.b16 %v339
        %v502 = vunpack.c.l.b16 %v340
        %v503 = vunpack.c.l.b16 %v341
        %v504 = vpack.c.b16 %v501, %v500
        %v505 = vpack.c.b16 %v503, %v502
        %508 = vmatpush.bf16.msra.mxu0 0
        %509 = vmatpush.bf16.msra.mxu0 0
        %510 = vmatpush.bf16.msra.mxu0 0
        %511 = vmatpush.bf16.msra.mxu0 0
        %512 = vmatpush.bf16.msra.mxu0 0
        %513 = vmatpush.bf16.msra.mxu0 0
        %514 = vmatpush.bf16.msra.mxu0 %v505
        %515 = vmatpush.bf16.msra.mxu0 %v504
        %516 = vmatmul.bf16.gmra.mxu0 %v481
        %v517 = vpop.f32.mrf.mxu0
        %v518 = vadd.f32 %v452, %v517
        %v519 = vpop.f32.mrf.mxu0
        %520 = vdwg.mxu0
        %v525 = vunpack.c.l.b16 %v342
        %v526 = vunpack.c.l.b16 %v343
        %v527 = vunpack.c.l.b16 %v344
        %v528 = vunpack.c.l.b16 %v345
        %v529 = vpack.c.b16 %v526, %v525
        %v530 = vpack.c.b16 %v528, %v527
        %533 = vmatpush.bf16.msra.mxu0 0
        %534 = vmatpush.bf16.msra.mxu0 0
        %535 = vmatpush.bf16.msra.mxu0 0
        %536 = vmatpush.bf16.msra.mxu0 0
        %537 = vmatpush.bf16.msra.mxu0 0
        %538 = vmatpush.bf16.msra.mxu0 0
        %539 = vmatpush.bf16.msra.mxu0 %v530
        %540 = vmatpush.bf16.msra.mxu0 %v529
        %541 = vmatmul.bf16.gmra.mxu0 %v481
        %v542 = vpop.f32.mrf.mxu0
        %v543 = vadd.f32 %v453, %v542
        %v544 = vpop.f32.mrf.mxu0
        %545 = vdwg.mxu0
        %v550 = vunpack.c.l.b16 %v346
        %v551 = vunpack.c.l.b16 %v347
        %v552 = vunpack.c.l.b16 %v348
        %v553 = vunpack.c.l.b16 %v349
        %v554 = vpack.c.b16 %v551, %v550
        %v555 = vpack.c.b16 %v553, %v552
        %558 = vmatpush.bf16.msra.mxu0 0
        %559 = vmatpush.bf16.msra.mxu0 0
        %560 = vmatpush.bf16.msra.mxu0 0
        %561 = vmatpush.bf16.msra.mxu0 0
        %562 = vmatpush.bf16.msra.mxu0 0
        %563 = vmatpush.bf16.msra.mxu0 0
        %564 = vmatpush.bf16.msra.mxu0 %v555
        %565 = vmatpush.bf16.msra.mxu0 %v554
        %566 = vmatmul.bf16.gmra.mxu0 %v481
        %v567 = vpop.f32.mrf.mxu0
        %v568 = vadd.f32 %v454, %v567
        %v569 = vpop.f32.mrf.mxu0
        %570 = vdwg.mxu0
        %v575 = vunpack.c.l.b16 %v350
        %v576 = vunpack.c.l.b16 %v351
        %v577 = vunpack.c.l.b16 %v352
        %v578 = vunpack.c.l.b16 %v353
        %v579 = vpack.c.b16 %v576, %v575
        %v580 = vpack.c.b16 %v578, %v577
        %583 = vmatpush.bf16.msra.mxu0 0
        %584 = vmatpush.bf16.msra.mxu0 0
        %585 = vmatpush.bf16.msra.mxu0 0
        %586 = vmatpush.bf16.msra.mxu0 0
        %587 = vmatpush.bf16.msra.mxu0 0
        %588 = vmatpush.bf16.msra.mxu0 0
        %589 = vmatpush.bf16.msra.mxu0 %v580
        %590 = vmatpush.bf16.msra.mxu0 %v579
        %591 = vmatmul.bf16.gmra.mxu0 %v481
        %v592 = vpop.f32.mrf.mxu0
        %v593 = vadd.f32 %v455, %v592
        %v594 = vpop.f32.mrf.mxu0
        %595 = vdwg.mxu0
        %v600 = vunpack.c.l.b16 %v354
        %v601 = vunpack.c.l.b16 %v355
        %v602 = vunpack.c.l.b16 %v356
        %v603 = vunpack.c.l.b16 %v357
        %v604 = vpack.c.b16 %v601, %v600
        %v605 = vpack.c.b16 %v603, %v602
        %608 = vmatpush.bf16.msra.mxu0 0
        %609 = vmatpush.bf16.msra.mxu0 0
        %610 = vmatpush.bf16.msra.mxu0 0
        %611 = vmatpush.bf16.msra.mxu0 0
        %612 = vmatpush.bf16.msra.mxu0 0
        %613 = vmatpush.bf16.msra.mxu0 0
        %614 = vmatpush.bf16.msra.mxu0 %v605
        %615 = vmatpush.bf16.msra.mxu0 %v604
        %616 = vmatmul.bf16.gmra.mxu0 %v481
        %v617 = vpop.f32.mrf.mxu0
        %v618 = vadd.f32 %v456, %v617
        %v619 = vpop.f32.mrf.mxu0
        %620 = vdwg.mxu0
        %v625 = vunpack.c.l.b16 %v358
        %v626 = vunpack.c.l.b16 %v359
        %v627 = vunpack.c.l.b16 %v360
        %v628 = vunpack.c.l.b16 %v361
        %v629 = vpack.c.b16 %v626, %v625
        %v630 = vpack.c.b16 %v628, %v627
        %633 = vmatpush.bf16.msra.mxu0 0
        %634 = vmatpush.bf16.msra.mxu0 0
        %635 = vmatpush.bf16.msra.mxu0 0
        %636 = vmatpush.bf16.msra.mxu0 0
        %637 = vmatpush.bf16.msra.mxu0 0
        %638 = vmatpush.bf16.msra.mxu0 0
        %639 = vmatpush.bf16.msra.mxu0 %v630
        %640 = vmatpush.bf16.msra.mxu0 %v629
        %641 = vmatmul.bf16.gmra.mxu0 %v481
        %v642 = vpop.f32.mrf.mxu0
        %v643 = vadd.f32 %v457, %v642
        %v644 = vpop.f32.mrf.mxu0
        %645 = vdwg.mxu0
        %v650 = vunpack.c.l.b16 %v362
        %v651 = vunpack.c.l.b16 %v363
        %v652 = vunpack.c.l.b16 %v364
        %v653 = vunpack.c.l.b16 %v365
        %v654 = vpack.c.b16 %v651, %v650
        %v655 = vpack.c.b16 %v653, %v652
        %658 = vmatpush.bf16.msra.mxu0 0
        %659 = vmatpush.bf16.msra.mxu0 0
        %660 = vmatpush.bf16.msra.mxu0 0
        %661 = vmatpush.bf16.msra.mxu0 0
        %662 = vmatpush.bf16.msra.mxu0 0
        %663 = vmatpush.bf16.msra.mxu0 0
        %664 = vmatpush.bf16.msra.mxu0 %v655
        %665 = vmatpush.bf16.msra.mxu0 %v654
        %666 = vmatmul.bf16.gmra.mxu0 %v481
        %v667 = vpop.f32.mrf.mxu0
        %v668 = vadd.f32 %v458, %v667
        %v669 = vpop.f32.mrf.mxu0
        %670 = vdwg.mxu0
        %v671 = vpack.c.bf16 %v493, %v493
        %v672 = vpack.c.bf16 %v518, %v518
        %v673 = vpack.c.bf16 %v543, %v543
        %v674 = vpack.c.bf16 %v568, %v568
        %v675 = vpack.c.bf16 %v593, %v593
        %v676 = vpack.c.bf16 %v618, %v618
        %v677 = vpack.c.bf16 %v643, %v643
        %v678 = vpack.c.bf16 %v668, %v668
        %v680 = vrot.slane %v439, 1
        %v681 = vrot.slane %v439, 2
        %v682 = vrot.slane %v439, 3
        %v683 = vrot.slane %v439, 4
        %v684 = vrot.slane %v439, 5
        %v685 = vrot.slane %v439, 6
        %v686 = vrot.slane %v439, 7
        %v687 = vperm.slane %v439, 0
        %v688 = vperm.slane %v680, 0
        %v689 = vperm.slane %v681, 0
        %v690 = vperm.slane %v682, 0
        %v691 = vperm.slane %v683, 0
        %v692 = vperm.slane %v684, 0
        %v693 = vperm.slane %v685, 0
        %v694 = vperm.slane %v686, 0
        %v707 = vunpack.c.l.b16 %v366
        %v708 = vunpack.c.l.b16 %v367
        %v709 = vunpack.c.l.b16 %v368
        %v710 = vunpack.c.l.b16 %v369
        %v711 = vpack.c.b16 %v708, %v707
        %v712 = vpack.c.b16 %v710, %v709
        %v716 = vsel %vm479, %v332, 0
        %718 = vmatpush.bf16.msra.mxu0 0
        %719 = vmatpush.bf16.msra.mxu0 0
        %720 = vmatpush.bf16.msra.mxu0 0
        %721 = vmatpush.bf16.msra.mxu0 0
        %722 = vmatpush.bf16.msra.mxu0 0
        %723 = vmatpush.bf16.msra.mxu0 0
        %724 = vmatpush.bf16.msra.mxu0 %v712
        %725 = vmatpush.bf16.msra.mxu0 %v711
        %726 = vmatmul.bf16.gmra.mxu0 %v716
        %v727 = vpop.f32.mrf.mxu0
        %v728 = vadd.f32 %v687, %v727
        %v729 = vpop.f32.mrf.mxu0
        %730 = vdwg.mxu0
        %v735 = vunpack.c.l.b16 %v370
        %v736 = vunpack.c.l.b16 %v371
        %v737 = vunpack.c.l.b16 %v372
        %v738 = vunpack.c.l.b16 %v373
        %v739 = vpack.c.b16 %v736, %v735
        %v740 = vpack.c.b16 %v738, %v737
        %743 = vmatpush.bf16.msra.mxu0 0
        %744 = vmatpush.bf16.msra.mxu0 0
        %745 = vmatpush.bf16.msra.mxu0 0
        %746 = vmatpush.bf16.msra.mxu0 0
        %747 = vmatpush.bf16.msra.mxu0 0
        %748 = vmatpush.bf16.msra.mxu0 0
        %749 = vmatpush.bf16.msra.mxu0 %v740
        %750 = vmatpush.bf16.msra.mxu0 %v739
        %751 = vmatmul.bf16.gmra.mxu0 %v716
        %v752 = vpop.f32.mrf.mxu0
        %v753 = vadd.f32 %v688, %v752
        %v754 = vpop.f32.mrf.mxu0
        %755 = vdwg.mxu0
        %v760 = vunpack.c.l.b16 %v374
        %v761 = vunpack.c.l.b16 %v375
        %v762 = vunpack.c.l.b16 %v376
        %v763 = vunpack.c.l.b16 %v377
        %v764 = vpack.c.b16 %v761, %v760
        %v765 = vpack.c.b16 %v763, %v762
        %768 = vmatpush.bf16.msra.mxu0 0
        %769 = vmatpush.bf16.msra.mxu0 0
        %770 = vmatpush.bf16.msra.mxu0 0
        %771 = vmatpush.bf16.msra.mxu0 0
        %772 = vmatpush.bf16.msra.mxu0 0
        %773 = vmatpush.bf16.msra.mxu0 0
        %774 = vmatpush.bf16.msra.mxu0 %v765
        %775 = vmatpush.bf16.msra.mxu0 %v764
        %776 = vmatmul.bf16.gmra.mxu0 %v716
        %v777 = vpop.f32.mrf.mxu0
        %v778 = vadd.f32 %v689, %v777
        %v779 = vpop.f32.mrf.mxu0
        %780 = vdwg.mxu0
        %v785 = vunpack.c.l.b16 %v378
        %v786 = vunpack.c.l.b16 %v379
        %v787 = vunpack.c.l.b16 %v380
        %v788 = vunpack.c.l.b16 %v381
        %v789 = vpack.c.b16 %v786, %v785
        %v790 = vpack.c.b16 %v788, %v787
        %793 = vmatpush.bf16.msra.mxu0 0
        %794 = vmatpush.bf16.msra.mxu0 0
        %795 = vmatpush.bf16.msra.mxu0 0
        %796 = vmatpush.bf16.msra.mxu0 0
        %797 = vmatpush.bf16.msra.mxu0 0
        %798 = vmatpush.bf16.msra.mxu0 0
        %799 = vmatpush.bf16.msra.mxu0 %v790
        %800 = vmatpush.bf16.msra.mxu0 %v789
        %801 = vmatmul.bf16.gmra.mxu0 %v716
        %v802 = vpop.f32.mrf.mxu0
        %v803 = vadd.f32 %v690, %v802
        %v804 = vpop.f32.mrf.mxu0
        %805 = vdwg.mxu0
        %v810 = vunpack.c.l.b16 %v382
        %v811 = vunpack.c.l.b16 %v383
        %v812 = vunpack.c.l.b16 %v384
        %v813 = vunpack.c.l.b16 %v385
        %v814 = vpack.c.b16 %v811, %v810
        %v815 = vpack.c.b16 %v813, %v812
        %818 = vmatpush.bf16.msra.mxu0 0
        %819 = vmatpush.bf16.msra.mxu0 0
        %820 = vmatpush.bf16.msra.mxu0 0
        %821 = vmatpush.bf16.msra.mxu0 0
        %822 = vmatpush.bf16.msra.mxu0 0
        %823 = vmatpush.bf16.msra.mxu0 0
        %824 = vmatpush.bf16.msra.mxu0 %v815
        %825 = vmatpush.bf16.msra.mxu0 %v814
        %826 = vmatmul.bf16.gmra.mxu0 %v716
        %v827 = vpop.f32.mrf.mxu0
        %v828 = vadd.f32 %v691, %v827
        %v829 = vpop.f32.mrf.mxu0
        %830 = vdwg.mxu0
        %v835 = vunpack.c.l.b16 %v386
        %v836 = vunpack.c.l.b16 %v387
        %v837 = vunpack.c.l.b16 %v388
        %v838 = vunpack.c.l.b16 %v389
        %v839 = vpack.c.b16 %v836, %v835
        %v840 = vpack.c.b16 %v838, %v837
        %843 = vmatpush.bf16.msra.mxu0 0
        %844 = vmatpush.bf16.msra.mxu0 0
        %845 = vmatpush.bf16.msra.mxu0 0
        %846 = vmatpush.bf16.msra.mxu0 0
        %847 = vmatpush.bf16.msra.mxu0 0
        %848 = vmatpush.bf16.msra.mxu0 0
        %849 = vmatpush.bf16.msra.mxu0 %v840
        %850 = vmatpush.bf16.msra.mxu0 %v839
        %851 = vmatmul.bf16.gmra.mxu0 %v716
        %v852 = vpop.f32.mrf.mxu0
        %v853 = vadd.f32 %v692, %v852
        %v854 = vpop.f32.mrf.mxu0
        %855 = vdwg.mxu0
        %v860 = vunpack.c.l.b16 %v390
        %v861 = vunpack.c.l.b16 %v391
        %v862 = vunpack.c.l.b16 %v392
        %v863 = vunpack.c.l.b16 %v393
        %v864 = vpack.c.b16 %v861, %v860
        %v865 = vpack.c.b16 %v863, %v862
        %868 = vmatpush.bf16.msra.mxu0 0
        %869 = vmatpush.bf16.msra.mxu0 0
        %870 = vmatpush.bf16.msra.mxu0 0
        %871 = vmatpush.bf16.msra.mxu0 0
        %872 = vmatpush.bf16.msra.mxu0 0
        %873 = vmatpush.bf16.msra.mxu0 0
        %874 = vmatpush.bf16.msra.mxu0 %v865
        %875 = vmatpush.bf16.msra.mxu0 %v864
        %876 = vmatmul.bf16.gmra.mxu0 %v716
        %v877 = vpop.f32.mrf.mxu0
        %v878 = vadd.f32 %v693, %v877
        %v879 = vpop.f32.mrf.mxu0
        %880 = vdwg.mxu0
        %v885 = vunpack.c.l.b16 %v394
        %v886 = vunpack.c.l.b16 %v395
        %v887 = vunpack.c.l.b16 %v396
        %v888 = vunpack.c.l.b16 %v397
        %v889 = vpack.c.b16 %v886, %v885
        %v890 = vpack.c.b16 %v888, %v887
        %893 = vmatpush.bf16.msra.mxu0 0
        %894 = vmatpush.bf16.msra.mxu0 0
        %895 = vmatpush.bf16.msra.mxu0 0
        %896 = vmatpush.bf16.msra.mxu0 0
        %897 = vmatpush.bf16.msra.mxu0 0
        %898 = vmatpush.bf16.msra.mxu0 0
        %899 = vmatpush.bf16.msra.mxu0 %v890
        %900 = vmatpush.bf16.msra.mxu0 %v889
        %901 = vmatmul.bf16.gmra.mxu0 %v716
        %v902 = vpop.f32.mrf.mxu0
        %v903 = vadd.f32 %v694, %v902
        %v904 = vpop.f32.mrf.mxu0
        %905 = vdwg.mxu0
        %v906 = vpack.c.bf16 %v728, %v728
        %v907 = vpack.c.bf16 %v753, %v753
        %v908 = vpack.c.bf16 %v778, %v778
        %v909 = vpack.c.bf16 %v803, %v803
        %v910 = vpack.c.bf16 %v828, %v828
        %v911 = vpack.c.bf16 %v853, %v853
        %v912 = vpack.c.bf16 %v878, %v878
        %v913 = vpack.c.bf16 %v903, %v903
        %v915 = vrot.slane %v440, 1
        %v916 = vrot.slane %v440, 2
        %v917 = vrot.slane %v440, 3
        %v918 = vrot.slane %v440, 4
        %v919 = vrot.slane %v440, 5
        %v920 = vrot.slane %v440, 6
        %v921 = vrot.slane %v440, 7
        %v922 = vperm.slane %v440, 0
        %v923 = vperm.slane %v915, 0
        %v924 = vperm.slane %v916, 0
        %v925 = vperm.slane %v917, 0
        %v926 = vperm.slane %v918, 0
        %v927 = vperm.slane %v919, 0
        %v928 = vperm.slane %v920, 0
        %v929 = vperm.slane %v921, 0
        %v942 = vunpack.c.l.b16 %v398
        %v943 = vunpack.c.l.b16 %v399
        %v944 = vunpack.c.l.b16 %v400
        %v945 = vunpack.c.l.b16 %v401
        %v946 = vpack.c.b16 %v943, %v942
        %v947 = vpack.c.b16 %v945, %v944
        %950 = vmatpush.bf16.msra.mxu0 0
        %951 = vmatpush.bf16.msra.mxu0 0
        %952 = vmatpush.bf16.msra.mxu0 0
        %953 = vmatpush.bf16.msra.mxu0 0
        %954 = vmatpush.bf16.msra.mxu0 0
        %955 = vmatpush.bf16.msra.mxu0 0
        %956 = vmatpush.bf16.msra.mxu0 %v947
        %957 = vmatpush.bf16.msra.mxu0 %v946
        %958 = vmatmul.bf16.gmra.mxu0 %v716
        %v959 = vpop.f32.mrf.mxu0
        %v960 = vadd.f32 %v922, %v959
        %v961 = vpop.f32.mrf.mxu0
        %962 = vdwg.mxu0
        %v967 = vunpack.c.l.b16 %v402
        %v968 = vunpack.c.l.b16 %v403
        %v969 = vunpack.c.l.b16 %v404
        %v970 = vunpack.c.l.b16 %v405
        %v971 = vpack.c.b16 %v968, %v967
        %v972 = vpack.c.b16 %v970, %v969
        %975 = vmatpush.bf16.msra.mxu0 0
        %976 = vmatpush.bf16.msra.mxu0 0
        %977 = vmatpush.bf16.msra.mxu0 0
        %978 = vmatpush.bf16.msra.mxu0 0
        %979 = vmatpush.bf16.msra.mxu0 0
        %980 = vmatpush.bf16.msra.mxu0 0
        %981 = vmatpush.bf16.msra.mxu0 %v972
        %982 = vmatpush.bf16.msra.mxu0 %v971
        %983 = vmatmul.bf16.gmra.mxu0 %v716
        %v984 = vpop.f32.mrf.mxu0
        %v985 = vadd.f32 %v923, %v984
        %v986 = vpop.f32.mrf.mxu0
        %987 = vdwg.mxu0
        %v992 = vunpack.c.l.b16 %v406
        %v993 = vunpack.c.l.b16 %v407
        %v994 = vunpack.c.l.b16 %v408
        %v995 = vunpack.c.l.b16 %v409
        %v996 = vpack.c.b16 %v993, %v992
        %v997 = vpack.c.b16 %v995, %v994
        %1000 = vmatpush.bf16.msra.mxu0 0
        %1001 = vmatpush.bf16.msra.mxu0 0
        %1002 = vmatpush.bf16.msra.mxu0 0
        %1003 = vmatpush.bf16.msra.mxu0 0
        %1004 = vmatpush.bf16.msra.mxu0 0
        %1005 = vmatpush.bf16.msra.mxu0 0
        %1006 = vmatpush.bf16.msra.mxu0 %v997
        %1007 = vmatpush.bf16.msra.mxu0 %v996
        %1008 = vmatmul.bf16.gmra.mxu0 %v716
        %v1009 = vpop.f32.mrf.mxu0
        %v1010 = vadd.f32 %v924, %v1009
        %v1011 = vpop.f32.mrf.mxu0
        %1012 = vdwg.mxu0
        %v1017 = vunpack.c.l.b16 %v410
        %v1018 = vunpack.c.l.b16 %v411
        %v1019 = vunpack.c.l.b16 %v412
        %v1020 = vunpack.c.l.b16 %v413
        %v1021 = vpack.c.b16 %v1018, %v1017
        %v1022 = vpack.c.b16 %v1020, %v1019
        %1025 = vmatpush.bf16.msra.mxu0 0
        %1026 = vmatpush.bf16.msra.mxu0 0
        %1027 = vmatpush.bf16.msra.mxu0 0
        %1028 = vmatpush.bf16.msra.mxu0 0
        %1029 = vmatpush.bf16.msra.mxu0 0
        %1030 = vmatpush.bf16.msra.mxu0 0
        %1031 = vmatpush.bf16.msra.mxu0 %v1022
        %1032 = vmatpush.bf16.msra.mxu0 %v1021
        %1033 = vmatmul.bf16.gmra.mxu0 %v716
        %v1034 = vpop.f32.mrf.mxu0
        %v1035 = vadd.f32 %v925, %v1034
        %v1036 = vpop.f32.mrf.mxu0
        %1037 = vdwg.mxu0
        %v1042 = vunpack.c.l.b16 %v414
        %v1043 = vunpack.c.l.b16 %v415
        %v1044 = vunpack.c.l.b16 %v416
        %v1045 = vunpack.c.l.b16 %v417
        %v1046 = vpack.c.b16 %v1043, %v1042
        %v1047 = vpack.c.b16 %v1045, %v1044
        %1050 = vmatpush.bf16.msra.mxu0 0
        %1051 = vmatpush.bf16.msra.mxu0 0
        %1052 = vmatpush.bf16.msra.mxu0 0
        %1053 = vmatpush.bf16.msra.mxu0 0
        %1054 = vmatpush.bf16.msra.mxu0 0
        %1055 = vmatpush.bf16.msra.mxu0 0
        %1056 = vmatpush.bf16.msra.mxu0 %v1047
        %1057 = vmatpush.bf16.msra.mxu0 %v1046
        %1058 = vmatmul.bf16.gmra.mxu0 %v716
        %v1059 = vpop.f32.mrf.mxu0
        %v1060 = vadd.f32 %v926, %v1059
        %v1061 = vpop.f32.mrf.mxu0
        %1062 = vdwg.mxu0
        %v1067 = vunpack.c.l.b16 %v418
        %v1068 = vunpack.c.l.b16 %v419
        %v1069 = vunpack.c.l.b16 %v420
        %v1070 = vunpack.c.l.b16 %v421
        %v1071 = vpack.c.b16 %v1068, %v1067
        %v1072 = vpack.c.b16 %v1070, %v1069
        %1075 = vmatpush.bf16.msra.mxu0 0
        %1076 = vmatpush.bf16.msra.mxu0 0
        %1077 = vmatpush.bf16.msra.mxu0 0
        %1078 = vmatpush.bf16.msra.mxu0 0
        %1079 = vmatpush.bf16.msra.mxu0 0
        %1080 = vmatpush.bf16.msra.mxu0 0
        %1081 = vmatpush.bf16.msra.mxu0 %v1072
        %1082 = vmatpush.bf16.msra.mxu0 %v1071
        %1083 = vmatmul.bf16.gmra.mxu0 %v716
        %v1084 = vpop.f32.mrf.mxu0
        %v1085 = vadd.f32 %v927, %v1084
        %v1086 = vpop.f32.mrf.mxu0
        %1087 = vdwg.mxu0
        %v1092 = vunpack.c.l.b16 %v422
        %v1093 = vunpack.c.l.b16 %v423
        %v1094 = vunpack.c.l.b16 %v424
        %v1095 = vunpack.c.l.b16 %v425
        %v1096 = vpack.c.b16 %v1093, %v1092
        %v1097 = vpack.c.b16 %v1095, %v1094
        %1100 = vmatpush.bf16.msra.mxu0 0
        %1101 = vmatpush.bf16.msra.mxu0 0
        %1102 = vmatpush.bf16.msra.mxu0 0
        %1103 = vmatpush.bf16.msra.mxu0 0
        %1104 = vmatpush.bf16.msra.mxu0 0
        %1105 = vmatpush.bf16.msra.mxu0 0
        %1106 = vmatpush.bf16.msra.mxu0 %v1097
        %1107 = vmatpush.bf16.msra.mxu0 %v1096
        %1108 = vmatmul.bf16.gmra.mxu0 %v716
        %v1109 = vpop.f32.mrf.mxu0
        %v1110 = vadd.f32 %v928, %v1109
        %v1111 = vpop.f32.mrf.mxu0
        %1112 = vdwg.mxu0
        %v1117 = vunpack.c.l.b16 %v426
        %v1118 = vunpack.c.l.b16 %v427
        %v1119 = vunpack.c.l.b16 %v428
        %v1120 = vunpack.c.l.b16 %v429
        %v1121 = vpack.c.b16 %v1118, %v1117
        %v1122 = vpack.c.b16 %v1120, %v1119
        %1125 = vmatpush.bf16.msra.mxu0 0
        %1126 = vmatpush.bf16.msra.mxu0 0
        %1127 = vmatpush.bf16.msra.mxu0 0
        %1128 = vmatpush.bf16.msra.mxu0 0
        %1129 = vmatpush.bf16.msra.mxu0 0
        %1130 = vmatpush.bf16.msra.mxu0 0
        %1131 = vmatpush.bf16.msra.mxu0 %v1122
        %1132 = vmatpush.bf16.msra.mxu0 %v1121
        %1133 = vmatmul.bf16.gmra.mxu0 %v716
        %v1134 = vpop.f32.mrf.mxu0
        %v1135 = vadd.f32 %v929, %v1134
        %v1136 = vpop.f32.mrf.mxu0
        %1137 = vdwg.mxu0
        %v1138 = vpack.c.bf16 %v960, %v960
        %v1139 = vpack.c.bf16 %v985, %v985
        %v1140 = vpack.c.bf16 %v1010, %v1010
        %v1141 = vpack.c.bf16 %v1035, %v1035
        %v1142 = vpack.c.bf16 %v1060, %v1060
        %v1143 = vpack.c.bf16 %v1085, %v1085
        %v1144 = vpack.c.bf16 %v1110, %v1110
        %v1145 = vpack.c.bf16 %v1135, %v1135
        %vm1146 = vcmask 31744
        %v1148 = vsel %vm1146, %v671, 0
        %v1151 = vsel %vm1146, %v906, 0
        %1153 = vmatpush.bf16.xpose.msra.mxu0 0
        %1154 = vmatpush.bf16.xpose.msra.mxu0 0
        %1155 = vmatpush.bf16.xpose.msra.mxu0 0
        %1156 = vmatpush.bf16.xpose.msra.mxu0 0
        %1157 = vmatpush.bf16.xpose.msra.mxu0 0
        %1158 = vmatpush.bf16.xpose.msra.mxu0 0
        %1159 = vmatpush.bf16.xpose.msra.mxu0 0
        %1160 = vmatpush.bf16.xpose.msra.mxu0 %v1151
        %1161 = vmatmul.bf16.gmra.mxu0 %v1148
        %v1162 = vpop.f32.mrf.mxu0
        %v1163 = vadd.f32 0.0, %v1162
        %v1164 = vpop.f32.mrf.mxu0
        %1165 = vdwg.mxu0
        %v1167 = vsel %vm1146, %v672, 0
        %v1170 = vsel %vm1146, %v907, 0
        %1172 = vmatpush.bf16.xpose.msra.mxu0 0
        %1173 = vmatpush.bf16.xpose.msra.mxu0 0
        %1174 = vmatpush.bf16.xpose.msra.mxu0 0
        %1175 = vmatpush.bf16.xpose.msra.mxu0 0
        %1176 = vmatpush.bf16.xpose.msra.mxu0 0
        %1177 = vmatpush.bf16.xpose.msra.mxu0 0
        %1178 = vmatpush.bf16.xpose.msra.mxu0 0
        %1179 = vmatpush.bf16.xpose.msra.mxu0 %v1170
        %1180 = vmatmul.bf16.gmra.mxu0 %v1167
        %v1181 = vpop.f32.mrf.mxu0
        %v1182 = vadd.f32 0.0, %v1181
        %v1183 = vpop.f32.mrf.mxu0
        %1184 = vdwg.mxu0
        %v1186 = vsel %vm1146, %v673, 0
        %v1189 = vsel %vm1146, %v908, 0
        %1191 = vmatpush.bf16.xpose.msra.mxu0 0
        %1192 = vmatpush.bf16.xpose.msra.mxu0 0
        %1193 = vmatpush.bf16.xpose.msra.mxu0 0
        %1194 = vmatpush.bf16.xpose.msra.mxu0 0
        %1195 = vmatpush.bf16.xpose.msra.mxu0 0
        %1196 = vmatpush.bf16.xpose.msra.mxu0 0
        %1197 = vmatpush.bf16.xpose.msra.mxu0 0
        %1198 = vmatpush.bf16.xpose.msra.mxu0 %v1189
        %1199 = vmatmul.bf16.gmra.mxu0 %v1186
        %v1200 = vpop.f32.mrf.mxu0
        %v1201 = vadd.f32 0.0, %v1200
        %v1202 = vpop.f32.mrf.mxu0
        %1203 = vdwg.mxu0
        %v1205 = vsel %vm1146, %v674, 0
        %v1208 = vsel %vm1146, %v909, 0
        %1210 = vmatpush.bf16.xpose.msra.mxu0 0
        %1211 = vmatpush.bf16.xpose.msra.mxu0 0
        %1212 = vmatpush.bf16.xpose.msra.mxu0 0
        %1213 = vmatpush.bf16.xpose.msra.mxu0 0
        %1214 = vmatpush.bf16.xpose.msra.mxu0 0
        %1215 = vmatpush.bf16.xpose.msra.mxu0 0
        %1216 = vmatpush.bf16.xpose.msra.mxu0 0
        %1217 = vmatpush.bf16.xpose.msra.mxu0 %v1208
        %1218 = vmatmul.bf16.gmra.mxu0 %v1205
        %v1219 = vpop.f32.mrf.mxu0
        %v1220 = vadd.f32 0.0, %v1219
        %v1221 = vpop.f32.mrf.mxu0
        %1222 = vdwg.mxu0
        %v1224 = vsel %vm1146, %v675, 0
        %v1227 = vsel %vm1146, %v910, 0
        %1229 = vmatpush.bf16.xpose.msra.mxu0 0
        %1230 = vmatpush.bf16.xpose.msra.mxu0 0
        %1231 = vmatpush.bf16.xpose.msra.mxu0 0
        %1232 = vmatpush.bf16.xpose.msra.mxu0 0
        %1233 = vmatpush.bf16.xpose.msra.mxu0 0
        %1234 = vmatpush.bf16.xpose.msra.mxu0 0
        %1235 = vmatpush.bf16.xpose.msra.mxu0 0
        %1236 = vmatpush.bf16.xpose.msra.mxu0 %v1227
        %1237 = vmatmul.bf16.gmra.mxu0 %v1224
        %v1238 = vpop.f32.mrf.mxu0
        %v1239 = vadd.f32 0.0, %v1238
        %v1240 = vpop.f32.mrf.mxu0
        %1241 = vdwg.mxu0
        %v1243 = vsel %vm1146, %v676, 0
        %v1246 = vsel %vm1146, %v911, 0
        %1248 = vmatpush.bf16.xpose.msra.mxu0 0
        %1249 = vmatpush.bf16.xpose.msra.mxu0 0
        %1250 = vmatpush.bf16.xpose.msra.mxu0 0
        %1251 = vmatpush.bf16.xpose.msra.mxu0 0
        %1252 = vmatpush.bf16.xpose.msra.mxu0 0
        %1253 = vmatpush.bf16.xpose.msra.mxu0 0
        %1254 = vmatpush.bf16.xpose.msra.mxu0 0
        %1255 = vmatpush.bf16.xpose.msra.mxu0 %v1246
        %1256 = vmatmul.bf16.gmra.mxu0 %v1243
        %v1257 = vpop.f32.mrf.mxu0
        %v1258 = vadd.f32 0.0, %v1257
        %v1259 = vpop.f32.mrf.mxu0
        %1260 = vdwg.mxu0
        %v1262 = vsel %vm1146, %v677, 0
        %v1265 = vsel %vm1146, %v912, 0
        %1267 = vmatpush.bf16.xpose.msra.mxu0 0
        %1268 = vmatpush.bf16.xpose.msra.mxu0 0
        %1269 = vmatpush.bf16.xpose.msra.mxu0 0
        %1270 = vmatpush.bf16.xpose.msra.mxu0 0
        %1271 = vmatpush.bf16.xpose.msra.mxu0 0
        %1272 = vmatpush.bf16.xpose.msra.mxu0 0
        %1273 = vmatpush.bf16.xpose.msra.mxu0 0
        %1274 = vmatpush.bf16.xpose.msra.mxu0 %v1265
        %1275 = vmatmul.bf16.gmra.mxu0 %v1262
        %v1276 = vpop.f32.mrf.mxu0
        %v1277 = vadd.f32 0.0, %v1276
        %v1278 = vpop.f32.mrf.mxu0
        %1279 = vdwg.mxu0
        %v1281 = vsel %vm1146, %v678, 0
        %v1284 = vsel %vm1146, %v913, 0
        %1286 = vmatpush.bf16.xpose.msra.mxu0 0
        %1287 = vmatpush.bf16.xpose.msra.mxu0 0
        %1288 = vmatpush.bf16.xpose.msra.mxu0 0
        %1289 = vmatpush.bf16.xpose.msra.mxu0 0
        %1290 = vmatpush.bf16.xpose.msra.mxu0 0
        %1291 = vmatpush.bf16.xpose.msra.mxu0 0
        %1292 = vmatpush.bf16.xpose.msra.mxu0 0
        %1293 = vmatpush.bf16.xpose.msra.mxu0 %v1284
        %1294 = vmatmul.bf16.gmra.mxu0 %v1281
        %v1295 = vpop.f32.mrf.mxu0
        %v1296 = vadd.f32 0.0, %v1295
        %v1297 = vpop.f32.mrf.mxu0
        %1298 = vdwg.mxu0
        %vm1299 = vcmask 64512
        %v1300 = vsel %vm1299, %v1163, -inf
        %1301 = vmax.xlane.f32.xlu0 %v1300
        %v1302 = vpop.xlane.xlu0 %1301
        %v1303 = vsel %vm1299, %v1182, -inf
        %1304 = vmax.xlane.f32.xlu0 %v1303
        %v1305 = vpop.xlane.xlu0 %1304
        %v1306 = vsel %vm1299, %v1201, -inf
        %1307 = vmax.xlane.f32.xlu0 %v1306
        %v1308 = vpop.xlane.xlu0 %1307
        %v1309 = vsel %vm1299, %v1220, -inf
        %1310 = vmax.xlane.f32.xlu0 %v1309
        %v1311 = vpop.xlane.xlu0 %1310
        %v1312 = vsel %vm1299, %v1239, -inf
        %1313 = vmax.xlane.f32.xlu0 %v1312
        %v1314 = vpop.xlane.xlu0 %1313
        %v1315 = vsel %vm1299, %v1258, -inf
        %1316 = vmax.xlane.f32.xlu0 %v1315
        %v1317 = vpop.xlane.xlu0 %1316
        %v1318 = vsel %vm1299, %v1277, -inf
        %1319 = vmax.xlane.f32.xlu0 %v1318
        %v1320 = vpop.xlane.xlu0 %1319
        %v1321 = vsel %vm1299, %v1296, -inf
        %1322 = vmax.xlane.f32.xlu0 %v1321
        %v1323 = vpop.xlane.xlu0 %1322
        %v1324 = vsub.f32 %v1163, %v1302
        %v1325 = vsub.f32 %v1182, %v1305
        %v1326 = vsub.f32 %v1201, %v1308
        %v1327 = vsub.f32 %v1220, %v1311
        %v1328 = vsub.f32 %v1239, %v1314
        %v1329 = vsub.f32 %v1258, %v1317
        %v1330 = vsub.f32 %v1277, %v1320
        %v1331 = vsub.f32 %v1296, %v1323
        %v1332 = vmul.f32 %v1324, 1.442695
        %v1333 = vpow.pop %v1332
        %v1334 = vmul.f32 %v1325, 1.442695
        %v1335 = vpow.pop %v1334
        %v1336 = vmul.f32 %v1326, 1.442695
        %v1337 = vpow.pop %v1336
        %v1338 = vmul.f32 %v1327, 1.442695
        %v1339 = vpow.pop %v1338
        %v1340 = vmul.f32 %v1328, 1.442695
        %v1341 = vpow.pop %v1340
        %v1342 = vmul.f32 %v1329, 1.442695
        %v1343 = vpow.pop %v1342
        %v1344 = vmul.f32 %v1330, 1.442695
        %v1345 = vpow.pop %v1344
        %v1346 = vmul.f32 %v1331, 1.442695
        %v1347 = vpow.pop %v1346
        %v1348 = vsel %vm1299, %v1333, 0.0
        %1349 = vadd.xlane.f32.xlu0 %v1348
        %v1350 = vpop.xlane.xlu0 %1349
        %v1351 = vsel %vm1299, %v1335, 0.0
        %1352 = vadd.xlane.f32.xlu0 %v1351
        %v1353 = vpop.xlane.xlu0 %1352
        %v1354 = vsel %vm1299, %v1337, 0.0
        %1355 = vadd.xlane.f32.xlu0 %v1354
        %v1356 = vpop.xlane.xlu0 %1355
        %v1357 = vsel %vm1299, %v1339, 0.0
        %1358 = vadd.xlane.f32.xlu0 %v1357
        %v1359 = vpop.xlane.xlu0 %1358
        %v1360 = vsel %vm1299, %v1341, 0.0
        %1361 = vadd.xlane.f32.xlu0 %v1360
        %v1362 = vpop.xlane.xlu0 %1361
        %v1363 = vsel %vm1299, %v1343, 0.0
        %1364 = vadd.xlane.f32.xlu0 %v1363
        %v1365 = vpop.xlane.xlu0 %1364
        %v1366 = vsel %vm1299, %v1345, 0.0
        %1367 = vadd.xlane.f32.xlu0 %v1366
        %v1368 = vpop.xlane.xlu0 %1367
        %v1369 = vsel %vm1299, %v1347, 0.0
        %1370 = vadd.xlane.f32.xlu0 %v1369
        %v1371 = vpop.xlane.xlu0 %1370
        %v1372 = vpack.c.bf16 %v1333, %v1333
        %v1373 = vpack.c.bf16 %v1335, %v1335
        %v1374 = vpack.c.bf16 %v1337, %v1337
        %v1375 = vpack.c.bf16 %v1339, %v1339
        %v1376 = vpack.c.bf16 %v1341, %v1341
        %v1377 = vpack.c.bf16 %v1343, %v1343
        %v1378 = vpack.c.bf16 %v1345, %v1345
        %v1379 = vpack.c.bf16 %v1347, %v1347
        %v1381 = vsel %vm1299, %v1372, 0
        %vm1383 = vcmask 1043456
        %v1385 = vsel %vm1383, %v1138, 0
        %1387 = vmatpush.bf16.msra.mxu0 0
        %1388 = vmatpush.bf16.msra.mxu0 0
        %1389 = vmatpush.bf16.msra.mxu0 0
        %1390 = vmatpush.bf16.msra.mxu0 0
        %1391 = vmatpush.bf16.msra.mxu0 0
        %1392 = vmatpush.bf16.msra.mxu0 0
        %1393 = vmatpush.bf16.msra.mxu0 0
        %1394 = vmatpush.bf16.msra.mxu0 %v1385
        %1395 = vmatmul.bf16.gmra.mxu0 %v1381
        %v1396 = vpop.f32.mrf.mxu0
        %v1397 = vadd.f32 0.0, %v1396
        %v1398 = vpop.f32.mrf.mxu0
        %1399 = vdwg.mxu0
        %v1401 = vsel %vm1299, %v1373, 0
        %v1404 = vsel %vm1383, %v1139, 0
        %1406 = vmatpush.bf16.msra.mxu0 0
        %1407 = vmatpush.bf16.msra.mxu0 0
        %1408 = vmatpush.bf16.msra.mxu0 0
        %1409 = vmatpush.bf16.msra.mxu0 0
        %1410 = vmatpush.bf16.msra.mxu0 0
        %1411 = vmatpush.bf16.msra.mxu0 0
        %1412 = vmatpush.bf16.msra.mxu0 0
        %1413 = vmatpush.bf16.msra.mxu0 %v1404
        %1414 = vmatmul.bf16.gmra.mxu0 %v1401
        %v1415 = vpop.f32.mrf.mxu0
        %v1416 = vadd.f32 0.0, %v1415
        %v1417 = vpop.f32.mrf.mxu0
        %1418 = vdwg.mxu0
        %v1420 = vsel %vm1299, %v1374, 0
        %v1423 = vsel %vm1383, %v1140, 0
        %1425 = vmatpush.bf16.msra.mxu0 0
        %1426 = vmatpush.bf16.msra.mxu0 0
        %1427 = vmatpush.bf16.msra.mxu0 0
        %1428 = vmatpush.bf16.msra.mxu0 0
        %1429 = vmatpush.bf16.msra.mxu0 0
        %1430 = vmatpush.bf16.msra.mxu0 0
        %1431 = vmatpush.bf16.msra.mxu0 0
        %1432 = vmatpush.bf16.msra.mxu0 %v1423
        %1433 = vmatmul.bf16.gmra.mxu0 %v1420
        %v1434 = vpop.f32.mrf.mxu0
        %v1435 = vadd.f32 0.0, %v1434
        %v1436 = vpop.f32.mrf.mxu0
        %1437 = vdwg.mxu0
        %v1439 = vsel %vm1299, %v1375, 0
        %v1442 = vsel %vm1383, %v1141, 0
        %1444 = vmatpush.bf16.msra.mxu0 0
        %1445 = vmatpush.bf16.msra.mxu0 0
        %1446 = vmatpush.bf16.msra.mxu0 0
        %1447 = vmatpush.bf16.msra.mxu0 0
        %1448 = vmatpush.bf16.msra.mxu0 0
        %1449 = vmatpush.bf16.msra.mxu0 0
        %1450 = vmatpush.bf16.msra.mxu0 0
        %1451 = vmatpush.bf16.msra.mxu0 %v1442
        %1452 = vmatmul.bf16.gmra.mxu0 %v1439
        %v1453 = vpop.f32.mrf.mxu0
        %v1454 = vadd.f32 0.0, %v1453
        %v1455 = vpop.f32.mrf.mxu0
        %1456 = vdwg.mxu0
        %v1458 = vsel %vm1299, %v1376, 0
        %v1461 = vsel %vm1383, %v1142, 0
        %1463 = vmatpush.bf16.msra.mxu0 0
        %1464 = vmatpush.bf16.msra.mxu0 0
        %1465 = vmatpush.bf16.msra.mxu0 0
        %1466 = vmatpush.bf16.msra.mxu0 0
        %1467 = vmatpush.bf16.msra.mxu0 0
        %1468 = vmatpush.bf16.msra.mxu0 0
        %1469 = vmatpush.bf16.msra.mxu0 0
        %1470 = vmatpush.bf16.msra.mxu0 %v1461
        %1471 = vmatmul.bf16.gmra.mxu0 %v1458
        %v1472 = vpop.f32.mrf.mxu0
        %v1473 = vadd.f32 0.0, %v1472
        %v1474 = vpop.f32.mrf.mxu0
        %1475 = vdwg.mxu0
        %v1477 = vsel %vm1299, %v1377, 0
        %v1480 = vsel %vm1383, %v1143, 0
        %1482 = vmatpush.bf16.msra.mxu0 0
        %1483 = vmatpush.bf16.msra.mxu0 0
        %1484 = vmatpush.bf16.msra.mxu0 0
        %1485 = vmatpush.bf16.msra.mxu0 0
        %1486 = vmatpush.bf16.msra.mxu0 0
        %1487 = vmatpush.bf16.msra.mxu0 0
        %1488 = vmatpush.bf16.msra.mxu0 0
        %1489 = vmatpush.bf16.msra.mxu0 %v1480
        %1490 = vmatmul.bf16.gmra.mxu0 %v1477
        %v1491 = vpop.f32.mrf.mxu0
        %v1492 = vadd.f32 0.0, %v1491
        %v1493 = vpop.f32.mrf.mxu0
        %1494 = vdwg.mxu0
        %v1496 = vsel %vm1299, %v1378, 0
        %v1499 = vsel %vm1383, %v1144, 0
        %1501 = vmatpush.bf16.msra.mxu0 0
        %1502 = vmatpush.bf16.msra.mxu0 0
        %1503 = vmatpush.bf16.msra.mxu0 0
        %1504 = vmatpush.bf16.msra.mxu0 0
        %1505 = vmatpush.bf16.msra.mxu0 0
        %1506 = vmatpush.bf16.msra.mxu0 0
        %1507 = vmatpush.bf16.msra.mxu0 0
        %1508 = vmatpush.bf16.msra.mxu0 %v1499
        %1509 = vmatmul.bf16.gmra.mxu0 %v1496
        %v1510 = vpop.f32.mrf.mxu0
        %v1511 = vadd.f32 0.0, %v1510
        %v1512 = vpop.f32.mrf.mxu0
        %1513 = vdwg.mxu0
        %v1515 = vsel %vm1299, %v1379, 0
        %v1518 = vsel %vm1383, %v1145, 0
        %1520 = vmatpush.bf16.msra.mxu0 0
        %1521 = vmatpush.bf16.msra.mxu0 0
        %1522 = vmatpush.bf16.msra.mxu0 0
        %1523 = vmatpush.bf16.msra.mxu0 0
        %1524 = vmatpush.bf16.msra.mxu0 0
        %1525 = vmatpush.bf16.msra.mxu0 0
        %1526 = vmatpush.bf16.msra.mxu0 0
        %1527 = vmatpush.bf16.msra.mxu0 %v1518
        %1528 = vmatmul.bf16.gmra.mxu0 %v1515
        %v1529 = vpop.f32.mrf.mxu0
        %v1530 = vadd.f32 0.0, %v1529
        %v1531 = vpop.f32.mrf.mxu0
        %1532 = vdwg.mxu0
        %v1533 = vrcp.pop %v1350
        %v1534 = vrcp.pop %v1353
        %v1535 = vrcp.pop %v1356
        %v1536 = vrcp.pop %v1359
        %v1537 = vrcp.pop %v1362
        %v1538 = vrcp.pop %v1365
        %v1539 = vrcp.pop %v1368
        %v1540 = vrcp.pop %v1371
        %v1541 = vmul.f32 %v1397, %v1533
        %v1542 = vmul.f32 %v1416, %v1534
        %v1543 = vmul.f32 %v1435, %v1535
        %v1544 = vmul.f32 %v1454, %v1536
        %v1545 = vmul.f32 %v1473, %v1537
        %v1546 = vmul.f32 %v1492, %v1538
        %v1547 = vmul.f32 %v1511, %v1539
        %v1548 = vmul.f32 %v1530, %v1540
        %v1549 = vpack.c.bf16 %v1541, %v1541
        %v1550 = vpack.c.bf16 %v1542, %v1542
        %v1551 = vpack.c.bf16 %v1543, %v1543
        %v1552 = vpack.c.bf16 %v1544, %v1544
        %v1553 = vpack.c.bf16 %v1545, %v1545
        %v1554 = vpack.c.bf16 %v1546, %v1546
        %v1555 = vpack.c.bf16 %v1547, %v1547
        %v1556 = vpack.c.bf16 %v1548, %v1548
        %v1558 = vsel %vm1146, %v1549, 0
        %vm1560 = vcmask 1041408
        %v1562 = vsel %vm1560, %v430, 0
        %1564 = vmatpush.bf16.msra.mxu0 0
        %1565 = vmatpush.bf16.msra.mxu0 0
        %1566 = vmatpush.bf16.msra.mxu0 0
        %1567 = vmatpush.bf16.msra.mxu0 0
        %1568 = vmatpush.bf16.msra.mxu0 0
        %1569 = vmatpush.bf16.msra.mxu0 0
        %1570 = vmatpush.bf16.msra.mxu0 0
        %1571 = vmatpush.bf16.msra.mxu0 %v1562
        %1572 = vmatmul.bf16.gmra.mxu0 %v1558
        %v1573 = vpop.f32.mrf.mxu0
        %v1574 = vadd.f32 0.0, %v1573
        %v1575 = vpop.f32.mrf.mxu0
        %1576 = vdwg.mxu0
        %v1578 = vsel %vm1146, %v1550, 0
        %v1581 = vsel %vm1560, %v431, 0
        %1583 = vmatpush.bf16.msra.mxu0 0
        %1584 = vmatpush.bf16.msra.mxu0 0
        %1585 = vmatpush.bf16.msra.mxu0 0
        %1586 = vmatpush.bf16.msra.mxu0 0
        %1587 = vmatpush.bf16.msra.mxu0 0
        %1588 = vmatpush.bf16.msra.mxu0 0
        %1589 = vmatpush.bf16.msra.mxu0 0
        %1590 = vmatpush.bf16.msra.mxu0 %v1581
        %1591 = vmatmul.bf16.gmra.mxu0 %v1578
        %v1592 = vpop.f32.mrf.mxu0
        %v1593 = vadd.f32 0.0, %v1592
        %v1594 = vpop.f32.mrf.mxu0
        %1595 = vdwg.mxu0
        %v1597 = vsel %vm1146, %v1551, 0
        %v1600 = vsel %vm1560, %v432, 0
        %1602 = vmatpush.bf16.msra.mxu0 0
        %1603 = vmatpush.bf16.msra.mxu0 0
        %1604 = vmatpush.bf16.msra.mxu0 0
        %1605 = vmatpush.bf16.msra.mxu0 0
        %1606 = vmatpush.bf16.msra.mxu0 0
        %1607 = vmatpush.bf16.msra.mxu0 0
        %1608 = vmatpush.bf16.msra.mxu0 0
        %1609 = vmatpush.bf16.msra.mxu0 %v1600
        %1610 = vmatmul.bf16.gmra.mxu0 %v1597
        %v1611 = vpop.f32.mrf.mxu0
        %v1612 = vadd.f32 0.0, %v1611
        %v1613 = vpop.f32.mrf.mxu0
        %1614 = vdwg.mxu0
        %v1616 = vsel %vm1146, %v1552, 0
        %v1619 = vsel %vm1560, %v433, 0
        %1621 = vmatpush.bf16.msra.mxu0 0
        %1622 = vmatpush.bf16.msra.mxu0 0
        %1623 = vmatpush.bf16.msra.mxu0 0
        %1624 = vmatpush.bf16.msra.mxu0 0
        %1625 = vmatpush.bf16.msra.mxu0 0
        %1626 = vmatpush.bf16.msra.mxu0 0
        %1627 = vmatpush.bf16.msra.mxu0 0
        %1628 = vmatpush.bf16.msra.mxu0 %v1619
        %1629 = vmatmul.bf16.gmra.mxu0 %v1616
        %v1630 = vpop.f32.mrf.mxu0
        %v1631 = vadd.f32 0.0, %v1630
        %v1632 = vpop.f32.mrf.mxu0
        %1633 = vdwg.mxu0
        %v1635 = vsel %vm1146, %v1553, 0
        %v1638 = vsel %vm1560, %v434, 0
        %1640 = vmatpush.bf16.msra.mxu0 0
        %1641 = vmatpush.bf16.msra.mxu0 0
        %1642 = vmatpush.bf16.msra.mxu0 0
        %1643 = vmatpush.bf16.msra.mxu0 0
        %1644 = vmatpush.bf16.msra.mxu0 0
        %1645 = vmatpush.bf16.msra.mxu0 0
        %1646 = vmatpush.bf16.msra.mxu0 0
        %1647 = vmatpush.bf16.msra.mxu0 %v1638
        %1648 = vmatmul.bf16.gmra.mxu0 %v1635
        %v1649 = vpop.f32.mrf.mxu0
        %v1650 = vadd.f32 0.0, %v1649
        %v1651 = vpop.f32.mrf.mxu0
        %1652 = vdwg.mxu0
        %v1654 = vsel %vm1146, %v1554, 0
        %v1657 = vsel %vm1560, %v435, 0
        %1659 = vmatpush.bf16.msra.mxu0 0
        %1660 = vmatpush.bf16.msra.mxu0 0
        %1661 = vmatpush.bf16.msra.mxu0 0
        %1662 = vmatpush.bf16.msra.mxu0 0
        %1663 = vmatpush.bf16.msra.mxu0 0
        %1664 = vmatpush.bf16.msra.mxu0 0
        %1665 = vmatpush.bf16.msra.mxu0 0
        %1666 = vmatpush.bf16.msra.mxu0 %v1657
        %1667 = vmatmul.bf16.gmra.mxu0 %v1654
        %v1668 = vpop.f32.mrf.mxu0
        %v1669 = vadd.f32 0.0, %v1668
        %v1670 = vpop.f32.mrf.mxu0
        %1671 = vdwg.mxu0
        %v1673 = vsel %vm1146, %v1555, 0
        %v1676 = vsel %vm1560, %v436, 0
        %1678 = vmatpush.bf16.msra.mxu0 0
        %1679 = vmatpush.bf16.msra.mxu0 0
        %1680 = vmatpush.bf16.msra.mxu0 0
        %1681 = vmatpush.bf16.msra.mxu0 0
        %1682 = vmatpush.bf16.msra.mxu0 0
        %1683 = vmatpush.bf16.msra.mxu0 0
        %1684 = vmatpush.bf16.msra.mxu0 0
        %1685 = vmatpush.bf16.msra.mxu0 %v1676
        %1686 = vmatmul.bf16.gmra.mxu0 %v1673
        %v1687 = vpop.f32.mrf.mxu0
        %v1688 = vadd.f32 0.0, %v1687
        %v1689 = vpop.f32.mrf.mxu0
        %1690 = vdwg.mxu0
        %v1692 = vsel %vm1146, %v1556, 0
        %v1695 = vsel %vm1560, %v437, 0
        %1697 = vmatpush.bf16.msra.mxu0 0
        %1698 = vmatpush.bf16.msra.mxu0 0
        %1699 = vmatpush.bf16.msra.mxu0 0
        %1700 = vmatpush.bf16.msra.mxu0 0
        %1701 = vmatpush.bf16.msra.mxu0 0
        %1702 = vmatpush.bf16.msra.mxu0 0
        %1703 = vmatpush.bf16.msra.mxu0 0
        %1704 = vmatpush.bf16.msra.mxu0 %v1695
        %1705 = vmatmul.bf16.gmra.mxu0 %v1692
        %v1706 = vpop.f32.mrf.mxu0
        %v1707 = vadd.f32 0.0, %v1706
        %v1708 = vpop.f32.mrf.mxu0
        %1709 = vdwg.mxu0
        %v1710 = vsel %vm479, %v1574, 0.0
        %v1711 = vsel %vm479, %v1593, 0.0
        %v1712 = vadd.f32 %v1710, %v1711
        %v1713 = vsel %vm479, %v1612, 0.0
        %v1714 = vadd.f32 %v1712, %v1713
        %v1715 = vsel %vm479, %v1631, 0.0
        %v1716 = vadd.f32 %v1714, %v1715
        %v1717 = vsel %vm479, %v1650, 0.0
        %v1718 = vadd.f32 %v1716, %v1717
        %v1719 = vsel %vm479, %v1669, 0.0
        %v1720 = vadd.f32 %v1718, %v1719
        %v1721 = vsel %vm479, %v1688, 0.0
        %v1722 = vadd.f32 %v1720, %v1721
        %v1723 = vsel %vm479, %v1707, 0.0
        %v1724 = vadd.f32 %v1722, %v1723
        %v1725 = vperm.slane %v441, 0
        %v1726 = vadd.f32 %v1724, %v1725
        %v1727 = vadd.f32 %v333, %v1726
        %v1728 = vsel %vm479, %v1727, 0.0
        %1729 = vadd.xlane.f32.xlu0 %v1728
        %v1730 = vpop.xlane.xlu0 %1729
        %v1731 = vrcp.pop 32.0
        %v1732 = vmul.f32 32.0, %v1731
        %v1733 = vsub.f32 1.0, %v1732
        %v1734 = vmul.f32 %v1731, %v1733
        %v1735 = vadd.f32 %v1731, %v1734
        %vm1736 = vweird.f32 %v1731
        %v1737 = vsel %vm1736, %v1731, %v1735
        %v1738 = vmul.f32 %v1730, %v1737
        %v1739 = vsub.f32 %v1727, %v1738
        %v1740 = vmul.f32 %v1739, %v1739
        %v1741 = vsel %vm479, %v1740, 0.0
        %1742 = vadd.xlane.f32.xlu0 %v1741
        %v1743 = vpop.xlane.xlu0 %1742
        %v1744 = vmul.f32 %v1743, %v1737
        %v1745 = vadd.f32 %v1744, 1e-05
        %v1746 = vrsqrt.pop %v1745
        %v1747 = vmul.f32 %v1746, %v1745
        %v1748 = vmul.f32 %v1747, %v1746
        %v1749 = vmul.f32 0.5, %v1748
        %v1750 = vsub.f32 1.5, %v1749
        %v1751 = vmul.f32 %v1746, %v1750
        %vm1752 = vweird.f32 %v1745
        %vm1753 = vweird.f32 %v1746
        %vm1754 = vmor %vm1752, %vm1753
        %v1755 = vsel %vm1754, %v1746, %v1751
        %v1756 = vmul.f32 %v1739, %v1755
        %v1757 = vperm.slane %v441, 1
        %v1758 = vmul.f32 %v1756, %v1757
        %v1759 = vperm.slane %v441, 2
        %v1760 = vadd.f32 %v1758, %v1759
        %s1761 = scalar_lea.vmem %s4, 384
        %v1762 = vld [vmem:[%s1761] sm:$0xf]
        %v1763 = vld [vmem:[%s1761 + $0x4] sm:$0xf]
        %v1764 = vld [vmem:[%s1761 + $0x8] sm:$0xf]
        %v1765 = vld [vmem:[%s1761 + $0xc] sm:$0xf]
        %v1766 = vld [vmem:[%s1761 + $0x10] sm:$0xf]
        %v1767 = vld [vmem:[%s1761 + $0x14] sm:$0xf]
        %v1768 = vld [vmem:[%s1761 + $0x18] sm:$0xf]
        %v1769 = vld [vmem:[%s1761 + $0x1c] sm:$0xf]
        %v1770 = vld [vmem:[%s1761 + $0x20] sm:$0xf]
        %v1771 = vld [vmem:[%s1761 + $0x24] sm:$0xf]
        %v1772 = vld [vmem:[%s1761 + $0x28] sm:$0xf]
        %v1773 = vld [vmem:[%s1761 + $0x2c] sm:$0xf]
        %v1774 = vld [vmem:[%s1761 + $0x30] sm:$0xf]
        %v1775 = vld [vmem:[%s1761 + $0x34] sm:$0xf]
        %v1776 = vld [vmem:[%s1761 + $0x38] sm:$0xf]
        %v1777 = vld [vmem:[%s1761 + $0x3c] sm:$0xf]
        %v1778 = vld [vmem:[%s1761 + $0x40] sm:$0xf]
        %v1779 = vld [vmem:[%s1761 + $0x44] sm:$0xf]
        %v1780 = vld [vmem:[%s1761 + $0x48] sm:$0xf]
        %v1781 = vld [vmem:[%s1761 + $0x4c] sm:$0xf]
        %v1782 = vld [vmem:[%s1761 + $0x50] sm:$0xf]
        %v1783 = vld [vmem:[%s1761 + $0x54] sm:$0xf]
        %v1784 = vld [vmem:[%s1761 + $0x58] sm:$0xf]
        %v1785 = vld [vmem:[%s1761 + $0x5c] sm:$0xf]
        %v1786 = vld [vmem:[%s1761 + $0x60] sm:$0xf]
        %v1787 = vld [vmem:[%s1761 + $0x64] sm:$0xf]
        %v1788 = vld [vmem:[%s1761 + $0x68] sm:$0xf]
        %v1789 = vld [vmem:[%s1761 + $0x6c] sm:$0xf]
        %v1790 = vld [vmem:[%s1761 + $0x70] sm:$0xf]
        %v1791 = vld [vmem:[%s1761 + $0x74] sm:$0xf]
        %v1792 = vld [vmem:[%s1761 + $0x78] sm:$0xf]
        %v1793 = vld [vmem:[%s1761 + $0x7c] sm:$0xf]
        %v1794 = vld [vmem:[%s1761 + $0x80] sm:$0xf]
        %v1795 = vld [vmem:[%s1761 + $0x84] sm:$0xf]
        %v1796 = vld [vmem:[%s1761 + $0x88] sm:$0xf]
        %v1797 = vld [vmem:[%s1761 + $0x8c] sm:$0xf]
        %v1798 = vld [vmem:[%s1761 + $0x90] sm:$0xf]
        %v1799 = vld [vmem:[%s1761 + $0x94] sm:$0xf]
        %v1800 = vld [vmem:[%s1761 + $0x98] sm:$0xf]
        %v1801 = vld [vmem:[%s1761 + $0x9c] sm:$0xf]
        %v1802 = vld [vmem:[%s1761 + $0xa0] sm:$0xf]
        %v1803 = vld [vmem:[%s1761 + $0xa4] sm:$0xf]
        %v1804 = vld [vmem:[%s1761 + $0xa8] sm:$0xf]
        %v1805 = vld [vmem:[%s1761 + $0xac] sm:$0xf]
        %v1806 = vld [vmem:[%s1761 + $0xb0] sm:$0xf]
        %v1807 = vld [vmem:[%s1761 + $0xb4] sm:$0xf]
        %v1808 = vld [vmem:[%s1761 + $0xb8] sm:$0xf]
        %v1809 = vld [vmem:[%s1761 + $0xbc] sm:$0xf]
        %v1810 = vld [vmem:[%s1761 + $0xc0] sm:$0xf]
        %v1811 = vld [vmem:[%s1761 + $0xc4] sm:$0xf]
        %v1812 = vld [vmem:[%s1761 + $0xc8] sm:$0xf]
        %v1813 = vld [vmem:[%s1761 + $0xcc] sm:$0xf]
        %v1814 = vld [vmem:[%s1761 + $0xd0] sm:$0xf]
        %v1815 = vld [vmem:[%s1761 + $0xd4] sm:$0xf]
        %v1816 = vld [vmem:[%s1761 + $0xd8] sm:$0xf]
        %v1817 = vld [vmem:[%s1761 + $0xdc] sm:$0xf]
        %v1818 = vld [vmem:[%s1761 + $0xe0] sm:$0xf]
        %v1819 = vld [vmem:[%s1761 + $0xe4] sm:$0xf]
        %v1820 = vld [vmem:[%s1761 + $0xe8] sm:$0xf]
        %v1821 = vld [vmem:[%s1761 + $0xec] sm:$0xf]
        %v1822 = vld [vmem:[%s1761 + $0xf0] sm:$0xf]
        %v1823 = vld [vmem:[%s1761 + $0xf4] sm:$0xf]
        %v1824 = vld [vmem:[%s1761 + $0xf8] sm:$0xf]
        %v1825 = vld [vmem:[%s1761 + $0xfc] sm:$0xf]
        %v1826 = vld [vmem:[%s1761 + $0x100] sm:$0xf]
        %v1827 = vld [vmem:[%s1761 + $0x104] sm:$0xf]
        %v1828 = vld [vmem:[%s1761 + $0x108] sm:$0xf]
        %v1829 = vld [vmem:[%s1761 + $0x10c] sm:$0xf]
        %v1830 = vld [vmem:[%s1761 + $0x110] sm:$0xf]
        %v1831 = vld [vmem:[%s1761 + $0x114] sm:$0xf]
        %v1832 = vld [vmem:[%s1761 + $0x118] sm:$0xf]
        %v1833 = vld [vmem:[%s1761 + $0x11c] sm:$0xf]
        %v1834 = vld [vmem:[%s1761 + $0x120] sm:$0xf]
        %v1835 = vld [vmem:[%s1761 + $0x124] sm:$0xf]
        %v1836 = vld [vmem:[%s1761 + $0x128] sm:$0xf]
        %v1837 = vld [vmem:[%s1761 + $0x12c] sm:$0xf]
        %v1838 = vld [vmem:[%s1761 + $0x130] sm:$0xf]
        %v1839 = vld [vmem:[%s1761 + $0x134] sm:$0xf]
        %v1840 = vld [vmem:[%s1761 + $0x138] sm:$0xf]
        %v1841 = vld [vmem:[%s1761 + $0x13c] sm:$0xf]
        %v1842 = vld [vmem:[%s1761 + $0x140] sm:$0xf]
        %v1843 = vld [vmem:[%s1761 + $0x144] sm:$0xf]
        %v1844 = vld [vmem:[%s1761 + $0x148] sm:$0xf]
        %v1845 = vld [vmem:[%s1761 + $0x14c] sm:$0xf]
        %v1846 = vld [vmem:[%s1761 + $0x150] sm:$0xf]
        %v1847 = vld [vmem:[%s1761 + $0x154] sm:$0xf]
        %v1848 = vld [vmem:[%s1761 + $0x158] sm:$0xf]
        %v1849 = vld [vmem:[%s1761 + $0x15c] sm:$0xf]
        %v1850 = vld [vmem:[%s1761 + $0x160] sm:$0xf]
        %v1851 = vld [vmem:[%s1761 + $0x164] sm:$0xf]
        %v1852 = vld [vmem:[%s1761 + $0x168] sm:$0xf]
        %v1853 = vld [vmem:[%s1761 + $0x16c] sm:$0xf]
        %v1854 = vld [vmem:[%s1761 + $0x170] sm:$0xf]
        %v1855 = vld [vmem:[%s1761 + $0x174] sm:$0xf]
        %v1856 = vld [vmem:[%s1761 + $0x178] sm:$0xf]
        %v1857 = vld [vmem:[%s1761 + $0x17c] sm:$0xf]
        %s1858 = scalar_lea.vmem %s5, 16
        %v1859 = vld [vmem:[%s1858] sm:$0x3]
        %v1860 = vld [vmem:[%s1858 + $0x2] sm:$0x3]
        %v1861 = vld [vmem:[%s1858 + $0x4] sm:$0x3]
        %v1862 = vld [vmem:[%s1858 + $0x6] sm:$0x3]
        %v1863 = vld [vmem:[%s1858 + $0x8] sm:$0x3]
        %v1864 = vld [vmem:[%s1858 + $0xa] sm:$0x3]
        %v1865 = vld [vmem:[%s1858 + $0xc] sm:$0x3]
        %v1866 = vld [vmem:[%s1858 + $0xe] sm:$0x3]
        %s1867 = scalar_lea.vmem %s6, 24
        %v1868 = vld [vmem:[%s1867] sm:$0xff]
        %v1869 = vld [vmem:[%s1867 + $0x8] sm:$0xff]
        %v1870 = vld [vmem:[%s1867 + $0x10] sm:$0xff]
        %s1871 = scalar_lea.vmem %s7, 4
        %v1872 = vld [vmem:[%s1871] sm:$0x7]
        %v1873 = vpack.c.bf16 %v1760, %v1760
        %v1875 = vrot.slane %v1868, 1
        %v1876 = vrot.slane %v1868, 2
        %v1877 = vrot.slane %v1868, 3
        %v1878 = vrot.slane %v1868, 4
        %v1879 = vrot.slane %v1868, 5
        %v1880 = vrot.slane %v1868, 6
        %v1881 = vrot.slane %v1868, 7
        %v1882 = vperm.slane %v1868, 0
        %v1883 = vperm.slane %v1875, 0
        %v1884 = vperm.slane %v1876, 0
        %v1885 = vperm.slane %v1877, 0
        %v1886 = vperm.slane %v1878, 0
        %v1887 = vperm.slane %v1879, 0
        %v1888 = vperm.slane %v1880, 0
        %v1889 = vperm.slane %v1881, 0
        %v1902 = vunpack.c.l.b16 %v1762
        %v1903 = vunpack.c.l.b16 %v1763
        %v1904 = vunpack.c.l.b16 %v1764
        %v1905 = vunpack.c.l.b16 %v1765
        %v1906 = vpack.c.b16 %v1903, %v1902
        %v1907 = vpack.c.b16 %v1905, %v1904
        %v1911 = vsel %vm479, %v1873, 0
        %1913 = vmatpush.bf16.msra.mxu0 0
        %1914 = vmatpush.bf16.msra.mxu0 0
        %1915 = vmatpush.bf16.msra.mxu0 0
        %1916 = vmatpush.bf16.msra.mxu0 0
        %1917 = vmatpush.bf16.msra.mxu0 0
        %1918 = vmatpush.bf16.msra.mxu0 0
        %1919 = vmatpush.bf16.msra.mxu0 %v1907
        %1920 = vmatpush.bf16.msra.mxu0 %v1906
        %1921 = vmatmul.bf16.gmra.mxu0 %v1911
        %v1922 = vpop.f32.mrf.mxu0
        %v1923 = vadd.f32 %v1882, %v1922
        %v1924 = vpop.f32.mrf.mxu0
        %1925 = vdwg.mxu0
        %v1930 = vunpack.c.l.b16 %v1766
        %v1931 = vunpack.c.l.b16 %v1767
        %v1932 = vunpack.c.l.b16 %v1768
        %v1933 = vunpack.c.l.b16 %v1769
        %v1934 = vpack.c.b16 %v1931, %v1930
        %v1935 = vpack.c.b16 %v1933, %v1932
        %1938 = vmatpush.bf16.msra.mxu0 0
        %1939 = vmatpush.bf16.msra.mxu0 0
        %1940 = vmatpush.bf16.msra.mxu0 0
        %1941 = vmatpush.bf16.msra.mxu0 0
        %1942 = vmatpush.bf16.msra.mxu0 0
        %1943 = vmatpush.bf16.msra.mxu0 0
        %1944 = vmatpush.bf16.msra.mxu0 %v1935
        %1945 = vmatpush.bf16.msra.mxu0 %v1934
        %1946 = vmatmul.bf16.gmra.mxu0 %v1911
        %v1947 = vpop.f32.mrf.mxu0
        %v1948 = vadd.f32 %v1883, %v1947
        %v1949 = vpop.f32.mrf.mxu0
        %1950 = vdwg.mxu0
        %v1955 = vunpack.c.l.b16 %v1770
        %v1956 = vunpack.c.l.b16 %v1771
        %v1957 = vunpack.c.l.b16 %v1772
        %v1958 = vunpack.c.l.b16 %v1773
        %v1959 = vpack.c.b16 %v1956, %v1955
        %v1960 = vpack.c.b16 %v1958, %v1957
        %1963 = vmatpush.bf16.msra.mxu0 0
        %1964 = vmatpush.bf16.msra.mxu0 0
        %1965 = vmatpush.bf16.msra.mxu0 0
        %1966 = vmatpush.bf16.msra.mxu0 0
        %1967 = vmatpush.bf16.msra.mxu0 0
        %1968 = vmatpush.bf16.msra.mxu0 0
        %1969 = vmatpush.bf16.msra.mxu0 %v1960
        %1970 = vmatpush.bf16.msra.mxu0 %v1959
        %1971 = vmatmul.bf16.gmra.mxu0 %v1911
        %v1972 = vpop.f32.mrf.mxu0
        %v1973 = vadd.f32 %v1884, %v1972
        %v1974 = vpop.f32.mrf.mxu0
        %1975 = vdwg.mxu0
        %v1980 = vunpack.c.l.b16 %v1774
        %v1981 = vunpack.c.l.b16 %v1775
        %v1982 = vunpack.c.l.b16 %v1776
        %v1983 = vunpack.c.l.b16 %v1777
        %v1984 = vpack.c.b16 %v1981, %v1980
        %v1985 = vpack.c.b16 %v1983, %v1982
        %1988 = vmatpush.bf16.msra.mxu0 0
        %1989 = vmatpush.bf16.msra.mxu0 0
        %1990 = vmatpush.bf16.msra.mxu0 0
        %1991 = vmatpush.bf16.msra.mxu0 0
        %1992 = vmatpush.bf16.msra.mxu0 0
        %1993 = vmatpush.bf16.msra.mxu0 0
        %1994 = vmatpush.bf16.msra.mxu0 %v1985
        %1995 = vmatpush.bf16.msra.mxu0 %v1984
        %1996 = vmatmul.bf16.gmra.mxu0 %v1911
        %v1997 = vpop.f32.mrf.mxu0
        %v1998 = vadd.f32 %v1885, %v1997
        %v1999 = vpop.f32.mrf.mxu0
        %2000 = vdwg.mxu0
        %v2005 = vunpack.c.l.b16 %v1778
        %v2006 = vunpack.c.l.b16 %v1779
        %v2007 = vunpack.c.l.b16 %v1780
        %v2008 = vunpack.c.l.b16 %v1781
        %v2009 = vpack.c.b16 %v2006, %v2005
        %v2010 = vpack.c.b16 %v2008, %v2007
        %2013 = vmatpush.bf16.msra.mxu0 0
        %2014 = vmatpush.bf16.msra.mxu0 0
        %2015 = vmatpush.bf16.msra.mxu0 0
        %2016 = vmatpush.bf16.msra.mxu0 0
        %2017 = vmatpush.bf16.msra.mxu0 0
        %2018 = vmatpush.bf16.msra.mxu0 0
        %2019 = vmatpush.bf16.msra.mxu0 %v2010
        %2020 = vmatpush.bf16.msra.mxu0 %v2009
        %2021 = vmatmul.bf16.gmra.mxu0 %v1911
        %v2022 = vpop.f32.mrf.mxu0
        %v2023 = vadd.f32 %v1886, %v2022
        %v2024 = vpop.f32.mrf.mxu0
        %2025 = vdwg.mxu0
        %v2030 = vunpack.c.l.b16 %v1782
        %v2031 = vunpack.c.l.b16 %v1783
        %v2032 = vunpack.c.l.b16 %v1784
        %v2033 = vunpack.c.l.b16 %v1785
        %v2034 = vpack.c.b16 %v2031, %v2030
        %v2035 = vpack.c.b16 %v2033, %v2032
        %2038 = vmatpush.bf16.msra.mxu0 0
        %2039 = vmatpush.bf16.msra.mxu0 0
        %2040 = vmatpush.bf16.msra.mxu0 0
        %2041 = vmatpush.bf16.msra.mxu0 0
        %2042 = vmatpush.bf16.msra.mxu0 0
        %2043 = vmatpush.bf16.msra.mxu0 0
        %2044 = vmatpush.bf16.msra.mxu0 %v2035
        %2045 = vmatpush.bf16.msra.mxu0 %v2034
        %2046 = vmatmul.bf16.gmra.mxu0 %v1911
        %v2047 = vpop.f32.mrf.mxu0
        %v2048 = vadd.f32 %v1887, %v2047
        %v2049 = vpop.f32.mrf.mxu0
        %2050 = vdwg.mxu0
        %v2055 = vunpack.c.l.b16 %v1786
        %v2056 = vunpack.c.l.b16 %v1787
        %v2057 = vunpack.c.l.b16 %v1788
        %v2058 = vunpack.c.l.b16 %v1789
        %v2059 = vpack.c.b16 %v2056, %v2055
        %v2060 = vpack.c.b16 %v2058, %v2057
        %2063 = vmatpush.bf16.msra.mxu0 0
        %2064 = vmatpush.bf16.msra.mxu0 0
        %2065 = vmatpush.bf16.msra.mxu0 0
        %2066 = vmatpush.bf16.msra.mxu0 0
        %2067 = vmatpush.bf16.msra.mxu0 0
        %2068 = vmatpush.bf16.msra.mxu0 0
        %2069 = vmatpush.bf16.msra.mxu0 %v2060
        %2070 = vmatpush.bf16.msra.mxu0 %v2059
        %2071 = vmatmul.bf16.gmra.mxu0 %v1911
        %v2072 = vpop.f32.mrf.mxu0
        %v2073 = vadd.f32 %v1888, %v2072
        %v2074 = vpop.f32.mrf.mxu0
        %2075 = vdwg.mxu0
        %v2080 = vunpack.c.l.b16 %v1790
        %v2081 = vunpack.c.l.b16 %v1791
        %v2082 = vunpack.c.l.b16 %v1792
        %v2083 = vunpack.c.l.b16 %v1793
        %v2084 = vpack.c.b16 %v2081, %v2080
        %v2085 = vpack.c.b16 %v2083, %v2082
        %2088 = vmatpush.bf16.msra.mxu0 0
        %2089 = vmatpush.bf16.msra.mxu0 0
        %2090 = vmatpush.bf16.msra.mxu0 0
        %2091 = vmatpush.bf16.msra.mxu0 0
        %2092 = vmatpush.bf16.msra.mxu0 0
        %2093 = vmatpush.bf16.msra.mxu0 0
        %2094 = vmatpush.bf16.msra.mxu0 %v2085
        %2095 = vmatpush.bf16.msra.mxu0 %v2084
        %2096 = vmatmul.bf16.gmra.mxu0 %v1911
        %v2097 = vpop.f32.mrf.mxu0
        %v2098 = vadd.f32 %v1889, %v2097
        %v2099 = vpop.f32.mrf.mxu0
        %2100 = vdwg.mxu0
        %v2101 = vpack.c.bf16 %v1923, %v1923
        %v2102 = vpack.c.bf16 %v1948, %v1948
        %v2103 = vpack.c.bf16 %v1973, %v1973
        %v2104 = vpack.c.bf16 %v1998, %v1998
        %v2105 = vpack.c.bf16 %v2023, %v2023
        %v2106 = vpack.c.bf16 %v2048, %v2048
        %v2107 = vpack.c.bf16 %v2073, %v2073
        %v2108 = vpack.c.bf16 %v2098, %v2098
        %v2110 = vrot.slane %v1869, 1
        %v2111 = vrot.slane %v1869, 2
        %v2112 = vrot.slane %v1869, 3
        %v2113 = vrot.slane %v1869, 4
        %v2114 = vrot.slane %v1869, 5
        %v2115 = vrot.slane %v1869, 6
        %v2116 = vrot.slane %v1869, 7
        %v2117 = vperm.slane %v1869, 0
        %v2118 = vperm.slane %v2110, 0
        %v2119 = vperm.slane %v2111, 0
        %v2120 = vperm.slane %v2112, 0
        %v2121 = vperm.slane %v2113, 0
        %v2122 = vperm.slane %v2114, 0
        %v2123 = vperm.slane %v2115, 0
        %v2124 = vperm.slane %v2116, 0
        %v2137 = vunpack.c.l.b16 %v1794
        %v2138 = vunpack.c.l.b16 %v1795
        %v2139 = vunpack.c.l.b16 %v1796
        %v2140 = vunpack.c.l.b16 %v1797
        %v2141 = vpack.c.b16 %v2138, %v2137
        %v2142 = vpack.c.b16 %v2140, %v2139
        %2145 = vmatpush.bf16.msra.mxu0 0
        %2146 = vmatpush.bf16.msra.mxu0 0
        %2147 = vmatpush.bf16.msra.mxu0 0
        %2148 = vmatpush.bf16.msra.mxu0 0
        %2149 = vmatpush.bf16.msra.mxu0 0
        %2150 = vmatpush.bf16.msra.mxu0 0
        %2151 = vmatpush.bf16.msra.mxu0 %v2142
        %2152 = vmatpush.bf16.msra.mxu0 %v2141
        %2153 = vmatmul.bf16.gmra.mxu0 %v716
        %v2154 = vpop.f32.mrf.mxu0
        %v2155 = vadd.f32 %v2117, %v2154
        %v2156 = vpop.f32.mrf.mxu0
        %2157 = vdwg.mxu0
        %v2162 = vunpack.c.l.b16 %v1798
        %v2163 = vunpack.c.l.b16 %v1799
        %v2164 = vunpack.c.l.b16 %v1800
        %v2165 = vunpack.c.l.b16 %v1801
        %v2166 = vpack.c.b16 %v2163, %v2162
        %v2167 = vpack.c.b16 %v2165, %v2164
        %2170 = vmatpush.bf16.msra.mxu0 0
        %2171 = vmatpush.bf16.msra.mxu0 0
        %2172 = vmatpush.bf16.msra.mxu0 0
        %2173 = vmatpush.bf16.msra.mxu0 0
        %2174 = vmatpush.bf16.msra.mxu0 0
        %2175 = vmatpush.bf16.msra.mxu0 0
        %2176 = vmatpush.bf16.msra.mxu0 %v2167
        %2177 = vmatpush.bf16.msra.mxu0 %v2166
        %2178 = vmatmul.bf16.gmra.mxu0 %v716
        %v2179 = vpop.f32.mrf.mxu0
        %v2180 = vadd.f32 %v2118, %v2179
        %v2181 = vpop.f32.mrf.mxu0
        %2182 = vdwg.mxu0
        %v2187 = vunpack.c.l.b16 %v1802
        %v2188 = vunpack.c.l.b16 %v1803
        %v2189 = vunpack.c.l.b16 %v1804
        %v2190 = vunpack.c.l.b16 %v1805
        %v2191 = vpack.c.b16 %v2188, %v2187
        %v2192 = vpack.c.b16 %v2190, %v2189
        %2195 = vmatpush.bf16.msra.mxu0 0
        %2196 = vmatpush.bf16.msra.mxu0 0
        %2197 = vmatpush.bf16.msra.mxu0 0
        %2198 = vmatpush.bf16.msra.mxu0 0
        %2199 = vmatpush.bf16.msra.mxu0 0
        %2200 = vmatpush.bf16.msra.mxu0 0
        %2201 = vmatpush.bf16.msra.mxu0 %v2192
        %2202 = vmatpush.bf16.msra.mxu0 %v2191
        %2203 = vmatmul.bf16.gmra.mxu0 %v716
        %v2204 = vpop.f32.mrf.mxu0
        %v2205 = vadd.f32 %v2119, %v2204
        %v2206 = vpop.f32.mrf.mxu0
        %2207 = vdwg.mxu0
        %v2212 = vunpack.c.l.b16 %v1806
        %v2213 = vunpack.c.l.b16 %v1807
        %v2214 = vunpack.c.l.b16 %v1808
        %v2215 = vunpack.c.l.b16 %v1809
        %v2216 = vpack.c.b16 %v2213, %v2212
        %v2217 = vpack.c.b16 %v2215, %v2214
        %2220 = vmatpush.bf16.msra.mxu0 0
        %2221 = vmatpush.bf16.msra.mxu0 0
        %2222 = vmatpush.bf16.msra.mxu0 0
        %2223 = vmatpush.bf16.msra.mxu0 0
        %2224 = vmatpush.bf16.msra.mxu0 0
        %2225 = vmatpush.bf16.msra.mxu0 0
        %2226 = vmatpush.bf16.msra.mxu0 %v2217
        %2227 = vmatpush.bf16.msra.mxu0 %v2216
        %2228 = vmatmul.bf16.gmra.mxu0 %v716
        %v2229 = vpop.f32.mrf.mxu0
        %v2230 = vadd.f32 %v2120, %v2229
        %v2231 = vpop.f32.mrf.mxu0
        %2232 = vdwg.mxu0
        %v2237 = vunpack.c.l.b16 %v1810
        %v2238 = vunpack.c.l.b16 %v1811
        %v2239 = vunpack.c.l.b16 %v1812
        %v2240 = vunpack.c.l.b16 %v1813
        %v2241 = vpack.c.b16 %v2238, %v2237
        %v2242 = vpack.c.b16 %v2240, %v2239
        %2245 = vmatpush.bf16.msra.mxu0 0
        %2246 = vmatpush.bf16.msra.mxu0 0
        %2247 = vmatpush.bf16.msra.mxu0 0
        %2248 = vmatpush.bf16.msra.mxu0 0
        %2249 = vmatpush.bf16.msra.mxu0 0
        %2250 = vmatpush.bf16.msra.mxu0 0
        %2251 = vmatpush.bf16.msra.mxu0 %v2242
        %2252 = vmatpush.bf16.msra.mxu0 %v2241
        %2253 = vmatmul.bf16.gmra.mxu0 %v716
        %v2254 = vpop.f32.mrf.mxu0
        %v2255 = vadd.f32 %v2121, %v2254
        %v2256 = vpop.f32.mrf.mxu0
        %2257 = vdwg.mxu0
        %v2262 = vunpack.c.l.b16 %v1814
        %v2263 = vunpack.c.l.b16 %v1815
        %v2264 = vunpack.c.l.b16 %v1816
        %v2265 = vunpack.c.l.b16 %v1817
        %v2266 = vpack.c.b16 %v2263, %v2262
        %v2267 = vpack.c.b16 %v2265, %v2264
        %2270 = vmatpush.bf16.msra.mxu0 0
        %2271 = vmatpush.bf16.msra.mxu0 0
        %2272 = vmatpush.bf16.msra.mxu0 0
        %2273 = vmatpush.bf16.msra.mxu0 0
        %2274 = vmatpush.bf16.msra.mxu0 0
        %2275 = vmatpush.bf16.msra.mxu0 0
        %2276 = vmatpush.bf16.msra.mxu0 %v2267
        %2277 = vmatpush.bf16.msra.mxu0 %v2266
        %2278 = vmatmul.bf16.gmra.mxu0 %v716
        %v2279 = vpop.f32.mrf.mxu0
        %v2280 = vadd.f32 %v2122, %v2279
        %v2281 = vpop.f32.mrf.mxu0
        %2282 = vdwg.mxu0
        %v2287 = vunpack.c.l.b16 %v1818
        %v2288 = vunpack.c.l.b16 %v1819
        %v2289 = vunpack.c.l.b16 %v1820
        %v2290 = vunpack.c.l.b16 %v1821
        %v2291 = vpack.c.b16 %v2288, %v2287
        %v2292 = vpack.c.b16 %v2290, %v2289
        %2295 = vmatpush.bf16.msra.mxu0 0
        %2296 = vmatpush.bf16.msra.mxu0 0
        %2297 = vmatpush.bf16.msra.mxu0 0
        %2298 = vmatpush.bf16.msra.mxu0 0
        %2299 = vmatpush.bf16.msra.mxu0 0
        %2300 = vmatpush.bf16.msra.mxu0 0
        %2301 = vmatpush.bf16.msra.mxu0 %v2292
        %2302 = vmatpush.bf16.msra.mxu0 %v2291
        %2303 = vmatmul.bf16.gmra.mxu0 %v716
        %v2304 = vpop.f32.mrf.mxu0
        %v2305 = vadd.f32 %v2123, %v2304
        %v2306 = vpop.f32.mrf.mxu0
        %2307 = vdwg.mxu0
        %v2312 = vunpack.c.l.b16 %v1822
        %v2313 = vunpack.c.l.b16 %v1823
        %v2314 = vunpack.c.l.b16 %v1824
        %v2315 = vunpack.c.l.b16 %v1825
        %v2316 = vpack.c.b16 %v2313, %v2312
        %v2317 = vpack.c.b16 %v2315, %v2314
        %2320 = vmatpush.bf16.msra.mxu0 0
        %2321 = vmatpush.bf16.msra.mxu0 0
        %2322 = vmatpush.bf16.msra.mxu0 0
        %2323 = vmatpush.bf16.msra.mxu0 0
        %2324 = vmatpush.bf16.msra.mxu0 0
        %2325 = vmatpush.bf16.msra.mxu0 0
        %2326 = vmatpush.bf16.msra.mxu0 %v2317
        %2327 = vmatpush.bf16.msra.mxu0 %v2316
        %2328 = vmatmul.bf16.gmra.mxu0 %v716
        %v2329 = vpop.f32.mrf.mxu0
        %v2330 = vadd.f32 %v2124, %v2329
        %v2331 = vpop.f32.mrf.mxu0
        %2332 = vdwg.mxu0
        %v2333 = vpack.c.bf16 %v2155, %v2155
        %v2334 = vpack.c.bf16 %v2180, %v2180
        %v2335 = vpack.c.bf16 %v2205, %v2205
        %v2336 = vpack.c.bf16 %v2230, %v2230
        %v2337 = vpack.c.bf16 %v2255, %v2255
        %v2338 = vpack.c.bf16 %v2280, %v2280
        %v2339 = vpack.c.bf16 %v2305, %v2305
        %v2340 = vpack.c.bf16 %v2330, %v2330
        %v2342 = vrot.slane %v1870, 1
        %v2343 = vrot.slane %v1870, 2
        %v2344 = vrot.slane %v1870, 3
        %v2345 = vrot.slane %v1870, 4
        %v2346 = vrot.slane %v1870, 5
        %v2347 = vrot.slane %v1870, 6
        %v2348 = vrot.slane %v1870, 7
        %v2349 = vperm.slane %v1870, 0
        %v2350 = vperm.slane %v2342, 0
        %v2351 = vperm.slane %v2343, 0
        %v2352 = vperm.slane %v2344, 0
        %v2353 = vperm.slane %v2345, 0
        %v2354 = vperm.slane %v2346, 0
        %v2355 = vperm.slane %v2347, 0
        %v2356 = vperm.slane %v2348, 0
        %v2369 = vunpack.c.l.b16 %v1826
        %v2370 = vunpack.c.l.b16 %v1827
        %v2371 = vunpack.c.l.b16 %v1828
        %v2372 = vunpack.c.l.b16 %v1829
        %v2373 = vpack.c.b16 %v2370, %v2369
        %v2374 = vpack.c.b16 %v2372, %v2371
        %2377 = vmatpush.bf16.msra.mxu0 0
        %2378 = vmatpush.bf16.msra.mxu0 0
        %2379 = vmatpush.bf16.msra.mxu0 0
        %2380 = vmatpush.bf16.msra.mxu0 0
        %2381 = vmatpush.bf16.msra.mxu0 0
        %2382 = vmatpush.bf16.msra.mxu0 0
        %2383 = vmatpush.bf16.msra.mxu0 %v2374
        %2384 = vmatpush.bf16.msra.mxu0 %v2373
        %2385 = vmatmul.bf16.gmra.mxu0 %v716
        %v2386 = vpop.f32.mrf.mxu0
        %v2387 = vadd.f32 %v2349, %v2386
        %v2388 = vpop.f32.mrf.mxu0
        %2389 = vdwg.mxu0
        %v2394 = vunpack.c.l.b16 %v1830
        %v2395 = vunpack.c.l.b16 %v1831
        %v2396 = vunpack.c.l.b16 %v1832
        %v2397 = vunpack.c.l.b16 %v1833
        %v2398 = vpack.c.b16 %v2395, %v2394
        %v2399 = vpack.c.b16 %v2397, %v2396
        %2402 = vmatpush.bf16.msra.mxu0 0
        %2403 = vmatpush.bf16.msra.mxu0 0
        %2404 = vmatpush.bf16.msra.mxu0 0
        %2405 = vmatpush.bf16.msra.mxu0 0
        %2406 = vmatpush.bf16.msra.mxu0 0
        %2407 = vmatpush.bf16.msra.mxu0 0
        %2408 = vmatpush.bf16.msra.mxu0 %v2399
        %2409 = vmatpush.bf16.msra.mxu0 %v2398
        %2410 = vmatmul.bf16.gmra.mxu0 %v716
        %v2411 = vpop.f32.mrf.mxu0
        %v2412 = vadd.f32 %v2350, %v2411
        %v2413 = vpop.f32.mrf.mxu0
        %2414 = vdwg.mxu0
        %v2419 = vunpack.c.l.b16 %v1834
        %v2420 = vunpack.c.l.b16 %v1835
        %v2421 = vunpack.c.l.b16 %v1836
        %v2422 = vunpack.c.l.b16 %v1837
        %v2423 = vpack.c.b16 %v2420, %v2419
        %v2424 = vpack.c.b16 %v2422, %v2421
        %2427 = vmatpush.bf16.msra.mxu0 0
        %2428 = vmatpush.bf16.msra.mxu0 0
        %2429 = vmatpush.bf16.msra.mxu0 0
        %2430 = vmatpush.bf16.msra.mxu0 0
        %2431 = vmatpush.bf16.msra.mxu0 0
        %2432 = vmatpush.bf16.msra.mxu0 0
        %2433 = vmatpush.bf16.msra.mxu0 %v2424
        %2434 = vmatpush.bf16.msra.mxu0 %v2423
        %2435 = vmatmul.bf16.gmra.mxu0 %v716
        %v2436 = vpop.f32.mrf.mxu0
        %v2437 = vadd.f32 %v2351, %v2436
        %v2438 = vpop.f32.mrf.mxu0
        %2439 = vdwg.mxu0
        %v2444 = vunpack.c.l.b16 %v1838
        %v2445 = vunpack.c.l.b16 %v1839
        %v2446 = vunpack.c.l.b16 %v1840
        %v2447 = vunpack.c.l.b16 %v1841
        %v2448 = vpack.c.b16 %v2445, %v2444
        %v2449 = vpack.c.b16 %v2447, %v2446
        %2452 = vmatpush.bf16.msra.mxu0 0
        %2453 = vmatpush.bf16.msra.mxu0 0
        %2454 = vmatpush.bf16.msra.mxu0 0
        %2455 = vmatpush.bf16.msra.mxu0 0
        %2456 = vmatpush.bf16.msra.mxu0 0
        %2457 = vmatpush.bf16.msra.mxu0 0
        %2458 = vmatpush.bf16.msra.mxu0 %v2449
        %2459 = vmatpush.bf16.msra.mxu0 %v2448
        %2460 = vmatmul.bf16.gmra.mxu0 %v716
        %v2461 = vpop.f32.mrf.mxu0
        %v2462 = vadd.f32 %v2352, %v2461
        %v2463 = vpop.f32.mrf.mxu0
        %2464 = vdwg.mxu0
        %v2469 = vunpack.c.l.b16 %v1842
        %v2470 = vunpack.c.l.b16 %v1843
        %v2471 = vunpack.c.l.b16 %v1844
        %v2472 = vunpack.c.l.b16 %v1845
        %v2473 = vpack.c.b16 %v2470, %v2469
        %v2474 = vpack.c.b16 %v2472, %v2471
        %2477 = vmatpush.bf16.msra.mxu0 0
        %2478 = vmatpush.bf16.msra.mxu0 0
        %2479 = vmatpush.bf16.msra.mxu0 0
        %2480 = vmatpush.bf16.msra.mxu0 0
        %2481 = vmatpush.bf16.msra.mxu0 0
        %2482 = vmatpush.bf16.msra.mxu0 0
        %2483 = vmatpush.bf16.msra.mxu0 %v2474
        %2484 = vmatpush.bf16.msra.mxu0 %v2473
        %2485 = vmatmul.bf16.gmra.mxu0 %v716
        %v2486 = vpop.f32.mrf.mxu0
        %v2487 = vadd.f32 %v2353, %v2486
        %v2488 = vpop.f32.mrf.mxu0
        %2489 = vdwg.mxu0
        %v2494 = vunpack.c.l.b16 %v1846
        %v2495 = vunpack.c.l.b16 %v1847
        %v2496 = vunpack.c.l.b16 %v1848
        %v2497 = vunpack.c.l.b16 %v1849
        %v2498 = vpack.c.b16 %v2495, %v2494
        %v2499 = vpack.c.b16 %v2497, %v2496
        %2502 = vmatpush.bf16.msra.mxu0 0
        %2503 = vmatpush.bf16.msra.mxu0 0
        %2504 = vmatpush.bf16.msra.mxu0 0
        %2505 = vmatpush.bf16.msra.mxu0 0
        %2506 = vmatpush.bf16.msra.mxu0 0
        %2507 = vmatpush.bf16.msra.mxu0 0
        %2508 = vmatpush.bf16.msra.mxu0 %v2499
        %2509 = vmatpush.bf16.msra.mxu0 %v2498
        %2510 = vmatmul.bf16.gmra.mxu0 %v716
        %v2511 = vpop.f32.mrf.mxu0
        %v2512 = vadd.f32 %v2354, %v2511
        %v2513 = vpop.f32.mrf.mxu0
        %2514 = vdwg.mxu0
        %v2519 = vunpack.c.l.b16 %v1850
        %v2520 = vunpack.c.l.b16 %v1851
        %v2521 = vunpack.c.l.b16 %v1852
        %v2522 = vunpack.c.l.b16 %v1853
        %v2523 = vpack.c.b16 %v2520, %v2519
        %v2524 = vpack.c.b16 %v2522, %v2521
        %2527 = vmatpush.bf16.msra.mxu0 0
        %2528 = vmatpush.bf16.msra.mxu0 0
        %2529 = vmatpush.bf16.msra.mxu0 0
        %2530 = vmatpush.bf16.msra.mxu0 0
        %2531 = vmatpush.bf16.msra.mxu0 0
        %2532 = vmatpush.bf16.msra.mxu0 0
        %2533 = vmatpush.bf16.msra.mxu0 %v2524
        %2534 = vmatpush.bf16.msra.mxu0 %v2523
        %2535 = vmatmul.bf16.gmra.mxu0 %v716
        %v2536 = vpop.f32.mrf.mxu0
        %v2537 = vadd.f32 %v2355, %v2536
        %v2538 = vpop.f32.mrf.mxu0
        %2539 = vdwg.mxu0
        %v2544 = vunpack.c.l.b16 %v1854
        %v2545 = vunpack.c.l.b16 %v1855
        %v2546 = vunpack.c.l.b16 %v1856
        %v2547 = vunpack.c.l.b16 %v1857
        %v2548 = vpack.c.b16 %v2545, %v2544
        %v2549 = vpack.c.b16 %v2547, %v2546
        %2552 = vmatpush.bf16.msra.mxu0 0
        %2553 = vmatpush.bf16.msra.mxu0 0
        %2554 = vmatpush.bf16.msra.mxu0 0
        %2555 = vmatpush.bf16.msra.mxu0 0
        %2556 = vmatpush.bf16.msra.mxu0 0
        %2557 = vmatpush.bf16.msra.mxu0 0
        %2558 = vmatpush.bf16.msra.mxu0 %v2549
        %2559 = vmatpush.bf16.msra.mxu0 %v2548
        %2560 = vmatmul.bf16.gmra.mxu0 %v716
        %v2561 = vpop.f32.mrf.mxu0
        %v2562 = vadd.f32 %v2356, %v2561
        %v2563 = vpop.f32.mrf.mxu0
        %2564 = vdwg.mxu0
        %v2565 = vpack.c.bf16 %v2387, %v2387
        %v2566 = vpack.c.bf16 %v2412, %v2412
        %v2567 = vpack.c.bf16 %v2437, %v2437
        %v2568 = vpack.c.bf16 %v2462, %v2462
        %v2569 = vpack.c.bf16 %v2487, %v2487
        %v2570 = vpack.c.bf16 %v2512, %v2512
        %v2571 = vpack.c.bf16 %v2537, %v2537
        %v2572 = vpack.c.bf16 %v2562, %v2562
        %v2574 = vsel %vm1146, %v2101, 0
        %v2577 = vsel %vm1146, %v2333, 0
        %2579 = vmatpush.bf16.xpose.msra.mxu0 0
        %2580 = vmatpush.bf16.xpose.msra.mxu0 0
        %2581 = vmatpush.bf16.xpose.msra.mxu0 0
        %2582 = vmatpush.bf16.xpose.msra.mxu0 0
        %2583 = vmatpush.bf16.xpose.msra.mxu0 0
        %2584 = vmatpush.bf16.xpose.msra.mxu0 0
        %2585 = vmatpush.bf16.xpose.msra.mxu0 0
        %2586 = vmatpush.bf16.xpose.msra.mxu0 %v2577
        %2587 = vmatmul.bf16.gmra.mxu0 %v2574
        %v2588 = vpop.f32.mrf.mxu0
        %v2589 = vadd.f32 0.0, %v2588
        %v2590 = vpop.f32.mrf.mxu0
        %2591 = vdwg.mxu0
        %v2593 = vsel %vm1146, %v2102, 0
        %v2596 = vsel %vm1146, %v2334, 0
        %2598 = vmatpush.bf16.xpose.msra.mxu0 0
        %2599 = vmatpush.bf16.xpose.msra.mxu0 0
        %2600 = vmatpush.bf16.xpose.msra.mxu0 0
        %2601 = vmatpush.bf16.xpose.msra.mxu0 0
        %2602 = vmatpush.bf16.xpose.msra.mxu0 0
        %2603 = vmatpush.bf16.xpose.msra.mxu0 0
        %2604 = vmatpush.bf16.xpose.msra.mxu0 0
        %2605 = vmatpush.bf16.xpose.msra.mxu0 %v2596
        %2606 = vmatmul.bf16.gmra.mxu0 %v2593
        %v2607 = vpop.f32.mrf.mxu0
        %v2608 = vadd.f32 0.0, %v2607
        %v2609 = vpop.f32.mrf.mxu0
        %2610 = vdwg.mxu0
        %v2612 = vsel %vm1146, %v2103, 0
        %v2615 = vsel %vm1146, %v2335, 0
        %2617 = vmatpush.bf16.xpose.msra.mxu0 0
        %2618 = vmatpush.bf16.xpose.msra.mxu0 0
        %2619 = vmatpush.bf16.xpose.msra.mxu0 0
        %2620 = vmatpush.bf16.xpose.msra.mxu0 0
        %2621 = vmatpush.bf16.xpose.msra.mxu0 0
        %2622 = vmatpush.bf16.xpose.msra.mxu0 0
        %2623 = vmatpush.bf16.xpose.msra.mxu0 0
        %2624 = vmatpush.bf16.xpose.msra.mxu0 %v2615
        %2625 = vmatmul.bf16.gmra.mxu0 %v2612
        %v2626 = vpop.f32.mrf.mxu0
        %v2627 = vadd.f32 0.0, %v2626
        %v2628 = vpop.f32.mrf.mxu0
        %2629 = vdwg.mxu0
        %v2631 = vsel %vm1146, %v2104, 0
        %v2634 = vsel %vm1146, %v2336, 0
        %2636 = vmatpush.bf16.xpose.msra.mxu0 0
        %2637 = vmatpush.bf16.xpose.msra.mxu0 0
        %2638 = vmatpush.bf16.xpose.msra.mxu0 0
        %2639 = vmatpush.bf16.xpose.msra.mxu0 0
        %2640 = vmatpush.bf16.xpose.msra.mxu0 0
        %2641 = vmatpush.bf16.xpose.msra.mxu0 0
        %2642 = vmatpush.bf16.xpose.msra.mxu0 0
        %2643 = vmatpush.bf16.xpose.msra.mxu0 %v2634
        %2644 = vmatmul.bf16.gmra.mxu0 %v2631
        %v2645 = vpop.f32.mrf.mxu0
        %v2646 = vadd.f32 0.0, %v2645
        %v2647 = vpop.f32.mrf.mxu0
        %2648 = vdwg.mxu0
        %v2650 = vsel %vm1146, %v2105, 0
        %v2653 = vsel %vm1146, %v2337, 0
        %2655 = vmatpush.bf16.xpose.msra.mxu0 0
        %2656 = vmatpush.bf16.xpose.msra.mxu0 0
        %2657 = vmatpush.bf16.xpose.msra.mxu0 0
        %2658 = vmatpush.bf16.xpose.msra.mxu0 0
        %2659 = vmatpush.bf16.xpose.msra.mxu0 0
        %2660 = vmatpush.bf16.xpose.msra.mxu0 0
        %2661 = vmatpush.bf16.xpose.msra.mxu0 0
        %2662 = vmatpush.bf16.xpose.msra.mxu0 %v2653
        %2663 = vmatmul.bf16.gmra.mxu0 %v2650
        %v2664 = vpop.f32.mrf.mxu0
        %v2665 = vadd.f32 0.0, %v2664
        %v2666 = vpop.f32.mrf.mxu0
        %2667 = vdwg.mxu0
        %v2669 = vsel %vm1146, %v2106, 0
        %v2672 = vsel %vm1146, %v2338, 0
        %2674 = vmatpush.bf16.xpose.msra.mxu0 0
        %2675 = vmatpush.bf16.xpose.msra.mxu0 0
        %2676 = vmatpush.bf16.xpose.msra.mxu0 0
        %2677 = vmatpush.bf16.xpose.msra.mxu0 0
        %2678 = vmatpush.bf16.xpose.msra.mxu0 0
        %2679 = vmatpush.bf16.xpose.msra.mxu0 0
        %2680 = vmatpush.bf16.xpose.msra.mxu0 0
        %2681 = vmatpush.bf16.xpose.msra.mxu0 %v2672
        %2682 = vmatmul.bf16.gmra.mxu0 %v2669
        %v2683 = vpop.f32.mrf.mxu0
        %v2684 = vadd.f32 0.0, %v2683
        %v2685 = vpop.f32.mrf.mxu0
        %2686 = vdwg.mxu0
        %v2688 = vsel %vm1146, %v2107, 0
        %v2691 = vsel %vm1146, %v2339, 0
        %2693 = vmatpush.bf16.xpose.msra.mxu0 0
        %2694 = vmatpush.bf16.xpose.msra.mxu0 0
        %2695 = vmatpush.bf16.xpose.msra.mxu0 0
        %2696 = vmatpush.bf16.xpose.msra.mxu0 0
        %2697 = vmatpush.bf16.xpose.msra.mxu0 0
        %2698 = vmatpush.bf16.xpose.msra.mxu0 0
        %2699 = vmatpush.bf16.xpose.msra.mxu0 0
        %2700 = vmatpush.bf16.xpose.msra.mxu0 %v2691
        %2701 = vmatmul.bf16.gmra.mxu0 %v2688
        %v2702 = vpop.f32.mrf.mxu0
        %v2703 = vadd.f32 0.0, %v2702
        %v2704 = vpop.f32.mrf.mxu0
        %2705 = vdwg.mxu0
        %v2707 = vsel %vm1146, %v2108, 0
        %v2710 = vsel %vm1146, %v2340, 0
        %2712 = vmatpush.bf16.xpose.msra.mxu0 0
        %2713 = vmatpush.bf16.xpose.msra.mxu0 0
        %2714 = vmatpush.bf16.xpose.msra.mxu0 0
        %2715 = vmatpush.bf16.xpose.msra.mxu0 0
        %2716 = vmatpush.bf16.xpose.msra.mxu0 0
        %2717 = vmatpush.bf16.xpose.msra.mxu0 0
        %2718 = vmatpush.bf16.xpose.msra.mxu0 0
        %2719 = vmatpush.bf16.xpose.msra.mxu0 %v2710
        %2720 = vmatmul.bf16.gmra.mxu0 %v2707
        %v2721 = vpop.f32.mrf.mxu0
        %v2722 = vadd.f32 0.0, %v2721
        %v2723 = vpop.f32.mrf.mxu0
        %2724 = vdwg.mxu0
        %v2725 = vsel %vm1299, %v2589, -inf
        %2726 = vmax.xlane.f32.xlu0 %v2725
        %v2727 = vpop.xlane.xlu0 %2726
        %v2728 = vsel %vm1299, %v2608, -inf
        %2729 = vmax.xlane.f32.xlu0 %v2728
        %v2730 = vpop.xlane.xlu0 %2729
        %v2731 = vsel %vm1299, %v2627, -inf
        %2732 = vmax.xlane.f32.xlu0 %v2731
        %v2733 = vpop.xlane.xlu0 %2732
        %v2734 = vsel %vm1299, %v2646, -inf
        %2735 = vmax.xlane.f32.xlu0 %v2734
        %v2736 = vpop.xlane.xlu0 %2735
        %v2737 = vsel %vm1299, %v2665, -inf
        %2738 = vmax.xlane.f32.xlu0 %v2737
        %v2739 = vpop.xlane.xlu0 %2738
        %v2740 = vsel %vm1299, %v2684, -inf
        %2741 = vmax.xlane.f32.xlu0 %v2740
        %v2742 = vpop.xlane.xlu0 %2741
        %v2743 = vsel %vm1299, %v2703, -inf
        %2744 = vmax.xlane.f32.xlu0 %v2743
        %v2745 = vpop.xlane.xlu0 %2744
        %v2746 = vsel %vm1299, %v2722, -inf
        %2747 = vmax.xlane.f32.xlu0 %v2746
        %v2748 = vpop.xlane.xlu0 %2747
        %v2749 = vsub.f32 %v2589, %v2727
        %v2750 = vsub.f32 %v2608, %v2730
        %v2751 = vsub.f32 %v2627, %v2733
        %v2752 = vsub.f32 %v2646, %v2736
        %v2753 = vsub.f32 %v2665, %v2739
        %v2754 = vsub.f32 %v2684, %v2742
        %v2755 = vsub.f32 %v2703, %v2745
        %v2756 = vsub.f32 %v2722, %v2748
        %v2757 = vmul.f32 %v2749, 1.442695
        %v2758 = vpow.pop %v2757
        %v2759 = vmul.f32 %v2750, 1.442695
        %v2760 = vpow.pop %v2759
        %v2761 = vmul.f32 %v2751, 1.442695
        %v2762 = vpow.pop %v2761
        %v2763 = vmul.f32 %v2752, 1.442695
        %v2764 = vpow.pop %v2763
        %v2765 = vmul.f32 %v2753, 1.442695
        %v2766 = vpow.pop %v2765
        %v2767 = vmul.f32 %v2754, 1.442695
        %v2768 = vpow.pop %v2767
        %v2769 = vmul.f32 %v2755, 1.442695
        %v2770 = vpow.pop %v2769
        %v2771 = vmul.f32 %v2756, 1.442695
        %v2772 = vpow.pop %v2771
        %v2773 = vsel %vm1299, %v2758, 0.0
        %2774 = vadd.xlane.f32.xlu0 %v2773
        %v2775 = vpop.xlane.xlu0 %2774
        %v2776 = vsel %vm1299, %v2760, 0.0
        %2777 = vadd.xlane.f32.xlu0 %v2776
        %v2778 = vpop.xlane.xlu0 %2777
        %v2779 = vsel %vm1299, %v2762, 0.0
        %2780 = vadd.xlane.f32.xlu0 %v2779
        %v2781 = vpop.xlane.xlu0 %2780
        %v2782 = vsel %vm1299, %v2764, 0.0
        %2783 = vadd.xlane.f32.xlu0 %v2782
        %v2784 = vpop.xlane.xlu0 %2783
        %v2785 = vsel %vm1299, %v2766, 0.0
        %2786 = vadd.xlane.f32.xlu0 %v2785
        %v2787 = vpop.xlane.xlu0 %2786
        %v2788 = vsel %vm1299, %v2768, 0.0
        %2789 = vadd.xlane.f32.xlu0 %v2788
        %v2790 = vpop.xlane.xlu0 %2789
        %v2791 = vsel %vm1299, %v2770, 0.0
        %2792 = vadd.xlane.f32.xlu0 %v2791
        %v2793 = vpop.xlane.xlu0 %2792
        %v2794 = vsel %vm1299, %v2772, 0.0
        %2795 = vadd.xlane.f32.xlu0 %v2794
        %v2796 = vpop.xlane.xlu0 %2795
        %v2797 = vpack.c.bf16 %v2758, %v2758
        %v2798 = vpack.c.bf16 %v2760, %v2760
        %v2799 = vpack.c.bf16 %v2762, %v2762
        %v2800 = vpack.c.bf16 %v2764, %v2764
        %v2801 = vpack.c.bf16 %v2766, %v2766
        %v2802 = vpack.c.bf16 %v2768, %v2768
        %v2803 = vpack.c.bf16 %v2770, %v2770
        %v2804 = vpack.c.bf16 %v2772, %v2772
        %v2806 = vsel %vm1299, %v2797, 0
        %v2809 = vsel %vm1383, %v2565, 0
        %2811 = vmatpush.bf16.msra.mxu0 0
        %2812 = vmatpush.bf16.msra.mxu0 0
        %2813 = vmatpush.bf16.msra.mxu0 0
        %2814 = vmatpush.bf16.msra.mxu0 0
        %2815 = vmatpush.bf16.msra.mxu0 0
        %2816 = vmatpush.bf16.msra.mxu0 0
        %2817 = vmatpush.bf16.msra.mxu0 0
        %2818 = vmatpush.bf16.msra.mxu0 %v2809
        %2819 = vmatmul.bf16.gmra.mxu0 %v2806
        %v2820 = vpop.f32.mrf.mxu0
        %v2821 = vadd.f32 0.0, %v2820
        %v2822 = vpop.f32.mrf.mxu0
        %2823 = vdwg.mxu0
        %v2825 = vsel %vm1299, %v2798, 0
        %v2828 = vsel %vm1383, %v2566, 0
        %2830 = vmatpush.bf16.msra.mxu0 0
        %2831 = vmatpush.bf16.msra.mxu0 0
        %2832 = vmatpush.bf16.msra.mxu0 0
        %2833 = vmatpush.bf16.msra.mxu0 0
        %2834 = vmatpush.bf16.msra.mxu0 0
        %2835 = vmatpush.bf16.msra.mxu0 0
        %2836 = vmatpush.bf16.msra.mxu0 0
        %2837 = vmatpush.bf16.msra.mxu0 %v2828
        %2838 = vmatmul.bf16.gmra.mxu0 %v2825
        %v2839 = vpop.f32.mrf.mxu0
        %v2840 = vadd.f32 0.0, %v2839
        %v2841 = vpop.f32.mrf.mxu0
        %2842 = vdwg.mxu0
        %v2844 = vsel %vm1299, %v2799, 0
        %v2847 = vsel %vm1383, %v2567, 0
        %2849 = vmatpush.bf16.msra.mxu0 0
        %2850 = vmatpush.bf16.msra.mxu0 0
        %2851 = vmatpush.bf16.msra.mxu0 0
        %2852 = vmatpush.bf16.msra.mxu0 0
        %2853 = vmatpush.bf16.msra.mxu0 0
        %2854 = vmatpush.bf16.msra.mxu0 0
        %2855 = vmatpush.bf16.msra.mxu0 0
        %2856 = vmatpush.bf16.msra.mxu0 %v2847
        %2857 = vmatmul.bf16.gmra.mxu0 %v2844
        %v2858 = vpop.f32.mrf.mxu0
        %v2859 = vadd.f32 0.0, %v2858
        %v2860 = vpop.f32.mrf.mxu0
        %2861 = vdwg.mxu0
        %v2863 = vsel %vm1299, %v2800, 0
        %v2866 = vsel %vm1383, %v2568, 0
        %2868 = vmatpush.bf16.msra.mxu0 0
        %2869 = vmatpush.bf16.msra.mxu0 0
        %2870 = vmatpush.bf16.msra.mxu0 0
        %2871 = vmatpush.bf16.msra.mxu0 0
        %2872 = vmatpush.bf16.msra.mxu0 0
        %2873 = vmatpush.bf16.msra.mxu0 0
        %2874 = vmatpush.bf16.msra.mxu0 0
        %2875 = vmatpush.bf16.msra.mxu0 %v2866
        %2876 = vmatmul.bf16.gmra.mxu0 %v2863
        %v2877 = vpop.f32.mrf.mxu0
        %v2878 = vadd.f32 0.0, %v2877
        %v2879 = vpop.f32.mrf.mxu0
        %2880 = vdwg.mxu0
        %v2882 = vsel %vm1299, %v2801, 0
        %v2885 = vsel %vm1383, %v2569, 0
        %2887 = vmatpush.bf16.msra.mxu0 0
        %2888 = vmatpush.bf16.msra.mxu0 0
        %2889 = vmatpush.bf16.msra.mxu0 0
        %2890 = vmatpush.bf16.msra.mxu0 0
        %2891 = vmatpush.bf16.msra.mxu0 0
        %2892 = vmatpush.bf16.msra.mxu0 0
        %2893 = vmatpush.bf16.msra.mxu0 0
        %2894 = vmatpush.bf16.msra.mxu0 %v2885
        %2895 = vmatmul.bf16.gmra.mxu0 %v2882
        %v2896 = vpop.f32.mrf.mxu0
        %v2897 = vadd.f32 0.0, %v2896
        %v2898 = vpop.f32.mrf.mxu0
        %2899 = vdwg.mxu0
        %v2901 = vsel %vm1299, %v2802, 0
        %v2904 = vsel %vm1383, %v2570, 0
        %2906 = vmatpush.bf16.msra.mxu0 0
        %2907 = vmatpush.bf16.msra.mxu0 0
        %2908 = vmatpush.bf16.msra.mxu0 0
        %2909 = vmatpush.bf16.msra.mxu0 0
        %2910 = vmatpush.bf16.msra.mxu0 0
        %2911 = vmatpush.bf16.msra.mxu0 0
        %2912 = vmatpush.bf16.msra.mxu0 0
        %2913 = vmatpush.bf16.msra.mxu0 %v2904
        %2914 = vmatmul.bf16.gmra.mxu0 %v2901
        %v2915 = vpop.f32.mrf.mxu0
        %v2916 = vadd.f32 0.0, %v2915
        %v2917 = vpop.f32.mrf.mxu0
        %2918 = vdwg.mxu0
        %v2920 = vsel %vm1299, %v2803, 0
        %v2923 = vsel %vm1383, %v2571, 0
        %2925 = vmatpush.bf16.msra.mxu0 0
        %2926 = vmatpush.bf16.msra.mxu0 0
        %2927 = vmatpush.bf16.msra.mxu0 0
        %2928 = vmatpush.bf16.msra.mxu0 0
        %2929 = vmatpush.bf16.msra.mxu0 0
        %2930 = vmatpush.bf16.msra.mxu0 0
        %2931 = vmatpush.bf16.msra.mxu0 0
        %2932 = vmatpush.bf16.msra.mxu0 %v2923
        %2933 = vmatmul.bf16.gmra.mxu0 %v2920
        %v2934 = vpop.f32.mrf.mxu0
        %v2935 = vadd.f32 0.0, %v2934
        %v2936 = vpop.f32.mrf.mxu0
        %2937 = vdwg.mxu0
        %v2939 = vsel %vm1299, %v2804, 0
        %v2942 = vsel %vm1383, %v2572, 0
        %2944 = vmatpush.bf16.msra.mxu0 0
        %2945 = vmatpush.bf16.msra.mxu0 0
        %2946 = vmatpush.bf16.msra.mxu0 0
        %2947 = vmatpush.bf16.msra.mxu0 0
        %2948 = vmatpush.bf16.msra.mxu0 0
        %2949 = vmatpush.bf16.msra.mxu0 0
        %2950 = vmatpush.bf16.msra.mxu0 0
        %2951 = vmatpush.bf16.msra.mxu0 %v2942
        %2952 = vmatmul.bf16.gmra.mxu0 %v2939
        %v2953 = vpop.f32.mrf.mxu0
        %v2954 = vadd.f32 0.0, %v2953
        %v2955 = vpop.f32.mrf.mxu0
        %2956 = vdwg.mxu0
        %v2957 = vrcp.pop %v2775
        %v2958 = vrcp.pop %v2778
        %v2959 = vrcp.pop %v2781
        %v2960 = vrcp.pop %v2784
        %v2961 = vrcp.pop %v2787
        %v2962 = vrcp.pop %v2790
        %v2963 = vrcp.pop %v2793
        %v2964 = vrcp.pop %v2796
        %v2965 = vmul.f32 %v2821, %v2957
        %v2966 = vmul.f32 %v2840, %v2958
        %v2967 = vmul.f32 %v2859, %v2959
        %v2968 = vmul.f32 %v2878, %v2960
        %v2969 = vmul.f32 %v2897, %v2961
        %v2970 = vmul.f32 %v2916, %v2962
        %v2971 = vmul.f32 %v2935, %v2963
        %v2972 = vmul.f32 %v2954, %v2964
        %v2973 = vpack.c.bf16 %v2965, %v2965
        %v2974 = vpack.c.bf16 %v2966, %v2966
        %v2975 = vpack.c.bf16 %v2967, %v2967
        %v2976 = vpack.c.bf16 %v2968, %v2968
        %v2977 = vpack.c.bf16 %v2969, %v2969
        %v2978 = vpack.c.bf16 %v2970, %v2970
        %v2979 = vpack.c.bf16 %v2971, %v2971
        %v2980 = vpack.c.bf16 %v2972, %v2972
        %v2982 = vsel %vm1146, %v2973, 0
        %v2985 = vsel %vm1560, %v1859, 0
        %2987 = vmatpush.bf16.msra.mxu0 0
        %2988 = vmatpush.bf16.msra.mxu0 0
        %2989 = vmatpush.bf16.msra.mxu0 0
        %2990 = vmatpush.bf16.msra.mxu0 0
        %2991 = vmatpush.bf16.msra.mxu0 0
        %2992 = vmatpush.bf16.msra.mxu0 0
        %2993 = vmatpush.bf16.msra.mxu0 0
        %2994 = vmatpush.bf16.msra.mxu0 %v2985
        %2995 = vmatmul.bf16.gmra.mxu0 %v2982
        %v2996 = vpop.f32.mrf.mxu0
        %v2997 = vadd.f32 0.0, %v2996
        %v2998 = vpop.f32.mrf.mxu0
        %2999 = vdwg.mxu0
        %v3001 = vsel %vm1146, %v2974, 0
        %v3004 = vsel %vm1560, %v1860, 0
        %3006 = vmatpush.bf16.msra.mxu0 0
        %3007 = vmatpush.bf16.msra.mxu0 0
        %3008 = vmatpush.bf16.msra.mxu0 0
        %3009 = vmatpush.bf16.msra.mxu0 0
        %3010 = vmatpush.bf16.msra.mxu0 0
        %3011 = vmatpush.bf16.msra.mxu0 0
        %3012 = vmatpush.bf16.msra.mxu0 0
        %3013 = vmatpush.bf16.msra.mxu0 %v3004
        %3014 = vmatmul.bf16.gmra.mxu0 %v3001
        %v3015 = vpop.f32.mrf.mxu0
        %v3016 = vadd.f32 0.0, %v3015
        %v3017 = vpop.f32.mrf.mxu0
        %3018 = vdwg.mxu0
        %v3020 = vsel %vm1146, %v2975, 0
        %v3023 = vsel %vm1560, %v1861, 0
        %3025 = vmatpush.bf16.msra.mxu0 0
        %3026 = vmatpush.bf16.msra.mxu0 0
        %3027 = vmatpush.bf16.msra.mxu0 0
        %3028 = vmatpush.bf16.msra.mxu0 0
        %3029 = vmatpush.bf16.msra.mxu0 0
        %3030 = vmatpush.bf16.msra.mxu0 0
        %3031 = vmatpush.bf16.msra.mxu0 0
        %3032 = vmatpush.bf16.msra.mxu0 %v3023
        %3033 = vmatmul.bf16.gmra.mxu0 %v3020
        %v3034 = vpop.f32.mrf.mxu0
        %v3035 = vadd.f32 0.0, %v3034
        %v3036 = vpop.f32.mrf.mxu0
        %3037 = vdwg.mxu0
        %v3039 = vsel %vm1146, %v2976, 0
        %v3042 = vsel %vm1560, %v1862, 0
        %3044 = vmatpush.bf16.msra.mxu0 0
        %3045 = vmatpush.bf16.msra.mxu0 0
        %3046 = vmatpush.bf16.msra.mxu0 0
        %3047 = vmatpush.bf16.msra.mxu0 0
        %3048 = vmatpush.bf16.msra.mxu0 0
        %3049 = vmatpush.bf16.msra.mxu0 0
        %3050 = vmatpush.bf16.msra.mxu0 0
        %3051 = vmatpush.bf16.msra.mxu0 %v3042
        %3052 = vmatmul.bf16.gmra.mxu0 %v3039
        %v3053 = vpop.f32.mrf.mxu0
        %v3054 = vadd.f32 0.0, %v3053
        %v3055 = vpop.f32.mrf.mxu0
        %3056 = vdwg.mxu0
        %v3058 = vsel %vm1146, %v2977, 0
        %v3061 = vsel %vm1560, %v1863, 0
        %3063 = vmatpush.bf16.msra.mxu0 0
        %3064 = vmatpush.bf16.msra.mxu0 0
        %3065 = vmatpush.bf16.msra.mxu0 0
        %3066 = vmatpush.bf16.msra.mxu0 0
        %3067 = vmatpush.bf16.msra.mxu0 0
        %3068 = vmatpush.bf16.msra.mxu0 0
        %3069 = vmatpush.bf16.msra.mxu0 0
        %3070 = vmatpush.bf16.msra.mxu0 %v3061
        %3071 = vmatmul.bf16.gmra.mxu0 %v3058
        %v3072 = vpop.f32.mrf.mxu0
        %v3073 = vadd.f32 0.0, %v3072
        %v3074 = vpop.f32.mrf.mxu0
        %3075 = vdwg.mxu0
        %v3077 = vsel %vm1146, %v2978, 0
        %v3080 = vsel %vm1560, %v1864, 0
        %3082 = vmatpush.bf16.msra.mxu0 0
        %3083 = vmatpush.bf16.msra.mxu0 0
        %3084 = vmatpush.bf16.msra.mxu0 0
        %3085 = vmatpush.bf16.msra.mxu0 0
        %3086 = vmatpush.bf16.msra.mxu0 0
        %3087 = vmatpush.bf16.msra.mxu0 0
        %3088 = vmatpush.bf16.msra.mxu0 0
        %3089 = vmatpush.bf16.msra.mxu0 %v3080
        %3090 = vmatmul.bf16.gmra.mxu0 %v3077
        %v3091 = vpop.f32.mrf.mxu0
        %v3092 = vadd.f32 0.0, %v3091
        %v3093 = vpop.f32.mrf.mxu0
        %3094 = vdwg.mxu0
        %v3096 = vsel %vm1146, %v2979, 0
        %v3099 = vsel %vm1560, %v1865, 0
        %3101 = vmatpush.bf16.msra.mxu0 0
        %3102 = vmatpush.bf16.msra.mxu0 0
        %3103 = vmatpush.bf16.msra.mxu0 0
        %3104 = vmatpush.bf16.msra.mxu0 0
        %3105 = vmatpush.bf16.msra.mxu0 0
        %3106 = vmatpush.bf16.msra.mxu0 0
        %3107 = vmatpush.bf16.msra.mxu0 0
        %3108 = vmatpush.bf16.msra.mxu0 %v3099
        %3109 = vmatmul.bf16.gmra.mxu0 %v3096
        %v3110 = vpop.f32.mrf.mxu0
        %v3111 = vadd.f32 0.0, %v3110
        %v3112 = vpop.f32.mrf.mxu0
        %3113 = vdwg.mxu0
        %v3115 = vsel %vm1146, %v2980, 0
        %v3118 = vsel %vm1560, %v1866, 0
        %3120 = vmatpush.bf16.msra.mxu0 0
        %3121 = vmatpush.bf16.msra.mxu0 0
        %3122 = vmatpush.bf16.msra.mxu0 0
        %3123 = vmatpush.bf16.msra.mxu0 0
        %3124 = vmatpush.bf16.msra.mxu0 0
        %3125 = vmatpush.bf16.msra.mxu0 0
        %3126 = vmatpush.bf16.msra.mxu0 0
        %3127 = vmatpush.bf16.msra.mxu0 %v3118
        %3128 = vmatmul.bf16.gmra.mxu0 %v3115
        %v3129 = vpop.f32.mrf.mxu0
        %v3130 = vadd.f32 0.0, %v3129
        %v3131 = vpop.f32.mrf.mxu0
        %3132 = vdwg.mxu0
        %v3133 = vsel %vm479, %v2997, 0.0
        %v3134 = vsel %vm479, %v3016, 0.0
        %v3135 = vadd.f32 %v3133, %v3134
        %v3136 = vsel %vm479, %v3035, 0.0
        %v3137 = vadd.f32 %v3135, %v3136
        %v3138 = vsel %vm479, %v3054, 0.0
        %v3139 = vadd.f32 %v3137, %v3138
        %v3140 = vsel %vm479, %v3073, 0.0
        %v3141 = vadd.f32 %v3139, %v3140
        %v3142 = vsel %vm479, %v3092, 0.0
        %v3143 = vadd.f32 %v3141, %v3142
        %v3144 = vsel %vm479, %v3111, 0.0
        %v3145 = vadd.f32 %v3143, %v3144
        %v3146 = vsel %vm479, %v3130, 0.0
        %v3147 = vadd.f32 %v3145, %v3146
        %v3148 = vperm.slane %v1872, 0
        %v3149 = vadd.f32 %v3147, %v3148
        %v3150 = vadd.f32 %v1760, %v3149
        %v3151 = vsel %vm479, %v3150, 0.0
        %3152 = vadd.xlane.f32.xlu0 %v3151
        %v3153 = vpop.xlane.xlu0 %3152
        %v3154 = vmul.f32 %v3153, %v1737
        %v3155 = vsub.f32 %v3150, %v3154
        %v3156 = vmul.f32 %v3155, %v3155
        %v3157 = vsel %vm479, %v3156, 0.0
        %3158 = vadd.xlane.f32.xlu0 %v3157
        %v3159 = vpop.xlane.xlu0 %3158
        %v3160 = vmul.f32 %v3159, %v1737
        %v3161 = vadd.f32 %v3160, 1e-05
        %v3162 = vrsqrt.pop %v3161
        %v3163 = vmul.f32 %v3162, %v3161
        %v3164 = vmul.f32 %v3163, %v3162
        %v3165 = vmul.f32 0.5, %v3164
        %v3166 = vsub.f32 1.5, %v3165
        %v3167 = vmul.f32 %v3162, %v3166
        %vm3168 = vweird.f32 %v3161
        %vm3169 = vweird.f32 %v3162
        %vm3170 = vmor %vm3168, %vm3169
        %v3171 = vsel %vm3170, %v3162, %v3167
        %v3172 = vmul.f32 %v3155, %v3171
        %v3173 = vperm.slane %v1872, 1
        %v3174 = vmul.f32 %v3172, %v3173
        %v3175 = vperm.slane %v1872, 2
        %v3176 = vadd.f32 %v3174, %v3175
        %s3177 = scalar_lea.vmem %s4, 768
        %v3178 = vld [vmem:[%s3177] sm:$0xf]
        %v3179 = vld [vmem:[%s3177 + $0x4] sm:$0xf]
        %v3180 = vld [vmem:[%s3177 + $0x8] sm:$0xf]
        %v3181 = vld [vmem:[%s3177 + $0xc] sm:$0xf]
        %v3182 = vld [vmem:[%s3177 + $0x10] sm:$0xf]
        %v3183 = vld [vmem:[%s3177 + $0x14] sm:$0xf]
        %v3184 = vld [vmem:[%s3177 + $0x18] sm:$0xf]
        %v3185 = vld [vmem:[%s3177 + $0x1c] sm:$0xf]
        %v3186 = vld [vmem:[%s3177 + $0x20] sm:$0xf]
        %v3187 = vld [vmem:[%s3177 + $0x24] sm:$0xf]
        %v3188 = vld [vmem:[%s3177 + $0x28] sm:$0xf]
        %v3189 = vld [vmem:[%s3177 + $0x2c] sm:$0xf]
        %v3190 = vld [vmem:[%s3177 + $0x30] sm:$0xf]
        %v3191 = vld [vmem:[%s3177 + $0x34] sm:$0xf]
        %v3192 = vld [vmem:[%s3177 + $0x38] sm:$0xf]
        %v3193 = vld [vmem:[%s3177 + $0x3c] sm:$0xf]
        %v3194 = vld [vmem:[%s3177 + $0x40] sm:$0xf]
        %v3195 = vld [vmem:[%s3177 + $0x44] sm:$0xf]
        %v3196 = vld [vmem:[%s3177 + $0x48] sm:$0xf]
        %v3197 = vld [vmem:[%s3177 + $0x4c] sm:$0xf]
        %v3198 = vld [vmem:[%s3177 + $0x50] sm:$0xf]
        %v3199 = vld [vmem:[%s3177 + $0x54] sm:$0xf]
        %v3200 = vld [vmem:[%s3177 + $0x58] sm:$0xf]
        %v3201 = vld [vmem:[%s3177 + $0x5c] sm:$0xf]
        %v3202 = vld [vmem:[%s3177 + $0x60] sm:$0xf]
        %v3203 = vld [vmem:[%s3177 + $0x64] sm:$0xf]
        %v3204 = vld [vmem:[%s3177 + $0x68] sm:$0xf]
        %v3205 = vld [vmem:[%s3177 + $0x6c] sm:$0xf]
        %v3206 = vld [vmem:[%s3177 + $0x70] sm:$0xf]
        %v3207 = vld [vmem:[%s3177 + $0x74] sm:$0xf]
        %v3208 = vld [vmem:[%s3177 + $0x78] sm:$0xf]
        %v3209 = vld [vmem:[%s3177 + $0x7c] sm:$0xf]
        %v3210 = vld [vmem:[%s3177 + $0x80] sm:$0xf]
        %v3211 = vld [vmem:[%s3177 + $0x84] sm:$0xf]
        %v3212 = vld [vmem:[%s3177 + $0x88] sm:$0xf]
        %v3213 = vld [vmem:[%s3177 + $0x8c] sm:$0xf]
        %v3214 = vld [vmem:[%s3177 + $0x90] sm:$0xf]
        %v3215 = vld [vmem:[%s3177 + $0x94] sm:$0xf]
        %v3216 = vld [vmem:[%s3177 + $0x98] sm:$0xf]
        %v3217 = vld [vmem:[%s3177 + $0x9c] sm:$0xf]
        %v3218 = vld [vmem:[%s3177 + $0xa0] sm:$0xf]
        %v3219 = vld [vmem:[%s3177 + $0xa4] sm:$0xf]
        %v3220 = vld [vmem:[%s3177 + $0xa8] sm:$0xf]
        %v3221 = vld [vmem:[%s3177 + $0xac] sm:$0xf]
        %v3222 = vld [vmem:[%s3177 + $0xb0] sm:$0xf]
        %v3223 = vld [vmem:[%s3177 + $0xb4] sm:$0xf]
        %v3224 = vld [vmem:[%s3177 + $0xb8] sm:$0xf]
        %v3225 = vld [vmem:[%s3177 + $0xbc] sm:$0xf]
        %v3226 = vld [vmem:[%s3177 + $0xc0] sm:$0xf]
        %v3227 = vld [vmem:[%s3177 + $0xc4] sm:$0xf]
        %v3228 = vld [vmem:[%s3177 + $0xc8] sm:$0xf]
        %v3229 = vld [vmem:[%s3177 + $0xcc] sm:$0xf]
        %v3230 = vld [vmem:[%s3177 + $0xd0] sm:$0xf]
        %v3231 = vld [vmem:[%s3177 + $0xd4] sm:$0xf]
        %v3232 = vld [vmem:[%s3177 + $0xd8] sm:$0xf]
        %v3233 = vld [vmem:[%s3177 + $0xdc] sm:$0xf]
        %v3234 = vld [vmem:[%s3177 + $0xe0] sm:$0xf]
        %v3235 = vld [vmem:[%s3177 + $0xe4] sm:$0xf]
        %v3236 = vld [vmem:[%s3177 + $0xe8] sm:$0xf]
        %v3237 = vld [vmem:[%s3177 + $0xec] sm:$0xf]
        %v3238 = vld [vmem:[%s3177 + $0xf0] sm:$0xf]
        %v3239 = vld [vmem:[%s3177 + $0xf4] sm:$0xf]
        %v3240 = vld [vmem:[%s3177 + $0xf8] sm:$0xf]
        %v3241 = vld [vmem:[%s3177 + $0xfc] sm:$0xf]
        %v3242 = vld [vmem:[%s3177 + $0x100] sm:$0xf]
        %v3243 = vld [vmem:[%s3177 + $0x104] sm:$0xf]
        %v3244 = vld [vmem:[%s3177 + $0x108] sm:$0xf]
        %v3245 = vld [vmem:[%s3177 + $0x10c] sm:$0xf]
        %v3246 = vld [vmem:[%s3177 + $0x110] sm:$0xf]
        %v3247 = vld [vmem:[%s3177 + $0x114] sm:$0xf]
        %v3248 = vld [vmem:[%s3177 + $0x118] sm:$0xf]
        %v3249 = vld [vmem:[%s3177 + $0x11c] sm:$0xf]
        %v3250 = vld [vmem:[%s3177 + $0x120] sm:$0xf]
        %v3251 = vld [vmem:[%s3177 + $0x124] sm:$0xf]
        %v3252 = vld [vmem:[%s3177 + $0x128] sm:$0xf]
        %v3253 = vld [vmem:[%s3177 + $0x12c] sm:$0xf]
        %v3254 = vld [vmem:[%s3177 + $0x130] sm:$0xf]
        %v3255 = vld [vmem:[%s3177 + $0x134] sm:$0xf]
        %v3256 = vld [vmem:[%s3177 + $0x138] sm:$0xf]
        %v3257 = vld [vmem:[%s3177 + $0x13c] sm:$0xf]
        %v3258 = vld [vmem:[%s3177 + $0x140] sm:$0xf]
        %v3259 = vld [vmem:[%s3177 + $0x144] sm:$0xf]
        %v3260 = vld [vmem:[%s3177 + $0x148] sm:$0xf]
        %v3261 = vld [vmem:[%s3177 + $0x14c] sm:$0xf]
        %v3262 = vld [vmem:[%s3177 + $0x150] sm:$0xf]
        %v3263 = vld [vmem:[%s3177 + $0x154] sm:$0xf]
        %v3264 = vld [vmem:[%s3177 + $0x158] sm:$0xf]
        %v3265 = vld [vmem:[%s3177 + $0x15c] sm:$0xf]
        %v3266 = vld [vmem:[%s3177 + $0x160] sm:$0xf]
        %v3267 = vld [vmem:[%s3177 + $0x164] sm:$0xf]
        %v3268 = vld [vmem:[%s3177 + $0x168] sm:$0xf]
        %v3269 = vld [vmem:[%s3177 + $0x16c] sm:$0xf]
        %v3270 = vld [vmem:[%s3177 + $0x170] sm:$0xf]
        %v3271 = vld [vmem:[%s3177 + $0x174] sm:$0xf]
        %v3272 = vld [vmem:[%s3177 + $0x178] sm:$0xf]
        %v3273 = vld [vmem:[%s3177 + $0x17c] sm:$0xf]
        %s3274 = scalar_lea.vmem %s5, 32
        %v3275 = vld [vmem:[%s3274] sm:$0x3]
        %v3276 = vld [vmem:[%s3274 + $0x2] sm:$0x3]
        %v3277 = vld [vmem:[%s3274 + $0x4] sm:$0x3]
        %v3278 = vld [vmem:[%s3274 + $0x6] sm:$0x3]
        %v3279 = vld [vmem:[%s3274 + $0x8] sm:$0x3]
        %v3280 = vld [vmem:[%s3274 + $0xa] sm:$0x3]
        %v3281 = vld [vmem:[%s3274 + $0xc] sm:$0x3]
        %v3282 = vld [vmem:[%s3274 + $0xe] sm:$0x3]
        %s3283 = scalar_lea.vmem %s6, 48
        %v3284 = vld [vmem:[%s3283] sm:$0xff]
        %v3285 = vld [vmem:[%s3283 + $0x8] sm:$0xff]
        %v3286 = vld [vmem:[%s3283 + $0x10] sm:$0xff]
        %s3287 = scalar_lea.vmem %s7, 8
        %v3288 = vld [vmem:[%s3287] sm:$0x7]
        %v3289 = vpack.c.bf16 %v3176, %v3176
        %v3291 = vrot.slane %v3284, 1
        %v3292 = vrot.slane %v3284, 2
        %v3293 = vrot.slane %v3284, 3
        %v3294 = vrot.slane %v3284, 4
        %v3295 = vrot.slane %v3284, 5
        %v3296 = vrot.slane %v3284, 6
        %v3297 = vrot.slane %v3284, 7
        %v3298 = vperm.slane %v3284, 0
        %v3299 = vperm.slane %v3291, 0
        %v3300 = vperm.slane %v3292, 0
        %v3301 = vperm.slane %v3293, 0
        %v3302 = vperm.slane %v3294, 0
        %v3303 = vperm.slane %v3295, 0
        %v3304 = vperm.slane %v3296, 0
        %v3305 = vperm.slane %v3297, 0
        %v3318 = vunpack.c.l.b16 %v3178
        %v3319 = vunpack.c.l.b16 %v3179
        %v3320 = vunpack.c.l.b16 %v3180
        %v3321 = vunpack.c.l.b16 %v3181
        %v3322 = vpack.c.b16 %v3319, %v3318
        %v3323 = vpack.c.b16 %v3321, %v3320
        %v3327 = vsel %vm479, %v3289, 0
        %3329 = vmatpush.bf16.msra.mxu0 0
        %3330 = vmatpush.bf16.msra.mxu0 0
        %3331 = vmatpush.bf16.msra.mxu0 0
        %3332 = vmatpush.bf16.msra.mxu0 0
        %3333 = vmatpush.bf16.msra.mxu0 0
        %3334 = vmatpush.bf16.msra.mxu0 0
        %3335 = vmatpush.bf16.msra.mxu0 %v3323
        %3336 = vmatpush.bf16.msra.mxu0 %v3322
        %3337 = vmatmul.bf16.gmra.mxu0 %v3327
        %v3338 = vpop.f32.mrf.mxu0
        %v3339 = vadd.f32 %v3298, %v3338
        %v3340 = vpop.f32.mrf.mxu0
        %3341 = vdwg.mxu0
        %v3346 = vunpack.c.l.b16 %v3182
        %v3347 = vunpack.c.l.b16 %v3183
        %v3348 = vunpack.c.l.b16 %v3184
        %v3349 = vunpack.c.l.b16 %v3185
        %v3350 = vpack.c.b16 %v3347, %v3346
        %v3351 = vpack.c.b16 %v3349, %v3348
        %3354 = vmatpush.bf16.msra.mxu0 0
        %3355 = vmatpush.bf16.msra.mxu0 0
        %3356 = vmatpush.bf16.msra.mxu0 0
        %3357 = vmatpush.bf16.msra.mxu0 0
        %3358 = vmatpush.bf16.msra.mxu0 0
        %3359 = vmatpush.bf16.msra.mxu0 0
        %3360 = vmatpush.bf16.msra.mxu0 %v3351
        %3361 = vmatpush.bf16.msra.mxu0 %v3350
        %3362 = vmatmul.bf16.gmra.mxu0 %v3327
        %v3363 = vpop.f32.mrf.mxu0
        %v3364 = vadd.f32 %v3299, %v3363
        %v3365 = vpop.f32.mrf.mxu0
        %3366 = vdwg.mxu0
        %v3371 = vunpack.c.l.b16 %v3186
        %v3372 = vunpack.c.l.b16 %v3187
        %v3373 = vunpack.c.l.b16 %v3188
        %v3374 = vunpack.c.l.b16 %v3189
        %v3375 = vpack.c.b16 %v3372, %v3371
        %v3376 = vpack.c.b16 %v3374, %v3373
        %3379 = vmatpush.bf16.msra.mxu0 0
        %3380 = vmatpush.bf16.msra.mxu0 0
        %3381 = vmatpush.bf16.msra.mxu0 0
        %3382 = vmatpush.bf16.msra.mxu0 0
        %3383 = vmatpush.bf16.msra.mxu0 0
        %3384 = vmatpush.bf16.msra.mxu0 0
        %3385 = vmatpush.bf16.msra.mxu0 %v3376
        %3386 = vmatpush.bf16.msra.mxu0 %v3375
        %3387 = vmatmul.bf16.gmra.mxu0 %v3327
        %v3388 = vpop.f32.mrf.mxu0
        %v3389 = vadd.f32 %v3300, %v3388
        %v3390 = vpop.f32.mrf.mxu0
        %3391 = vdwg.mxu0
        %v3396 = vunpack.c.l.b16 %v3190
        %v3397 = vunpack.c.l.b16 %v3191
        %v3398 = vunpack.c.l.b16 %v3192
        %v3399 = vunpack.c.l.b16 %v3193
        %v3400 = vpack.c.b16 %v3397, %v3396
        %v3401 = vpack.c.b16 %v3399, %v3398
        %3404 = vmatpush.bf16.msra.mxu0 0
        %3405 = vmatpush.bf16.msra.mxu0 0
        %3406 = vmatpush.bf16.msra.mxu0 0
        %3407 = vmatpush.bf16.msra.mxu0 0
        %3408 = vmatpush.bf16.msra.mxu0 0
        %3409 = vmatpush.bf16.msra.mxu0 0
        %3410 = vmatpush.bf16.msra.mxu0 %v3401
        %3411 = vmatpush.bf16.msra.mxu0 %v3400
        %3412 = vmatmul.bf16.gmra.mxu0 %v3327
        %v3413 = vpop.f32.mrf.mxu0
        %v3414 = vadd.f32 %v3301, %v3413
        %v3415 = vpop.f32.mrf.mxu0
        %3416 = vdwg.mxu0
        %v3421 = vunpack.c.l.b16 %v3194
        %v3422 = vunpack.c.l.b16 %v3195
        %v3423 = vunpack.c.l.b16 %v3196
        %v3424 = vunpack.c.l.b16 %v3197
        %v3425 = vpack.c.b16 %v3422, %v3421
        %v3426 = vpack.c.b16 %v3424, %v3423
        %3429 = vmatpush.bf16.msra.mxu0 0
        %3430 = vmatpush.bf16.msra.mxu0 0
        %3431 = vmatpush.bf16.msra.mxu0 0
        %3432 = vmatpush.bf16.msra.mxu0 0
        %3433 = vmatpush.bf16.msra.mxu0 0
        %3434 = vmatpush.bf16.msra.mxu0 0
        %3435 = vmatpush.bf16.msra.mxu0 %v3426
        %3436 = vmatpush.bf16.msra.mxu0 %v3425
        %3437 = vmatmul.bf16.gmra.mxu0 %v3327
        %v3438 = vpop.f32.mrf.mxu0
        %v3439 = vadd.f32 %v3302, %v3438
        %v3440 = vpop.f32.mrf.mxu0
        %3441 = vdwg.mxu0
        %v3446 = vunpack.c.l.b16 %v3198
        %v3447 = vunpack.c.l.b16 %v3199
        %v3448 = vunpack.c.l.b16 %v3200
        %v3449 = vunpack.c.l.b16 %v3201
        %v3450 = vpack.c.b16 %v3447, %v3446
        %v3451 = vpack.c.b16 %v3449, %v3448
        %3454 = vmatpush.bf16.msra.mxu0 0
        %3455 = vmatpush.bf16.msra.mxu0 0
        %3456 = vmatpush.bf16.msra.mxu0 0
        %3457 = vmatpush.bf16.msra.mxu0 0
        %3458 = vmatpush.bf16.msra.mxu0 0
        %3459 = vmatpush.bf16.msra.mxu0 0
        %3460 = vmatpush.bf16.msra.mxu0 %v3451
        %3461 = vmatpush.bf16.msra.mxu0 %v3450
        %3462 = vmatmul.bf16.gmra.mxu0 %v3327
        %v3463 = vpop.f32.mrf.mxu0
        %v3464 = vadd.f32 %v3303, %v3463
        %v3465 = vpop.f32.mrf.mxu0
        %3466 = vdwg.mxu0
        %v3471 = vunpack.c.l.b16 %v3202
        %v3472 = vunpack.c.l.b16 %v3203
        %v3473 = vunpack.c.l.b16 %v3204
        %v3474 = vunpack.c.l.b16 %v3205
        %v3475 = vpack.c.b16 %v3472, %v3471
        %v3476 = vpack.c.b16 %v3474, %v3473
        %3479 = vmatpush.bf16.msra.mxu0 0
        %3480 = vmatpush.bf16.msra.mxu0 0
        %3481 = vmatpush.bf16.msra.mxu0 0
        %3482 = vmatpush.bf16.msra.mxu0 0
        %3483 = vmatpush.bf16.msra.mxu0 0
        %3484 = vmatpush.bf16.msra.mxu0 0
        %3485 = vmatpush.bf16.msra.mxu0 %v3476
        %3486 = vmatpush.bf16.msra.mxu0 %v3475
        %3487 = vmatmul.bf16.gmra.mxu0 %v3327
        %v3488 = vpop.f32.mrf.mxu0
        %v3489 = vadd.f32 %v3304, %v3488
        %v3490 = vpop.f32.mrf.mxu0
        %3491 = vdwg.mxu0
        %v3496 = vunpack.c.l.b16 %v3206
        %v3497 = vunpack.c.l.b16 %v3207
        %v3498 = vunpack.c.l.b16 %v3208
        %v3499 = vunpack.c.l.b16 %v3209
        %v3500 = vpack.c.b16 %v3497, %v3496
        %v3501 = vpack.c.b16 %v3499, %v3498
        %3504 = vmatpush.bf16.msra.mxu0 0
        %3505 = vmatpush.bf16.msra.mxu0 0
        %3506 = vmatpush.bf16.msra.mxu0 0
        %3507 = vmatpush.bf16.msra.mxu0 0
        %3508 = vmatpush.bf16.msra.mxu0 0
        %3509 = vmatpush.bf16.msra.mxu0 0
        %3510 = vmatpush.bf16.msra.mxu0 %v3501
        %3511 = vmatpush.bf16.msra.mxu0 %v3500
        %3512 = vmatmul.bf16.gmra.mxu0 %v3327
        %v3513 = vpop.f32.mrf.mxu0
        %v3514 = vadd.f32 %v3305, %v3513
        %v3515 = vpop.f32.mrf.mxu0
        %3516 = vdwg.mxu0
        %v3517 = vpack.c.bf16 %v3339, %v3339
        %v3518 = vpack.c.bf16 %v3364, %v3364
        %v3519 = vpack.c.bf16 %v3389, %v3389
        %v3520 = vpack.c.bf16 %v3414, %v3414
        %v3521 = vpack.c.bf16 %v3439, %v3439
        %v3522 = vpack.c.bf16 %v3464, %v3464
        %v3523 = vpack.c.bf16 %v3489, %v3489
        %v3524 = vpack.c.bf16 %v3514, %v3514
        %v3526 = vrot.slane %v3285, 1
        %v3527 = vrot.slane %v3285, 2
        %v3528 = vrot.slane %v3285, 3
        %v3529 = vrot.slane %v3285, 4
        %v3530 = vrot.slane %v3285, 5
        %v3531 = vrot.slane %v3285, 6
        %v3532 = vrot.slane %v3285, 7
        %v3533 = vperm.slane %v3285, 0
        %v3534 = vperm.slane %v3526, 0
        %v3535 = vperm.slane %v3527, 0
        %v3536 = vperm.slane %v3528, 0
        %v3537 = vperm.slane %v3529, 0
        %v3538 = vperm.slane %v3530, 0
        %v3539 = vperm.slane %v3531, 0
        %v3540 = vperm.slane %v3532, 0
        %v3553 = vunpack.c.l.b16 %v3210
        %v3554 = vunpack.c.l.b16 %v3211
        %v3555 = vunpack.c.l.b16 %v3212
        %v3556 = vunpack.c.l.b16 %v3213
        %v3557 = vpack.c.b16 %v3554, %v3553
        %v3558 = vpack.c.b16 %v3556, %v3555
        %3561 = vmatpush.bf16.msra.mxu0 0
        %3562 = vmatpush.bf16.msra.mxu0 0
        %3563 = vmatpush.bf16.msra.mxu0 0
        %3564 = vmatpush.bf16.msra.mxu0 0
        %3565 = vmatpush.bf16.msra.mxu0 0
        %3566 = vmatpush.bf16.msra.mxu0 0
        %3567 = vmatpush.bf16.msra.mxu0 %v3558
        %3568 = vmatpush.bf16.msra.mxu0 %v3557
        %3569 = vmatmul.bf16.gmra.mxu0 %v716
        %v3570 = vpop.f32.mrf.mxu0
        %v3571 = vadd.f32 %v3533, %v3570
        %v3572 = vpop.f32.mrf.mxu0
        %3573 = vdwg.mxu0
        %v3578 = vunpack.c.l.b16 %v3214
        %v3579 = vunpack.c.l.b16 %v3215
        %v3580 = vunpack.c.l.b16 %v3216
        %v3581 = vunpack.c.l.b16 %v3217
        %v3582 = vpack.c.b16 %v3579, %v3578
        %v3583 = vpack.c.b16 %v3581, %v3580
        %3586 = vmatpush.bf16.msra.mxu0 0
        %3587 = vmatpush.bf16.msra.mxu0 0
        %3588 = vmatpush.bf16.msra.mxu0 0
        %3589 = vmatpush.bf16.msra.mxu0 0
        %3590 = vmatpush.bf16.msra.mxu0 0
        %3591 = vmatpush.bf16.msra.mxu0 0
        %3592 = vmatpush.bf16.msra.mxu0 %v3583
        %3593 = vmatpush.bf16.msra.mxu0 %v3582
        %3594 = vmatmul.bf16.gmra.mxu0 %v716
        %v3595 = vpop.f32.mrf.mxu0
        %v3596 = vadd.f32 %v3534, %v3595
        %v3597 = vpop.f32.mrf.mxu0
        %3598 = vdwg.mxu0
        %v3603 = vunpack.c.l.b16 %v3218
        %v3604 = vunpack.c.l.b16 %v3219
        %v3605 = vunpack.c.l.b16 %v3220
        %v3606 = vunpack.c.l.b16 %v3221
        %v3607 = vpack.c.b16 %v3604, %v3603
        %v3608 = vpack.c.b16 %v3606, %v3605
        %3611 = vmatpush.bf16.msra.mxu0 0
        %3612 = vmatpush.bf16.msra.mxu0 0
        %3613 = vmatpush.bf16.msra.mxu0 0
        %3614 = vmatpush.bf16.msra.mxu0 0
        %3615 = vmatpush.bf16.msra.mxu0 0
        %3616 = vmatpush.bf16.msra.mxu0 0
        %3617 = vmatpush.bf16.msra.mxu0 %v3608
        %3618 = vmatpush.bf16.msra.mxu0 %v3607
        %3619 = vmatmul.bf16.gmra.mxu0 %v716
        %v3620 = vpop.f32.mrf.mxu0
        %v3621 = vadd.f32 %v3535, %v3620
        %v3622 = vpop.f32.mrf.mxu0
        %3623 = vdwg.mxu0
        %v3628 = vunpack.c.l.b16 %v3222
        %v3629 = vunpack.c.l.b16 %v3223
        %v3630 = vunpack.c.l.b16 %v3224
        %v3631 = vunpack.c.l.b16 %v3225
        %v3632 = vpack.c.b16 %v3629, %v3628
        %v3633 = vpack.c.b16 %v3631, %v3630
        %3636 = vmatpush.bf16.msra.mxu0 0
        %3637 = vmatpush.bf16.msra.mxu0 0
        %3638 = vmatpush.bf16.msra.mxu0 0
        %3639 = vmatpush.bf16.msra.mxu0 0
        %3640 = vmatpush.bf16.msra.mxu0 0
        %3641 = vmatpush.bf16.msra.mxu0 0
        %3642 = vmatpush.bf16.msra.mxu0 %v3633
        %3643 = vmatpush.bf16.msra.mxu0 %v3632
        %3644 = vmatmul.bf16.gmra.mxu0 %v716
        %v3645 = vpop.f32.mrf.mxu0
        %v3646 = vadd.f32 %v3536, %v3645
        %v3647 = vpop.f32.mrf.mxu0
        %3648 = vdwg.mxu0
        %v3653 = vunpack.c.l.b16 %v3226
        %v3654 = vunpack.c.l.b16 %v3227
        %v3655 = vunpack.c.l.b16 %v3228
        %v3656 = vunpack.c.l.b16 %v3229
        %v3657 = vpack.c.b16 %v3654, %v3653
        %v3658 = vpack.c.b16 %v3656, %v3655
        %3661 = vmatpush.bf16.msra.mxu0 0
        %3662 = vmatpush.bf16.msra.mxu0 0
        %3663 = vmatpush.bf16.msra.mxu0 0
        %3664 = vmatpush.bf16.msra.mxu0 0
        %3665 = vmatpush.bf16.msra.mxu0 0
        %3666 = vmatpush.bf16.msra.mxu0 0
        %3667 = vmatpush.bf16.msra.mxu0 %v3658
        %3668 = vmatpush.bf16.msra.mxu0 %v3657
        %3669 = vmatmul.bf16.gmra.mxu0 %v716
        %v3670 = vpop.f32.mrf.mxu0
        %v3671 = vadd.f32 %v3537, %v3670
        %v3672 = vpop.f32.mrf.mxu0
        %3673 = vdwg.mxu0
        %v3678 = vunpack.c.l.b16 %v3230
        %v3679 = vunpack.c.l.b16 %v3231
        %v3680 = vunpack.c.l.b16 %v3232
        %v3681 = vunpack.c.l.b16 %v3233
        %v3682 = vpack.c.b16 %v3679, %v3678
        %v3683 = vpack.c.b16 %v3681, %v3680
        %3686 = vmatpush.bf16.msra.mxu0 0
        %3687 = vmatpush.bf16.msra.mxu0 0
        %3688 = vmatpush.bf16.msra.mxu0 0
        %3689 = vmatpush.bf16.msra.mxu0 0
        %3690 = vmatpush.bf16.msra.mxu0 0
        %3691 = vmatpush.bf16.msra.mxu0 0
        %3692 = vmatpush.bf16.msra.mxu0 %v3683
        %3693 = vmatpush.bf16.msra.mxu0 %v3682
        %3694 = vmatmul.bf16.gmra.mxu0 %v716
        %v3695 = vpop.f32.mrf.mxu0
        %v3696 = vadd.f32 %v3538, %v3695
        %v3697 = vpop.f32.mrf.mxu0
        %3698 = vdwg.mxu0
        %v3703 = vunpack.c.l.b16 %v3234
        %v3704 = vunpack.c.l.b16 %v3235
        %v3705 = vunpack.c.l.b16 %v3236
        %v3706 = vunpack.c.l.b16 %v3237
        %v3707 = vpack.c.b16 %v3704, %v3703
        %v3708 = vpack.c.b16 %v3706, %v3705
        %3711 = vmatpush.bf16.msra.mxu0 0
        %3712 = vmatpush.bf16.msra.mxu0 0
        %3713 = vmatpush.bf16.msra.mxu0 0
        %3714 = vmatpush.bf16.msra.mxu0 0
        %3715 = vmatpush.bf16.msra.mxu0 0
        %3716 = vmatpush.bf16.msra.mxu0 0
        %3717 = vmatpush.bf16.msra.mxu0 %v3708
        %3718 = vmatpush.bf16.msra.mxu0 %v3707
        %3719 = vmatmul.bf16.gmra.mxu0 %v716
        %v3720 = vpop.f32.mrf.mxu0
        %v3721 = vadd.f32 %v3539, %v3720
        %v3722 = vpop.f32.mrf.mxu0
        %3723 = vdwg.mxu0
        %v3728 = vunpack.c.l.b16 %v3238
        %v3729 = vunpack.c.l.b16 %v3239
        %v3730 = vunpack.c.l.b16 %v3240
        %v3731 = vunpack.c.l.b16 %v3241
        %v3732 = vpack.c.b16 %v3729, %v3728
        %v3733 = vpack.c.b16 %v3731, %v3730
        %3736 = vmatpush.bf16.msra.mxu0 0
        %3737 = vmatpush.bf16.msra.mxu0 0
        %3738 = vmatpush.bf16.msra.mxu0 0
        %3739 = vmatpush.bf16.msra.mxu0 0
        %3740 = vmatpush.bf16.msra.mxu0 0
        %3741 = vmatpush.bf16.msra.mxu0 0
        %3742 = vmatpush.bf16.msra.mxu0 %v3733
        %3743 = vmatpush.bf16.msra.mxu0 %v3732
        %3744 = vmatmul.bf16.gmra.mxu0 %v716
        %v3745 = vpop.f32.mrf.mxu0
        %v3746 = vadd.f32 %v3540, %v3745
        %v3747 = vpop.f32.mrf.mxu0
        %3748 = vdwg.mxu0
        %v3749 = vpack.c.bf16 %v3571, %v3571
        %v3750 = vpack.c.bf16 %v3596, %v3596
        %v3751 = vpack.c.bf16 %v3621, %v3621
        %v3752 = vpack.c.bf16 %v3646, %v3646
        %v3753 = vpack.c.bf16 %v3671, %v3671
        %v3754 = vpack.c.bf16 %v3696, %v3696
        %v3755 = vpack.c.bf16 %v3721, %v3721
        %v3756 = vpack.c.bf16 %v3746, %v3746
        %v3758 = vrot.slane %v3286, 1
        %v3759 = vrot.slane %v3286, 2
        %v3760 = vrot.slane %v3286, 3
        %v3761 = vrot.slane %v3286, 4
        %v3762 = vrot.slane %v3286, 5
        %v3763 = vrot.slane %v3286, 6
        %v3764 = vrot.slane %v3286, 7
        %v3765 = vperm.slane %v3286, 0
        %v3766 = vperm.slane %v3758, 0
        %v3767 = vperm.slane %v3759, 0
        %v3768 = vperm.slane %v3760, 0
        %v3769 = vperm.slane %v3761, 0
        %v3770 = vperm.slane %v3762, 0
        %v3771 = vperm.slane %v3763, 0
        %v3772 = vperm.slane %v3764, 0
        %v3785 = vunpack.c.l.b16 %v3242
        %v3786 = vunpack.c.l.b16 %v3243
        %v3787 = vunpack.c.l.b16 %v3244
        %v3788 = vunpack.c.l.b16 %v3245
        %v3789 = vpack.c.b16 %v3786, %v3785
        %v3790 = vpack.c.b16 %v3788, %v3787
        %3793 = vmatpush.bf16.msra.mxu0 0
        %3794 = vmatpush.bf16.msra.mxu0 0
        %3795 = vmatpush.bf16.msra.mxu0 0
        %3796 = vmatpush.bf16.msra.mxu0 0
        %3797 = vmatpush.bf16.msra.mxu0 0
        %3798 = vmatpush.bf16.msra.mxu0 0
        %3799 = vmatpush.bf16.msra.mxu0 %v3790
        %3800 = vmatpush.bf16.msra.mxu0 %v3789
        %3801 = vmatmul.bf16.gmra.mxu0 %v716
        %v3802 = vpop.f32.mrf.mxu0
        %v3803 = vadd.f32 %v3765, %v3802
        %v3804 = vpop.f32.mrf.mxu0
        %3805 = vdwg.mxu0
        %v3810 = vunpack.c.l.b16 %v3246
        %v3811 = vunpack.c.l.b16 %v3247
        %v3812 = vunpack.c.l.b16 %v3248
        %v3813 = vunpack.c.l.b16 %v3249
        %v3814 = vpack.c.b16 %v3811, %v3810
        %v3815 = vpack.c.b16 %v3813, %v3812
        %3818 = vmatpush.bf16.msra.mxu0 0
        %3819 = vmatpush.bf16.msra.mxu0 0
        %3820 = vmatpush.bf16.msra.mxu0 0
        %3821 = vmatpush.bf16.msra.mxu0 0
        %3822 = vmatpush.bf16.msra.mxu0 0
        %3823 = vmatpush.bf16.msra.mxu0 0
        %3824 = vmatpush.bf16.msra.mxu0 %v3815
        %3825 = vmatpush.bf16.msra.mxu0 %v3814
        %3826 = vmatmul.bf16.gmra.mxu0 %v716
        %v3827 = vpop.f32.mrf.mxu0
        %v3828 = vadd.f32 %v3766, %v3827
        %v3829 = vpop.f32.mrf.mxu0
        %3830 = vdwg.mxu0
        %v3835 = vunpack.c.l.b16 %v3250
        %v3836 = vunpack.c.l.b16 %v3251
        %v3837 = vunpack.c.l.b16 %v3252
        %v3838 = vunpack.c.l.b16 %v3253
        %v3839 = vpack.c.b16 %v3836, %v3835
        %v3840 = vpack.c.b16 %v3838, %v3837
        %3843 = vmatpush.bf16.msra.mxu0 0
        %3844 = vmatpush.bf16.msra.mxu0 0
        %3845 = vmatpush.bf16.msra.mxu0 0
        %3846 = vmatpush.bf16.msra.mxu0 0
        %3847 = vmatpush.bf16.msra.mxu0 0
        %3848 = vmatpush.bf16.msra.mxu0 0
        %3849 = vmatpush.bf16.msra.mxu0 %v3840
        %3850 = vmatpush.bf16.msra.mxu0 %v3839
        %3851 = vmatmul.bf16.gmra.mxu0 %v716
        %v3852 = vpop.f32.mrf.mxu0
        %v3853 = vadd.f32 %v3767, %v3852
        %v3854 = vpop.f32.mrf.mxu0
        %3855 = vdwg.mxu0
        %v3860 = vunpack.c.l.b16 %v3254
        %v3861 = vunpack.c.l.b16 %v3255
        %v3862 = vunpack.c.l.b16 %v3256
        %v3863 = vunpack.c.l.b16 %v3257
        %v3864 = vpack.c.b16 %v3861, %v3860
        %v3865 = vpack.c.b16 %v3863, %v3862
        %3868 = vmatpush.bf16.msra.mxu0 0
        %3869 = vmatpush.bf16.msra.mxu0 0
        %3870 = vmatpush.bf16.msra.mxu0 0
        %3871 = vmatpush.bf16.msra.mxu0 0
        %3872 = vmatpush.bf16.msra.mxu0 0
        %3873 = vmatpush.bf16.msra.mxu0 0
        %3874 = vmatpush.bf16.msra.mxu0 %v3865
        %3875 = vmatpush.bf16.msra.mxu0 %v3864
        %3876 = vmatmul.bf16.gmra.mxu0 %v716
        %v3877 = vpop.f32.mrf.mxu0
        %v3878 = vadd.f32 %v3768, %v3877
        %v3879 = vpop.f32.mrf.mxu0
        %3880 = vdwg.mxu0
        %v3885 = vunpack.c.l.b16 %v3258
        %v3886 = vunpack.c.l.b16 %v3259
        %v3887 = vunpack.c.l.b16 %v3260
        %v3888 = vunpack.c.l.b16 %v3261
        %v3889 = vpack.c.b16 %v3886, %v3885
        %v3890 = vpack.c.b16 %v3888, %v3887
        %3893 = vmatpush.bf16.msra.mxu0 0
        %3894 = vmatpush.bf16.msra.mxu0 0
        %3895 = vmatpush.bf16.msra.mxu0 0
        %3896 = vmatpush.bf16.msra.mxu0 0
        %3897 = vmatpush.bf16.msra.mxu0 0
        %3898 = vmatpush.bf16.msra.mxu0 0
        %3899 = vmatpush.bf16.msra.mxu0 %v3890
        %3900 = vmatpush.bf16.msra.mxu0 %v3889
        %3901 = vmatmul.bf16.gmra.mxu0 %v716
        %v3902 = vpop.f32.mrf.mxu0
        %v3903 = vadd.f32 %v3769, %v3902
        %v3904 = vpop.f32.mrf.mxu0
        %3905 = vdwg.mxu0
        %v3910 = vunpack.c.l.b16 %v3262
        %v3911 = vunpack.c.l.b16 %v3263
        %v3912 = vunpack.c.l.b16 %v3264
        %v3913 = vunpack.c.l.b16 %v3265
        %v3914 = vpack.c.b16 %v3911, %v3910
        %v3915 = vpack.c.b16 %v3913, %v3912
        %3918 = vmatpush.bf16.msra.mxu0 0
        %3919 = vmatpush.bf16.msra.mxu0 0
        %3920 = vmatpush.bf16.msra.mxu0 0
        %3921 = vmatpush.bf16.msra.mxu0 0
        %3922 = vmatpush.bf16.msra.mxu0 0
        %3923 = vmatpush.bf16.msra.mxu0 0
        %3924 = vmatpush.bf16.msra.mxu0 %v3915
        %3925 = vmatpush.bf16.msra.mxu0 %v3914
        %3926 = vmatmul.bf16.gmra.mxu0 %v716
        %v3927 = vpop.f32.mrf.mxu0
        %v3928 = vadd.f32 %v3770, %v3927
        %v3929 = vpop.f32.mrf.mxu0
        %3930 = vdwg.mxu0
        %v3935 = vunpack.c.l.b16 %v3266
        %v3936 = vunpack.c.l.b16 %v3267
        %v3937 = vunpack.c.l.b16 %v3268
        %v3938 = vunpack.c.l.b16 %v3269
        %v3939 = vpack.c.b16 %v3936, %v3935
        %v3940 = vpack.c.b16 %v3938, %v3937
        %3943 = vmatpush.bf16.msra.mxu0 0
        %3944 = vmatpush.bf16.msra.mxu0 0
        %3945 = vmatpush.bf16.msra.mxu0 0
        %3946 = vmatpush.bf16.msra.mxu0 0
        %3947 = vmatpush.bf16.msra.mxu0 0
        %3948 = vmatpush.bf16.msra.mxu0 0
        %3949 = vmatpush.bf16.msra.mxu0 %v3940
        %3950 = vmatpush.bf16.msra.mxu0 %v3939
        %3951 = vmatmul.bf16.gmra.mxu0 %v716
        %v3952 = vpop.f32.mrf.mxu0
        %v3953 = vadd.f32 %v3771, %v3952
        %v3954 = vpop.f32.mrf.mxu0
        %3955 = vdwg.mxu0
        %v3960 = vunpack.c.l.b16 %v3270
        %v3961 = vunpack.c.l.b16 %v3271
        %v3962 = vunpack.c.l.b16 %v3272
        %v3963 = vunpack.c.l.b16 %v3273
        %v3964 = vpack.c.b16 %v3961, %v3960
        %v3965 = vpack.c.b16 %v3963, %v3962
        %3968 = vmatpush.bf16.msra.mxu0 0
        %3969 = vmatpush.bf16.msra.mxu0 0
        %3970 = vmatpush.bf16.msra.mxu0 0
        %3971 = vmatpush.bf16.msra.mxu0 0
        %3972 = vmatpush.bf16.msra.mxu0 0
        %3973 = vmatpush.bf16.msra.mxu0 0
        %3974 = vmatpush.bf16.msra.mxu0 %v3965
        %3975 = vmatpush.bf16.msra.mxu0 %v3964
        %3976 = vmatmul.bf16.gmra.mxu0 %v716
        %v3977 = vpop.f32.mrf.mxu0
        %v3978 = vadd.f32 %v3772, %v3977
        %v3979 = vpop.f32.mrf.mxu0
        %3980 = vdwg.mxu0
        %v3981 = vpack.c.bf16 %v3803, %v3803
        %v3982 = vpack.c.bf16 %v3828, %v3828
        %v3983 = vpack.c.bf16 %v3853, %v3853
        %v3984 = vpack.c.bf16 %v3878, %v3878
        %v3985 = vpack.c.bf16 %v3903, %v3903
        %v3986 = vpack.c.bf16 %v3928, %v3928
        %v3987 = vpack.c.bf16 %v3953, %v3953
        %v3988 = vpack.c.bf16 %v3978, %v3978
        %v3990 = vsel %vm1146, %v3517, 0
        %v3993 = vsel %vm1146, %v3749, 0
        %3995 = vmatpush.bf16.xpose.msra.mxu0 0
        %3996 = vmatpush.bf16.xpose.msra.mxu0 0
        %3997 = vmatpush.bf16.xpose.msra.mxu0 0
        %3998 = vmatpush.bf16.xpose.msra.mxu0 0
        %3999 = vmatpush.bf16.xpose.msra.mxu0 0
        %4000 = vmatpush.bf16.xpose.msra.mxu0 0
        %4001 = vmatpush.bf16.xpose.msra.mxu0 0
        %4002 = vmatpush.bf16.xpose.msra.mxu0 %v3993
        %4003 = vmatmul.bf16.gmra.mxu0 %v3990
        %v4004 = vpop.f32.mrf.mxu0
        %v4005 = vadd.f32 0.0, %v4004
        %v4006 = vpop.f32.mrf.mxu0
        %4007 = vdwg.mxu0
        %v4009 = vsel %vm1146, %v3518, 0
        %v4012 = vsel %vm1146, %v3750, 0
        %4014 = vmatpush.bf16.xpose.msra.mxu0 0
        %4015 = vmatpush.bf16.xpose.msra.mxu0 0
        %4016 = vmatpush.bf16.xpose.msra.mxu0 0
        %4017 = vmatpush.bf16.xpose.msra.mxu0 0
        %4018 = vmatpush.bf16.xpose.msra.mxu0 0
        %4019 = vmatpush.bf16.xpose.msra.mxu0 0
        %4020 = vmatpush.bf16.xpose.msra.mxu0 0
        %4021 = vmatpush.bf16.xpose.msra.mxu0 %v4012
        %4022 = vmatmul.bf16.gmra.mxu0 %v4009
        %v4023 = vpop.f32.mrf.mxu0
        %v4024 = vadd.f32 0.0, %v4023
        %v4025 = vpop.f32.mrf.mxu0
        %4026 = vdwg.mxu0
        %v4028 = vsel %vm1146, %v3519, 0
        %v4031 = vsel %vm1146, %v3751, 0
        %4033 = vmatpush.bf16.xpose.msra.mxu0 0
        %4034 = vmatpush.bf16.xpose.msra.mxu0 0
        %4035 = vmatpush.bf16.xpose.msra.mxu0 0
        %4036 = vmatpush.bf16.xpose.msra.mxu0 0
        %4037 = vmatpush.bf16.xpose.msra.mxu0 0
        %4038 = vmatpush.bf16.xpose.msra.mxu0 0
        %4039 = vmatpush.bf16.xpose.msra.mxu0 0
        %4040 = vmatpush.bf16.xpose.msra.mxu0 %v4031
        %4041 = vmatmul.bf16.gmra.mxu0 %v4028
        %v4042 = vpop.f32.mrf.mxu0
        %v4043 = vadd.f32 0.0, %v4042
        %v4044 = vpop.f32.mrf.mxu0
        %4045 = vdwg.mxu0
        %v4047 = vsel %vm1146, %v3520, 0
        %v4050 = vsel %vm1146, %v3752, 0
        %4052 = vmatpush.bf16.xpose.msra.mxu0 0
        %4053 = vmatpush.bf16.xpose.msra.mxu0 0
        %4054 = vmatpush.bf16.xpose.msra.mxu0 0
        %4055 = vmatpush.bf16.xpose.msra.mxu0 0
        %4056 = vmatpush.bf16.xpose.msra.mxu0 0
        %4057 = vmatpush.bf16.xpose.msra.mxu0 0
        %4058 = vmatpush.bf16.xpose.msra.mxu0 0
        %4059 = vmatpush.bf16.xpose.msra.mxu0 %v4050
        %4060 = vmatmul.bf16.gmra.mxu0 %v4047
        %v4061 = vpop.f32.mrf.mxu0
        %v4062 = vadd.f32 0.0, %v4061
        %v4063 = vpop.f32.mrf.mxu0
        %4064 = vdwg.mxu0
        %v4066 = vsel %vm1146, %v3521, 0
        %v4069 = vsel %vm1146, %v3753, 0
        %4071 = vmatpush.bf16.xpose.msra.mxu0 0
        %4072 = vmatpush.bf16.xpose.msra.mxu0 0
        %4073 = vmatpush.bf16.xpose.msra.mxu0 0
        %4074 = vmatpush.bf16.xpose.msra.mxu0 0
        %4075 = vmatpush.bf16.xpose.msra.mxu0 0
        %4076 = vmatpush.bf16.xpose.msra.mxu0 0
        %4077 = vmatpush.bf16.xpose.msra.mxu0 0
        %4078 = vmatpush.bf16.xpose.msra.mxu0 %v4069
        %4079 = vmatmul.bf16.gmra.mxu0 %v4066
        %v4080 = vpop.f32.mrf.mxu0
        %v4081 = vadd.f32 0.0, %v4080
        %v4082 = vpop.f32.mrf.mxu0
        %4083 = vdwg.mxu0
        %v4085 = vsel %vm1146, %v3522, 0
        %v4088 = vsel %vm1146, %v3754, 0
        %4090 = vmatpush.bf16.xpose.msra.mxu0 0
        %4091 = vmatpush.bf16.xpose.msra.mxu0 0
        %4092 = vmatpush.bf16.xpose.msra.mxu0 0
        %4093 = vmatpush.bf16.xpose.msra.mxu0 0
        %4094 = vmatpush.bf16.xpose.msra.mxu0 0
        %4095 = vmatpush.bf16.xpose.msra.mxu0 0
        %4096 = vmatpush.bf16.xpose.msra.mxu0 0
        %4097 = vmatpush.bf16.xpose.msra.mxu0 %v4088
        %4098 = vmatmul.bf16.gmra.mxu0 %v4085
        %v4099 = vpop.f32.mrf.mxu0
        %v4100 = vadd.f32 0.0, %v4099
        %v4101 = vpop.f32.mrf.mxu0
        %4102 = vdwg.mxu0
        %v4104 = vsel %vm1146, %v3523, 0
        %v4107 = vsel %vm1146, %v3755, 0
        %4109 = vmatpush.bf16.xpose.msra.mxu0 0
        %4110 = vmatpush.bf16.xpose.msra.mxu0 0
        %4111 = vmatpush.bf16.xpose.msra.mxu0 0
        %4112 = vmatpush.bf16.xpose.msra.mxu0 0
        %4113 = vmatpush.bf16.xpose.msra.mxu0 0
        %4114 = vmatpush.bf16.xpose.msra.mxu0 0
        %4115 = vmatpush.bf16.xpose.msra.mxu0 0
        %4116 = vmatpush.bf16.xpose.msra.mxu0 %v4107
        %4117 = vmatmul.bf16.gmra.mxu0 %v4104
        %v4118 = vpop.f32.mrf.mxu0
        %v4119 = vadd.f32 0.0, %v4118
        %v4120 = vpop.f32.mrf.mxu0
        %4121 = vdwg.mxu0
        %v4123 = vsel %vm1146, %v3524, 0
        %v4126 = vsel %vm1146, %v3756, 0
        %4128 = vmatpush.bf16.xpose.msra.mxu0 0
        %4129 = vmatpush.bf16.xpose.msra.mxu0 0
        %4130 = vmatpush.bf16.xpose.msra.mxu0 0
        %4131 = vmatpush.bf16.xpose.msra.mxu0 0
        %4132 = vmatpush.bf16.xpose.msra.mxu0 0
        %4133 = vmatpush.bf16.xpose.msra.mxu0 0
        %4134 = vmatpush.bf16.xpose.msra.mxu0 0
        %4135 = vmatpush.bf16.xpose.msra.mxu0 %v4126
        %4136 = vmatmul.bf16.gmra.mxu0 %v4123
        %v4137 = vpop.f32.mrf.mxu0
        %v4138 = vadd.f32 0.0, %v4137
        %v4139 = vpop.f32.mrf.mxu0
        %4140 = vdwg.mxu0
        %v4141 = vsel %vm1299, %v4005, -inf
        %4142 = vmax.xlane.f32.xlu0 %v4141
        %v4143 = vpop.xlane.xlu0 %4142
        %v4144 = vsel %vm1299, %v4024, -inf
        %4145 = vmax.xlane.f32.xlu0 %v4144
        %v4146 = vpop.xlane.xlu0 %4145
        %v4147 = vsel %vm1299, %v4043, -inf
        %4148 = vmax.xlane.f32.xlu0 %v4147
        %v4149 = vpop.xlane.xlu0 %4148
        %v4150 = vsel %vm1299, %v4062, -inf
        %4151 = vmax.xlane.f32.xlu0 %v4150
        %v4152 = vpop.xlane.xlu0 %4151
        %v4153 = vsel %vm1299, %v4081, -inf
        %4154 = vmax.xlane.f32.xlu0 %v4153
        %v4155 = vpop.xlane.xlu0 %4154
        %v4156 = vsel %vm1299, %v4100, -inf
        %4157 = vmax.xlane.f32.xlu0 %v4156
        %v4158 = vpop.xlane.xlu0 %4157
        %v4159 = vsel %vm1299, %v4119, -inf
        %4160 = vmax.xlane.f32.xlu0 %v4159
        %v4161 = vpop.xlane.xlu0 %4160
        %v4162 = vsel %vm1299, %v4138, -inf
        %4163 = vmax.xlane.f32.xlu0 %v4162
        %v4164 = vpop.xlane.xlu0 %4163
        %v4165 = vsub.f32 %v4005, %v4143
        %v4166 = vsub.f32 %v4024, %v4146
        %v4167 = vsub.f32 %v4043, %v4149
        %v4168 = vsub.f32 %v4062, %v4152
        %v4169 = vsub.f32 %v4081, %v4155
        %v4170 = vsub.f32 %v4100, %v4158
        %v4171 = vsub.f32 %v4119, %v4161
        %v4172 = vsub.f32 %v4138, %v4164
        %v4173 = vmul.f32 %v4165, 1.442695
        %v4174 = vpow.pop %v4173
        %v4175 = vmul.f32 %v4166, 1.442695
        %v4176 = vpow.pop %v4175
        %v4177 = vmul.f32 %v4167, 1.442695
        %v4178 = vpow.pop %v4177
        %v4179 = vmul.f32 %v4168, 1.442695
        %v4180 = vpow.pop %v4179
        %v4181 = vmul.f32 %v4169, 1.442695
        %v4182 = vpow.pop %v4181
        %v4183 = vmul.f32 %v4170, 1.442695
        %v4184 = vpow.pop %v4183
        %v4185 = vmul.f32 %v4171, 1.442695
        %v4186 = vpow.pop %v4185
        %v4187 = vmul.f32 %v4172, 1.442695
        %v4188 = vpow.pop %v4187
        %v4189 = vsel %vm1299, %v4174, 0.0
        %4190 = vadd.xlane.f32.xlu0 %v4189
        %v4191 = vpop.xlane.xlu0 %4190
        %v4192 = vsel %vm1299, %v4176, 0.0
        %4193 = vadd.xlane.f32.xlu0 %v4192
        %v4194 = vpop.xlane.xlu0 %4193
        %v4195 = vsel %vm1299, %v4178, 0.0
        %4196 = vadd.xlane.f32.xlu0 %v4195
        %v4197 = vpop.xlane.xlu0 %4196
        %v4198 = vsel %vm1299, %v4180, 0.0
        %4199 = vadd.xlane.f32.xlu0 %v4198
        %v4200 = vpop.xlane.xlu0 %4199
        %v4201 = vsel %vm1299, %v4182, 0.0
        %4202 = vadd.xlane.f32.xlu0 %v4201
        %v4203 = vpop.xlane.xlu0 %4202
        %v4204 = vsel %vm1299, %v4184, 0.0
        %4205 = vadd.xlane.f32.xlu0 %v4204
        %v4206 = vpop.xlane.xlu0 %4205
        %v4207 = vsel %vm1299, %v4186, 0.0
        %4208 = vadd.xlane.f32.xlu0 %v4207
        %v4209 = vpop.xlane.xlu0 %4208
        %v4210 = vsel %vm1299, %v4188, 0.0
        %4211 = vadd.xlane.f32.xlu0 %v4210
        %v4212 = vpop.xlane.xlu0 %4211
        %v4213 = vpack.c.bf16 %v4174, %v4174
        %v4214 = vpack.c.bf16 %v4176, %v4176
        %v4215 = vpack.c.bf16 %v4178, %v4178
        %v4216 = vpack.c.bf16 %v4180, %v4180
        %v4217 = vpack.c.bf16 %v4182, %v4182
        %v4218 = vpack.c.bf16 %v4184, %v4184
        %v4219 = vpack.c.bf16 %v4186, %v4186
        %v4220 = vpack.c.bf16 %v4188, %v4188
        %v4222 = vsel %vm1299, %v4213, 0
        %v4225 = vsel %vm1383, %v3981, 0
        %4227 = vmatpush.bf16.msra.mxu0 0
        %4228 = vmatpush.bf16.msra.mxu0 0
        %4229 = vmatpush.bf16.msra.mxu0 0
        %4230 = vmatpush.bf16.msra.mxu0 0
        %4231 = vmatpush.bf16.msra.mxu0 0
        %4232 = vmatpush.bf16.msra.mxu0 0
        %4233 = vmatpush.bf16.msra.mxu0 0
        %4234 = vmatpush.bf16.msra.mxu0 %v4225
        %4235 = vmatmul.bf16.gmra.mxu0 %v4222
        %v4236 = vpop.f32.mrf.mxu0
        %v4237 = vadd.f32 0.0, %v4236
        %v4238 = vpop.f32.mrf.mxu0
        %4239 = vdwg.mxu0
        %v4241 = vsel %vm1299, %v4214, 0
        %v4244 = vsel %vm1383, %v3982, 0
        %4246 = vmatpush.bf16.msra.mxu0 0
        %4247 = vmatpush.bf16.msra.mxu0 0
        %4248 = vmatpush.bf16.msra.mxu0 0
        %4249 = vmatpush.bf16.msra.mxu0 0
        %4250 = vmatpush.bf16.msra.mxu0 0
        %4251 = vmatpush.bf16.msra.mxu0 0
        %4252 = vmatpush.bf16.msra.mxu0 0
        %4253 = vmatpush.bf16.msra.mxu0 %v4244
        %4254 = vmatmul.bf16.gmra.mxu0 %v4241
        %v4255 = vpop.f32.mrf.mxu0
        %v4256 = vadd.f32 0.0, %v4255
        %v4257 = vpop.f32.mrf.mxu0
        %4258 = vdwg.mxu0
        %v4260 = vsel %vm1299, %v4215, 0
        %v4263 = vsel %vm1383, %v3983, 0
        %4265 = vmatpush.bf16.msra.mxu0 0
        %4266 = vmatpush.bf16.msra.mxu0 0
        %4267 = vmatpush.bf16.msra.mxu0 0
        %4268 = vmatpush.bf16.msra.mxu0 0
        %4269 = vmatpush.bf16.msra.mxu0 0
        %4270 = vmatpush.bf16.msra.mxu0 0
        %4271 = vmatpush.bf16.msra.mxu0 0
        %4272 = vmatpush.bf16.msra.mxu0 %v4263
        %4273 = vmatmul.bf16.gmra.mxu0 %v4260
        %v4274 = vpop.f32.mrf.mxu0
        %v4275 = vadd.f32 0.0, %v4274
        %v4276 = vpop.f32.mrf.mxu0
        %4277 = vdwg.mxu0
        %v4279 = vsel %vm1299, %v4216, 0
        %v4282 = vsel %vm1383, %v3984, 0
        %4284 = vmatpush.bf16.msra.mxu0 0
        %4285 = vmatpush.bf16.msra.mxu0 0
        %4286 = vmatpush.bf16.msra.mxu0 0
        %4287 = vmatpush.bf16.msra.mxu0 0
        %4288 = vmatpush.bf16.msra.mxu0 0
        %4289 = vmatpush.bf16.msra.mxu0 0
        %4290 = vmatpush.bf16.msra.mxu0 0
        %4291 = vmatpush.bf16.msra.mxu0 %v4282
        %4292 = vmatmul.bf16.gmra.mxu0 %v4279
        %v4293 = vpop.f32.mrf.mxu0
        %v4294 = vadd.f32 0.0, %v4293
        %v4295 = vpop.f32.mrf.mxu0
        %4296 = vdwg.mxu0
        %v4298 = vsel %vm1299, %v4217, 0
        %v4301 = vsel %vm1383, %v3985, 0
        %4303 = vmatpush.bf16.msra.mxu0 0
        %4304 = vmatpush.bf16.msra.mxu0 0
        %4305 = vmatpush.bf16.msra.mxu0 0
        %4306 = vmatpush.bf16.msra.mxu0 0
        %4307 = vmatpush.bf16.msra.mxu0 0
        %4308 = vmatpush.bf16.msra.mxu0 0
        %4309 = vmatpush.bf16.msra.mxu0 0
        %4310 = vmatpush.bf16.msra.mxu0 %v4301
        %4311 = vmatmul.bf16.gmra.mxu0 %v4298
        %v4312 = vpop.f32.mrf.mxu0
        %v4313 = vadd.f32 0.0, %v4312
        %v4314 = vpop.f32.mrf.mxu0
        %4315 = vdwg.mxu0
        %v4317 = vsel %vm1299, %v4218, 0
        %v4320 = vsel %vm1383, %v3986, 0
        %4322 = vmatpush.bf16.msra.mxu0 0
        %4323 = vmatpush.bf16.msra.mxu0 0
        %4324 = vmatpush.bf16.msra.mxu0 0
        %4325 = vmatpush.bf16.msra.mxu0 0
        %4326 = vmatpush.bf16.msra.mxu0 0
        %4327 = vmatpush.bf16.msra.mxu0 0
        %4328 = vmatpush.bf16.msra.mxu0 0
        %4329 = vmatpush.bf16.msra.mxu0 %v4320
        %4330 = vmatmul.bf16.gmra.mxu0 %v4317
        %v4331 = vpop.f32.mrf.mxu0
        %v4332 = vadd.f32 0.0, %v4331
        %v4333 = vpop.f32.mrf.mxu0
        %4334 = vdwg.mxu0
        %v4336 = vsel %vm1299, %v4219, 0
        %v4339 = vsel %vm1383, %v3987, 0
        %4341 = vmatpush.bf16.msra.mxu0 0
        %4342 = vmatpush.bf16.msra.mxu0 0
        %4343 = vmatpush.bf16.msra.mxu0 0
        %4344 = vmatpush.bf16.msra.mxu0 0
        %4345 = vmatpush.bf16.msra.mxu0 0
        %4346 = vmatpush.bf16.msra.mxu0 0
        %4347 = vmatpush.bf16.msra.mxu0 0
        %4348 = vmatpush.bf16.msra.mxu0 %v4339
        %4349 = vmatmul.bf16.gmra.mxu0 %v4336
        %v4350 = vpop.f32.mrf.mxu0
        %v4351 = vadd.f32 0.0, %v4350
        %v4352 = vpop.f32.mrf.mxu0
        %4353 = vdwg.mxu0
        %v4355 = vsel %vm1299, %v4220, 0
        %v4358 = vsel %vm1383, %v3988, 0
        %4360 = vmatpush.bf16.msra.mxu0 0
        %4361 = vmatpush.bf16.msra.mxu0 0
        %4362 = vmatpush.bf16.msra.mxu0 0
        %4363 = vmatpush.bf16.msra.mxu0 0
        %4364 = vmatpush.bf16.msra.mxu0 0
        %4365 = vmatpush.bf16.msra.mxu0 0
        %4366 = vmatpush.bf16.msra.mxu0 0
        %4367 = vmatpush.bf16.msra.mxu0 %v4358
        %4368 = vmatmul.bf16.gmra.mxu0 %v4355
        %v4369 = vpop.f32.mrf.mxu0
        %v4370 = vadd.f32 0.0, %v4369
        %v4371 = vpop.f32.mrf.mxu0
        %4372 = vdwg.mxu0
        %v4373 = vrcp.pop %v4191
        %v4374 = vrcp.pop %v4194
        %v4375 = vrcp.pop %v4197
        %v4376 = vrcp.pop %v4200
        %v4377 = vrcp.pop %v4203
        %v4378 = vrcp.pop %v4206
        %v4379 = vrcp.pop %v4209
        %v4380 = vrcp.pop %v4212
        %v4381 = vmul.f32 %v4237, %v4373
        %v4382 = vmul.f32 %v4256, %v4374
        %v4383 = vmul.f32 %v4275, %v4375
        %v4384 = vmul.f32 %v4294, %v4376
        %v4385 = vmul.f32 %v4313, %v4377
        %v4386 = vmul.f32 %v4332, %v4378
        %v4387 = vmul.f32 %v4351, %v4379
        %v4388 = vmul.f32 %v4370, %v4380
        %v4389 = vpack.c.bf16 %v4381, %v4381
        %v4390 = vpack.c.bf16 %v4382, %v4382
        %v4391 = vpack.c.bf16 %v4383, %v4383
        %v4392 = vpack.c.bf16 %v4384, %v4384
        %v4393 = vpack.c.bf16 %v4385, %v4385
        %v4394 = vpack.c.bf16 %v4386, %v4386
        %v4395 = vpack.c.bf16 %v4387, %v4387
        %v4396 = vpack.c.bf16 %v4388, %v4388
        %v4398 = vsel %vm1146, %v4389, 0
        %v4401 = vsel %vm1560, %v3275, 0
        %4403 = vmatpush.bf16.msra.mxu0 0
        %4404 = vmatpush.bf16.msra.mxu0 0
        %4405 = vmatpush.bf16.msra.mxu0 0
        %4406 = vmatpush.bf16.msra.mxu0 0
        %4407 = vmatpush.bf16.msra.mxu0 0
        %4408 = vmatpush.bf16.msra.mxu0 0
        %4409 = vmatpush.bf16.msra.mxu0 0
        %4410 = vmatpush.bf16.msra.mxu0 %v4401
        %4411 = vmatmul.bf16.gmra.mxu0 %v4398
        %v4412 = vpop.f32.mrf.mxu0
        %v4413 = vadd.f32 0.0, %v4412
        %v4414 = vpop.f32.mrf.mxu0
        %4415 = vdwg.mxu0
        %v4417 = vsel %vm1146, %v4390, 0
        %v4420 = vsel %vm1560, %v3276, 0
        %4422 = vmatpush.bf16.msra.mxu0 0
        %4423 = vmatpush.bf16.msra.mxu0 0
        %4424 = vmatpush.bf16.msra.mxu0 0
        %4425 = vmatpush.bf16.msra.mxu0 0
        %4426 = vmatpush.bf16.msra.mxu0 0
        %4427 = vmatpush.bf16.msra.mxu0 0
        %4428 = vmatpush.bf16.msra.mxu0 0
        %4429 = vmatpush.bf16.msra.mxu0 %v4420
        %4430 = vmatmul.bf16.gmra.mxu0 %v4417
        %v4431 = vpop.f32.mrf.mxu0
        %v4432 = vadd.f32 0.0, %v4431
        %v4433 = vpop.f32.mrf.mxu0
        %4434 = vdwg.mxu0
        %v4436 = vsel %vm1146, %v4391, 0
        %v4439 = vsel %vm1560, %v3277, 0
        %4441 = vmatpush.bf16.msra.mxu0 0
        %4442 = vmatpush.bf16.msra.mxu0 0
        %4443 = vmatpush.bf16.msra.mxu0 0
        %4444 = vmatpush.bf16.msra.mxu0 0
        %4445 = vmatpush.bf16.msra.mxu0 0
        %4446 = vmatpush.bf16.msra.mxu0 0
        %4447 = vmatpush.bf16.msra.mxu0 0
        %4448 = vmatpush.bf16.msra.mxu0 %v4439
        %4449 = vmatmul.bf16.gmra.mxu0 %v4436
        %v4450 = vpop.f32.mrf.mxu0
        %v4451 = vadd.f32 0.0, %v4450
        %v4452 = vpop.f32.mrf.mxu0
        %4453 = vdwg.mxu0
        %v4455 = vsel %vm1146, %v4392, 0
        %v4458 = vsel %vm1560, %v3278, 0
        %4460 = vmatpush.bf16.msra.mxu0 0
        %4461 = vmatpush.bf16.msra.mxu0 0
        %4462 = vmatpush.bf16.msra.mxu0 0
        %4463 = vmatpush.bf16.msra.mxu0 0
        %4464 = vmatpush.bf16.msra.mxu0 0
        %4465 = vmatpush.bf16.msra.mxu0 0
        %4466 = vmatpush.bf16.msra.mxu0 0
        %4467 = vmatpush.bf16.msra.mxu0 %v4458
        %4468 = vmatmul.bf16.gmra.mxu0 %v4455
        %v4469 = vpop.f32.mrf.mxu0
        %v4470 = vadd.f32 0.0, %v4469
        %v4471 = vpop.f32.mrf.mxu0
        %4472 = vdwg.mxu0
        %v4474 = vsel %vm1146, %v4393, 0
        %v4477 = vsel %vm1560, %v3279, 0
        %4479 = vmatpush.bf16.msra.mxu0 0
        %4480 = vmatpush.bf16.msra.mxu0 0
        %4481 = vmatpush.bf16.msra.mxu0 0
        %4482 = vmatpush.bf16.msra.mxu0 0
        %4483 = vmatpush.bf16.msra.mxu0 0
        %4484 = vmatpush.bf16.msra.mxu0 0
        %4485 = vmatpush.bf16.msra.mxu0 0
        %4486 = vmatpush.bf16.msra.mxu0 %v4477
        %4487 = vmatmul.bf16.gmra.mxu0 %v4474
        %v4488 = vpop.f32.mrf.mxu0
        %v4489 = vadd.f32 0.0, %v4488
        %v4490 = vpop.f32.mrf.mxu0
        %4491 = vdwg.mxu0
        %v4493 = vsel %vm1146, %v4394, 0
        %v4496 = vsel %vm1560, %v3280, 0
        %4498 = vmatpush.bf16.msra.mxu0 0
        %4499 = vmatpush.bf16.msra.mxu0 0
        %4500 = vmatpush.bf16.msra.mxu0 0
        %4501 = vmatpush.bf16.msra.mxu0 0
        %4502 = vmatpush.bf16.msra.mxu0 0
        %4503 = vmatpush.bf16.msra.mxu0 0
        %4504 = vmatpush.bf16.msra.mxu0 0
        %4505 = vmatpush.bf16.msra.mxu0 %v4496
        %4506 = vmatmul.bf16.gmra.mxu0 %v4493
        %v4507 = vpop.f32.mrf.mxu0
        %v4508 = vadd.f32 0.0, %v4507
        %v4509 = vpop.f32.mrf.mxu0
        %4510 = vdwg.mxu0
        %v4512 = vsel %vm1146, %v4395, 0
        %v4515 = vsel %vm1560, %v3281, 0
        %4517 = vmatpush.bf16.msra.mxu0 0
        %4518 = vmatpush.bf16.msra.mxu0 0
        %4519 = vmatpush.bf16.msra.mxu0 0
        %4520 = vmatpush.bf16.msra.mxu0 0
        %4521 = vmatpush.bf16.msra.mxu0 0
        %4522 = vmatpush.bf16.msra.mxu0 0
        %4523 = vmatpush.bf16.msra.mxu0 0
        %4524 = vmatpush.bf16.msra.mxu0 %v4515
        %4525 = vmatmul.bf16.gmra.mxu0 %v4512
        %v4526 = vpop.f32.mrf.mxu0
        %v4527 = vadd.f32 0.0, %v4526
        %v4528 = vpop.f32.mrf.mxu0
        %4529 = vdwg.mxu0
        %v4531 = vsel %vm1146, %v4396, 0
        %v4534 = vsel %vm1560, %v3282, 0
        %4536 = vmatpush.bf16.msra.mxu0 0
        %4537 = vmatpush.bf16.msra.mxu0 0
        %4538 = vmatpush.bf16.msra.mxu0 0
        %4539 = vmatpush.bf16.msra.mxu0 0
        %4540 = vmatpush.bf16.msra.mxu0 0
        %4541 = vmatpush.bf16.msra.mxu0 0
        %4542 = vmatpush.bf16.msra.mxu0 0
        %4543 = vmatpush.bf16.msra.mxu0 %v4534
        %4544 = vmatmul.bf16.gmra.mxu0 %v4531
        %v4545 = vpop.f32.mrf.mxu0
        %v4546 = vadd.f32 0.0, %v4545
        %v4547 = vpop.f32.mrf.mxu0
        %4548 = vdwg.mxu0
        %v4549 = vsel %vm479, %v4413, 0.0
        %v4550 = vsel %vm479, %v4432, 0.0
        %v4551 = vadd.f32 %v4549, %v4550
        %v4552 = vsel %vm479, %v4451, 0.0
        %v4553 = vadd.f32 %v4551, %v4552
        %v4554 = vsel %vm479, %v4470, 0.0
        %v4555 = vadd.f32 %v4553, %v4554
        %v4556 = vsel %vm479, %v4489, 0.0
        %v4557 = vadd.f32 %v4555, %v4556
        %v4558 = vsel %vm479, %v4508, 0.0
        %v4559 = vadd.f32 %v4557, %v4558
        %v4560 = vsel %vm479, %v4527, 0.0
        %v4561 = vadd.f32 %v4559, %v4560
        %v4562 = vsel %vm479, %v4546, 0.0
        %v4563 = vadd.f32 %v4561, %v4562
        %v4564 = vperm.slane %v3288, 0
        %v4565 = vadd.f32 %v4563, %v4564
        %v4566 = vadd.f32 %v3176, %v4565
        %v4567 = vsel %vm479, %v4566, 0.0
        %4568 = vadd.xlane.f32.xlu0 %v4567
        %v4569 = vpop.xlane.xlu0 %4568
        %v4570 = vmul.f32 %v4569, %v1737
        %v4571 = vsub.f32 %v4566, %v4570
        %v4572 = vmul.f32 %v4571, %v4571
        %v4573 = vsel %vm479, %v4572, 0.0
        %4574 = vadd.xlane.f32.xlu0 %v4573
        %v4575 = vpop.xlane.xlu0 %4574
        %v4576 = vmul.f32 %v4575, %v1737
        %v4577 = vadd.f32 %v4576, 1e-05
        %v4578 = vrsqrt.pop %v4577
        %v4579 = vmul.f32 %v4578, %v4577
        %v4580 = vmul.f32 %v4579, %v4578
        %v4581 = vmul.f32 0.5, %v4580
        %v4582 = vsub.f32 1.5, %v4581
        %v4583 = vmul.f32 %v4578, %v4582
        %vm4584 = vweird.f32 %v4577
        %vm4585 = vweird.f32 %v4578
        %vm4586 = vmor %vm4584, %vm4585
        %v4587 = vsel %vm4586, %v4578, %v4583
        %v4588 = vmul.f32 %v4571, %v4587
        %v4589 = vperm.slane %v3288, 1
        %v4590 = vmul.f32 %v4588, %v4589
        %v4591 = vperm.slane %v3288, 2
        %v4592 = vadd.f32 %v4590, %v4591
        %s4593 = scalar_lea.vmem %s4, 1152
        %v4594 = vld [vmem:[%s4593] sm:$0xf]
        %v4595 = vld [vmem:[%s4593 + $0x4] sm:$0xf]
        %v4596 = vld [vmem:[%s4593 + $0x8] sm:$0xf]
        %v4597 = vld [vmem:[%s4593 + $0xc] sm:$0xf]
        %v4598 = vld [vmem:[%s4593 + $0x10] sm:$0xf]
        %v4599 = vld [vmem:[%s4593 + $0x14] sm:$0xf]
        %v4600 = vld [vmem:[%s4593 + $0x18] sm:$0xf]
        %v4601 = vld [vmem:[%s4593 + $0x1c] sm:$0xf]
        %v4602 = vld [vmem:[%s4593 + $0x20] sm:$0xf]
        %v4603 = vld [vmem:[%s4593 + $0x24] sm:$0xf]
        %v4604 = vld [vmem:[%s4593 + $0x28] sm:$0xf]
        %v4605 = vld [vmem:[%s4593 + $0x2c] sm:$0xf]
        %v4606 = vld [vmem:[%s4593 + $0x30] sm:$0xf]
        %v4607 = vld [vmem:[%s4593 + $0x34] sm:$0xf]
        %v4608 = vld [vmem:[%s4593 + $0x38] sm:$0xf]
        %v4609 = vld [vmem:[%s4593 + $0x3c] sm:$0xf]
        %v4610 = vld [vmem:[%s4593 + $0x40] sm:$0xf]
        %v4611 = vld [vmem:[%s4593 + $0x44] sm:$0xf]
        %v4612 = vld [vmem:[%s4593 + $0x48] sm:$0xf]
        %v4613 = vld [vmem:[%s4593 + $0x4c] sm:$0xf]
        %v4614 = vld [vmem:[%s4593 + $0x50] sm:$0xf]
        %v4615 = vld [vmem:[%s4593 + $0x54] sm:$0xf]
        %v4616 = vld [vmem:[%s4593 + $0x58] sm:$0xf]
        %v4617 = vld [vmem:[%s4593 + $0x5c] sm:$0xf]
        %v4618 = vld [vmem:[%s4593 + $0x60] sm:$0xf]
        %v4619 = vld [vmem:[%s4593 + $0x64] sm:$0xf]
        %v4620 = vld [vmem:[%s4593 + $0x68] sm:$0xf]
        %v4621 = vld [vmem:[%s4593 + $0x6c] sm:$0xf]
        %v4622 = vld [vmem:[%s4593 + $0x70] sm:$0xf]
        %v4623 = vld [vmem:[%s4593 + $0x74] sm:$0xf]
        %v4624 = vld [vmem:[%s4593 + $0x78] sm:$0xf]
        %v4625 = vld [vmem:[%s4593 + $0x7c] sm:$0xf]
        %v4626 = vld [vmem:[%s4593 + $0x80] sm:$0xf]
        %v4627 = vld [vmem:[%s4593 + $0x84] sm:$0xf]
        %v4628 = vld [vmem:[%s4593 + $0x88] sm:$0xf]
        %v4629 = vld [vmem:[%s4593 + $0x8c] sm:$0xf]
        %v4630 = vld [vmem:[%s4593 + $0x90] sm:$0xf]
        %v4631 = vld [vmem:[%s4593 + $0x94] sm:$0xf]
        %v4632 = vld [vmem:[%s4593 + $0x98] sm:$0xf]
        %v4633 = vld [vmem:[%s4593 + $0x9c] sm:$0xf]
        %v4634 = vld [vmem:[%s4593 + $0xa0] sm:$0xf]
        %v4635 = vld [vmem:[%s4593 + $0xa4] sm:$0xf]
        %v4636 = vld [vmem:[%s4593 + $0xa8] sm:$0xf]
        %v4637 = vld [vmem:[%s4593 + $0xac] sm:$0xf]
        %v4638 = vld [vmem:[%s4593 + $0xb0] sm:$0xf]
        %v4639 = vld [vmem:[%s4593 + $0xb4] sm:$0xf]
        %v4640 = vld [vmem:[%s4593 + $0xb8] sm:$0xf]
        %v4641 = vld [vmem:[%s4593 + $0xbc] sm:$0xf]
        %v4642 = vld [vmem:[%s4593 + $0xc0] sm:$0xf]
        %v4643 = vld [vmem:[%s4593 + $0xc4] sm:$0xf]
        %v4644 = vld [vmem:[%s4593 + $0xc8] sm:$0xf]
        %v4645 = vld [vmem:[%s4593 + $0xcc] sm:$0xf]
        %v4646 = vld [vmem:[%s4593 + $0xd0] sm:$0xf]
        %v4647 = vld [vmem:[%s4593 + $0xd4] sm:$0xf]
        %v4648 = vld [vmem:[%s4593 + $0xd8] sm:$0xf]
        %v4649 = vld [vmem:[%s4593 + $0xdc] sm:$0xf]
        %v4650 = vld [vmem:[%s4593 + $0xe0] sm:$0xf]
        %v4651 = vld [vmem:[%s4593 + $0xe4] sm:$0xf]
        %v4652 = vld [vmem:[%s4593 + $0xe8] sm:$0xf]
        %v4653 = vld [vmem:[%s4593 + $0xec] sm:$0xf]
        %v4654 = vld [vmem:[%s4593 + $0xf0] sm:$0xf]
        %v4655 = vld [vmem:[%s4593 + $0xf4] sm:$0xf]
        %v4656 = vld [vmem:[%s4593 + $0xf8] sm:$0xf]
        %v4657 = vld [vmem:[%s4593 + $0xfc] sm:$0xf]
        %v4658 = vld [vmem:[%s4593 + $0x100] sm:$0xf]
        %v4659 = vld [vmem:[%s4593 + $0x104] sm:$0xf]
        %v4660 = vld [vmem:[%s4593 + $0x108] sm:$0xf]
        %v4661 = vld [vmem:[%s4593 + $0x10c] sm:$0xf]
        %v4662 = vld [vmem:[%s4593 + $0x110] sm:$0xf]
        %v4663 = vld [vmem:[%s4593 + $0x114] sm:$0xf]
        %v4664 = vld [vmem:[%s4593 + $0x118] sm:$0xf]
        %v4665 = vld [vmem:[%s4593 + $0x11c] sm:$0xf]
        %v4666 = vld [vmem:[%s4593 + $0x120] sm:$0xf]
        %v4667 = vld [vmem:[%s4593 + $0x124] sm:$0xf]
        %v4668 = vld [vmem:[%s4593 + $0x128] sm:$0xf]
        %v4669 = vld [vmem:[%s4593 + $0x12c] sm:$0xf]
        %v4670 = vld [vmem:[%s4593 + $0x130] sm:$0xf]
        %v4671 = vld [vmem:[%s4593 + $0x134] sm:$0xf]
        %v4672 = vld [vmem:[%s4593 + $0x138] sm:$0xf]
        %v4673 = vld [vmem:[%s4593 + $0x13c] sm:$0xf]
        %v4674 = vld [vmem:[%s4593 + $0x140] sm:$0xf]
        %v4675 = vld [vmem:[%s4593 + $0x144] sm:$0xf]
        %v4676 = vld [vmem:[%s4593 + $0x148] sm:$0xf]
        %v4677 = vld [vmem:[%s4593 + $0x14c] sm:$0xf]
        %v4678 = vld [vmem:[%s4593 + $0x150] sm:$0xf]
        %v4679 = vld [vmem:[%s4593 + $0x154] sm:$0xf]
        %v4680 = vld [vmem:[%s4593 + $0x158] sm:$0xf]
        %v4681 = vld [vmem:[%s4593 + $0x15c] sm:$0xf]
        %v4682 = vld [vmem:[%s4593 + $0x160] sm:$0xf]
        %v4683 = vld [vmem:[%s4593 + $0x164] sm:$0xf]
        %v4684 = vld [vmem:[%s4593 + $0x168] sm:$0xf]
        %v4685 = vld [vmem:[%s4593 + $0x16c] sm:$0xf]
        %v4686 = vld [vmem:[%s4593 + $0x170] sm:$0xf]
        %v4687 = vld [vmem:[%s4593 + $0x174] sm:$0xf]
        %v4688 = vld [vmem:[%s4593 + $0x178] sm:$0xf]
        %v4689 = vld [vmem:[%s4593 + $0x17c] sm:$0xf]
        %s4690 = scalar_lea.vmem %s5, 48
        %v4691 = vld [vmem:[%s4690] sm:$0x3]
        %v4692 = vld [vmem:[%s4690 + $0x2] sm:$0x3]
        %v4693 = vld [vmem:[%s4690 + $0x4] sm:$0x3]
        %v4694 = vld [vmem:[%s4690 + $0x6] sm:$0x3]
        %v4695 = vld [vmem:[%s4690 + $0x8] sm:$0x3]
        %v4696 = vld [vmem:[%s4690 + $0xa] sm:$0x3]
        %v4697 = vld [vmem:[%s4690 + $0xc] sm:$0x3]
        %v4698 = vld [vmem:[%s4690 + $0xe] sm:$0x3]
        %s4699 = scalar_lea.vmem %s6, 72
        %v4700 = vld [vmem:[%s4699] sm:$0xff]
        %v4701 = vld [vmem:[%s4699 + $0x8] sm:$0xff]
        %v4702 = vld [vmem:[%s4699 + $0x10] sm:$0xff]
        %s4703 = scalar_lea.vmem %s7, 12
        %v4704 = vld [vmem:[%s4703] sm:$0x7]
        %v4705 = vpack.c.bf16 %v4592, %v4592
        %v4707 = vrot.slane %v4700, 1
        %v4708 = vrot.slane %v4700, 2
        %v4709 = vrot.slane %v4700, 3
        %v4710 = vrot.slane %v4700, 4
        %v4711 = vrot.slane %v4700, 5
        %v4712 = vrot.slane %v4700, 6
        %v4713 = vrot.slane %v4700, 7
        %v4714 = vperm.slane %v4700, 0
        %v4715 = vperm.slane %v4707, 0
        %v4716 = vperm.slane %v4708, 0
        %v4717 = vperm.slane %v4709, 0
        %v4718 = vperm.slane %v4710, 0
        %v4719 = vperm.slane %v4711, 0
        %v4720 = vperm.slane %v4712, 0
        %v4721 = vperm.slane %v4713, 0
        %v4734 = vunpack.c.l.b16 %v4594
        %v4735 = vunpack.c.l.b16 %v4595
        %v4736 = vunpack.c.l.b16 %v4596
        %v4737 = vunpack.c.l.b16 %v4597
        %v4738 = vpack.c.b16 %v4735, %v4734
        %v4739 = vpack.c.b16 %v4737, %v4736
        %v4743 = vsel %vm479, %v4705, 0
        %4745 = vmatpush.bf16.msra.mxu0 0
        %4746 = vmatpush.bf16.msra.mxu0 0
        %4747 = vmatpush.bf16.msra.mxu0 0
        %4748 = vmatpush.bf16.msra.mxu0 0
        %4749 = vmatpush.bf16.msra.mxu0 0
        %4750 = vmatpush.bf16.msra.mxu0 0
        %4751 = vmatpush.bf16.msra.mxu0 %v4739
        %4752 = vmatpush.bf16.msra.mxu0 %v4738
        %4753 = vmatmul.bf16.gmra.mxu0 %v4743
        %v4754 = vpop.f32.mrf.mxu0
        %v4755 = vadd.f32 %v4714, %v4754
        %v4756 = vpop.f32.mrf.mxu0
        %4757 = vdwg.mxu0
        %v4762 = vunpack.c.l.b16 %v4598
        %v4763 = vunpack.c.l.b16 %v4599
        %v4764 = vunpack.c.l.b16 %v4600
        %v4765 = vunpack.c.l.b16 %v4601
        %v4766 = vpack.c.b16 %v4763, %v4762
        %v4767 = vpack.c.b16 %v4765, %v4764
        %4770 = vmatpush.bf16.msra.mxu0 0
        %4771 = vmatpush.bf16.msra.mxu0 0
        %4772 = vmatpush.bf16.msra.mxu0 0
        %4773 = vmatpush.bf16.msra.mxu0 0
        %4774 = vmatpush.bf16.msra.mxu0 0
        %4775 = vmatpush.bf16.msra.mxu0 0
        %4776 = vmatpush.bf16.msra.mxu0 %v4767
        %4777 = vmatpush.bf16.msra.mxu0 %v4766
        %4778 = vmatmul.bf16.gmra.mxu0 %v4743
        %v4779 = vpop.f32.mrf.mxu0
        %v4780 = vadd.f32 %v4715, %v4779
        %v4781 = vpop.f32.mrf.mxu0
        %4782 = vdwg.mxu0
        %v4787 = vunpack.c.l.b16 %v4602
        %v4788 = vunpack.c.l.b16 %v4603
        %v4789 = vunpack.c.l.b16 %v4604
        %v4790 = vunpack.c.l.b16 %v4605
        %v4791 = vpack.c.b16 %v4788, %v4787
        %v4792 = vpack.c.b16 %v4790, %v4789
        %4795 = vmatpush.bf16.msra.mxu0 0
        %4796 = vmatpush.bf16.msra.mxu0 0
        %4797 = vmatpush.bf16.msra.mxu0 0
        %4798 = vmatpush.bf16.msra.mxu0 0
        %4799 = vmatpush.bf16.msra.mxu0 0
        %4800 = vmatpush.bf16.msra.mxu0 0
        %4801 = vmatpush.bf16.msra.mxu0 %v4792
        %4802 = vmatpush.bf16.msra.mxu0 %v4791
        %4803 = vmatmul.bf16.gmra.mxu0 %v4743
        %v4804 = vpop.f32.mrf.mxu0
        %v4805 = vadd.f32 %v4716, %v4804
        %v4806 = vpop.f32.mrf.mxu0
        %4807 = vdwg.mxu0
        %v4812 = vunpack.c.l.b16 %v4606
        %v4813 = vunpack.c.l.b16 %v4607
        %v4814 = vunpack.c.l.b16 %v4608
        %v4815 = vunpack.c.l.b16 %v4609
        %v4816 = vpack.c.b16 %v4813, %v4812
        %v4817 = vpack.c.b16 %v4815, %v4814
        %4820 = vmatpush.bf16.msra.mxu0 0
        %4821 = vmatpush.bf16.msra.mxu0 0
        %4822 = vmatpush.bf16.msra.mxu0 0
        %4823 = vmatpush.bf16.msra.mxu0 0
        %4824 = vmatpush.bf16.msra.mxu0 0
        %4825 = vmatpush.bf16.msra.mxu0 0
        %4826 = vmatpush.bf16.msra.mxu0 %v4817
        %4827 = vmatpush.bf16.msra.mxu0 %v4816
        %4828 = vmatmul.bf16.gmra.mxu0 %v4743
        %v4829 = vpop.f32.mrf.mxu0
        %v4830 = vadd.f32 %v4717, %v4829
        %v4831 = vpop.f32.mrf.mxu0
        %4832 = vdwg.mxu0
        %v4837 = vunpack.c.l.b16 %v4610
        %v4838 = vunpack.c.l.b16 %v4611
        %v4839 = vunpack.c.l.b16 %v4612
        %v4840 = vunpack.c.l.b16 %v4613
        %v4841 = vpack.c.b16 %v4838, %v4837
        %v4842 = vpack.c.b16 %v4840, %v4839
        %4845 = vmatpush.bf16.msra.mxu0 0
        %4846 = vmatpush.bf16.msra.mxu0 0
        %4847 = vmatpush.bf16.msra.mxu0 0
        %4848 = vmatpush.bf16.msra.mxu0 0
        %4849 = vmatpush.bf16.msra.mxu0 0
        %4850 = vmatpush.bf16.msra.mxu0 0
        %4851 = vmatpush.bf16.msra.mxu0 %v4842
        %4852 = vmatpush.bf16.msra.mxu0 %v4841
        %4853 = vmatmul.bf16.gmra.mxu0 %v4743
        %v4854 = vpop.f32.mrf.mxu0
        %v4855 = vadd.f32 %v4718, %v4854
        %v4856 = vpop.f32.mrf.mxu0
        %4857 = vdwg.mxu0
        %v4862 = vunpack.c.l.b16 %v4614
        %v4863 = vunpack.c.l.b16 %v4615
        %v4864 = vunpack.c.l.b16 %v4616
        %v4865 = vunpack.c.l.b16 %v4617
        %v4866 = vpack.c.b16 %v4863, %v4862
        %v4867 = vpack.c.b16 %v4865, %v4864
        %4870 = vmatpush.bf16.msra.mxu0 0
        %4871 = vmatpush.bf16.msra.mxu0 0
        %4872 = vmatpush.bf16.msra.mxu0 0
        %4873 = vmatpush.bf16.msra.mxu0 0
        %4874 = vmatpush.bf16.msra.mxu0 0
        %4875 = vmatpush.bf16.msra.mxu0 0
        %4876 = vmatpush.bf16.msra.mxu0 %v4867
        %4877 = vmatpush.bf16.msra.mxu0 %v4866
        %4878 = vmatmul.bf16.gmra.mxu0 %v4743
        %v4879 = vpop.f32.mrf.mxu0
        %v4880 = vadd.f32 %v4719, %v4879
        %v4881 = vpop.f32.mrf.mxu0
        %4882 = vdwg.mxu0
        %v4887 = vunpack.c.l.b16 %v4618
        %v4888 = vunpack.c.l.b16 %v4619
        %v4889 = vunpack.c.l.b16 %v4620
        %v4890 = vunpack.c.l.b16 %v4621
        %v4891 = vpack.c.b16 %v4888, %v4887
        %v4892 = vpack.c.b16 %v4890, %v4889
        %4895 = vmatpush.bf16.msra.mxu0 0
        %4896 = vmatpush.bf16.msra.mxu0 0
        %4897 = vmatpush.bf16.msra.mxu0 0
        %4898 = vmatpush.bf16.msra.mxu0 0
        %4899 = vmatpush.bf16.msra.mxu0 0
        %4900 = vmatpush.bf16.msra.mxu0 0
        %4901 = vmatpush.bf16.msra.mxu0 %v4892
        %4902 = vmatpush.bf16.msra.mxu0 %v4891
        %4903 = vmatmul.bf16.gmra.mxu0 %v4743
        %v4904 = vpop.f32.mrf.mxu0
        %v4905 = vadd.f32 %v4720, %v4904
        %v4906 = vpop.f32.mrf.mxu0
        %4907 = vdwg.mxu0
        %v4912 = vunpack.c.l.b16 %v4622
        %v4913 = vunpack.c.l.b16 %v4623
        %v4914 = vunpack.c.l.b16 %v4624
        %v4915 = vunpack.c.l.b16 %v4625
        %v4916 = vpack.c.b16 %v4913, %v4912
        %v4917 = vpack.c.b16 %v4915, %v4914
        %4920 = vmatpush.bf16.msra.mxu0 0
        %4921 = vmatpush.bf16.msra.mxu0 0
        %4922 = vmatpush.bf16.msra.mxu0 0
        %4923 = vmatpush.bf16.msra.mxu0 0
        %4924 = vmatpush.bf16.msra.mxu0 0
        %4925 = vmatpush.bf16.msra.mxu0 0
        %4926 = vmatpush.bf16.msra.mxu0 %v4917
        %4927 = vmatpush.bf16.msra.mxu0 %v4916
        %4928 = vmatmul.bf16.gmra.mxu0 %v4743
        %v4929 = vpop.f32.mrf.mxu0
        %v4930 = vadd.f32 %v4721, %v4929
        %v4931 = vpop.f32.mrf.mxu0
        %4932 = vdwg.mxu0
        %v4933 = vpack.c.bf16 %v4755, %v4755
        %v4934 = vpack.c.bf16 %v4780, %v4780
        %v4935 = vpack.c.bf16 %v4805, %v4805
        %v4936 = vpack.c.bf16 %v4830, %v4830
        %v4937 = vpack.c.bf16 %v4855, %v4855
        %v4938 = vpack.c.bf16 %v4880, %v4880
        %v4939 = vpack.c.bf16 %v4905, %v4905
        %v4940 = vpack.c.bf16 %v4930, %v4930
        %v4942 = vrot.slane %v4701, 1
        %v4943 = vrot.slane %v4701, 2
        %v4944 = vrot.slane %v4701, 3
        %v4945 = vrot.slane %v4701, 4
        %v4946 = vrot.slane %v4701, 5
        %v4947 = vrot.slane %v4701, 6
        %v4948 = vrot.slane %v4701, 7
        %v4949 = vperm.slane %v4701, 0
        %v4950 = vperm.slane %v4942, 0
        %v4951 = vperm.slane %v4943, 0
        %v4952 = vperm.slane %v4944, 0
        %v4953 = vperm.slane %v4945, 0
        %v4954 = vperm.slane %v4946, 0
        %v4955 = vperm.slane %v4947, 0
        %v4956 = vperm.slane %v4948, 0
        %v4969 = vunpack.c.l.b16 %v4626
        %v4970 = vunpack.c.l.b16 %v4627
        %v4971 = vunpack.c.l.b16 %v4628
        %v4972 = vunpack.c.l.b16 %v4629
        %v4973 = vpack.c.b16 %v4970, %v4969
        %v4974 = vpack.c.b16 %v4972, %v4971
        %4977 = vmatpush.bf16.msra.mxu0 0
        %4978 = vmatpush.bf16.msra.mxu0 0
        %4979 = vmatpush.bf16.msra.mxu0 0
        %4980 = vmatpush.bf16.msra.mxu0 0
        %4981 = vmatpush.bf16.msra.mxu0 0
        %4982 = vmatpush.bf16.msra.mxu0 0
        %4983 = vmatpush.bf16.msra.mxu0 %v4974
        %4984 = vmatpush.bf16.msra.mxu0 %v4973
        %4985 = vmatmul.bf16.gmra.mxu0 %v716
        %v4986 = vpop.f32.mrf.mxu0
        %v4987 = vadd.f32 %v4949, %v4986
        %v4988 = vpop.f32.mrf.mxu0
        %4989 = vdwg.mxu0
        %v4994 = vunpack.c.l.b16 %v4630
        %v4995 = vunpack.c.l.b16 %v4631
        %v4996 = vunpack.c.l.b16 %v4632
        %v4997 = vunpack.c.l.b16 %v4633
        %v4998 = vpack.c.b16 %v4995, %v4994
        %v4999 = vpack.c.b16 %v4997, %v4996
        %5002 = vmatpush.bf16.msra.mxu0 0
        %5003 = vmatpush.bf16.msra.mxu0 0
        %5004 = vmatpush.bf16.msra.mxu0 0
        %5005 = vmatpush.bf16.msra.mxu0 0
        %5006 = vmatpush.bf16.msra.mxu0 0
        %5007 = vmatpush.bf16.msra.mxu0 0
        %5008 = vmatpush.bf16.msra.mxu0 %v4999
        %5009 = vmatpush.bf16.msra.mxu0 %v4998
        %5010 = vmatmul.bf16.gmra.mxu0 %v716
        %v5011 = vpop.f32.mrf.mxu0
        %v5012 = vadd.f32 %v4950, %v5011
        %v5013 = vpop.f32.mrf.mxu0
        %5014 = vdwg.mxu0
        %v5019 = vunpack.c.l.b16 %v4634
        %v5020 = vunpack.c.l.b16 %v4635
        %v5021 = vunpack.c.l.b16 %v4636
        %v5022 = vunpack.c.l.b16 %v4637
        %v5023 = vpack.c.b16 %v5020, %v5019
        %v5024 = vpack.c.b16 %v5022, %v5021
        %5027 = vmatpush.bf16.msra.mxu0 0
        %5028 = vmatpush.bf16.msra.mxu0 0
        %5029 = vmatpush.bf16.msra.mxu0 0
        %5030 = vmatpush.bf16.msra.mxu0 0
        %5031 = vmatpush.bf16.msra.mxu0 0
        %5032 = vmatpush.bf16.msra.mxu0 0
        %5033 = vmatpush.bf16.msra.mxu0 %v5024
        %5034 = vmatpush.bf16.msra.mxu0 %v5023
        %5035 = vmatmul.bf16.gmra.mxu0 %v716
        %v5036 = vpop.f32.mrf.mxu0
        %v5037 = vadd.f32 %v4951, %v5036
        %v5038 = vpop.f32.mrf.mxu0
        %5039 = vdwg.mxu0
        %v5044 = vunpack.c.l.b16 %v4638
        %v5045 = vunpack.c.l.b16 %v4639
        %v5046 = vunpack.c.l.b16 %v4640
        %v5047 = vunpack.c.l.b16 %v4641
        %v5048 = vpack.c.b16 %v5045, %v5044
        %v5049 = vpack.c.b16 %v5047, %v5046
        %5052 = vmatpush.bf16.msra.mxu0 0
        %5053 = vmatpush.bf16.msra.mxu0 0
        %5054 = vmatpush.bf16.msra.mxu0 0
        %5055 = vmatpush.bf16.msra.mxu0 0
        %5056 = vmatpush.bf16.msra.mxu0 0
        %5057 = vmatpush.bf16.msra.mxu0 0
        %5058 = vmatpush.bf16.msra.mxu0 %v5049
        %5059 = vmatpush.bf16.msra.mxu0 %v5048
        %5060 = vmatmul.bf16.gmra.mxu0 %v716
        %v5061 = vpop.f32.mrf.mxu0
        %v5062 = vadd.f32 %v4952, %v5061
        %v5063 = vpop.f32.mrf.mxu0
        %5064 = vdwg.mxu0
        %v5069 = vunpack.c.l.b16 %v4642
        %v5070 = vunpack.c.l.b16 %v4643
        %v5071 = vunpack.c.l.b16 %v4644
        %v5072 = vunpack.c.l.b16 %v4645
        %v5073 = vpack.c.b16 %v5070, %v5069
        %v5074 = vpack.c.b16 %v5072, %v5071
        %5077 = vmatpush.bf16.msra.mxu0 0
        %5078 = vmatpush.bf16.msra.mxu0 0
        %5079 = vmatpush.bf16.msra.mxu0 0
        %5080 = vmatpush.bf16.msra.mxu0 0
        %5081 = vmatpush.bf16.msra.mxu0 0
        %5082 = vmatpush.bf16.msra.mxu0 0
        %5083 = vmatpush.bf16.msra.mxu0 %v5074
        %5084 = vmatpush.bf16.msra.mxu0 %v5073
        %5085 = vmatmul.bf16.gmra.mxu0 %v716
        %v5086 = vpop.f32.mrf.mxu0
        %v5087 = vadd.f32 %v4953, %v5086
        %v5088 = vpop.f32.mrf.mxu0
        %5089 = vdwg.mxu0
        %v5094 = vunpack.c.l.b16 %v4646
        %v5095 = vunpack.c.l.b16 %v4647
        %v5096 = vunpack.c.l.b16 %v4648
        %v5097 = vunpack.c.l.b16 %v4649
        %v5098 = vpack.c.b16 %v5095, %v5094
        %v5099 = vpack.c.b16 %v5097, %v5096
        %5102 = vmatpush.bf16.msra.mxu0 0
        %5103 = vmatpush.bf16.msra.mxu0 0
        %5104 = vmatpush.bf16.msra.mxu0 0
        %5105 = vmatpush.bf16.msra.mxu0 0
        %5106 = vmatpush.bf16.msra.mxu0 0
        %5107 = vmatpush.bf16.msra.mxu0 0
        %5108 = vmatpush.bf16.msra.mxu0 %v5099
        %5109 = vmatpush.bf16.msra.mxu0 %v5098
        %5110 = vmatmul.bf16.gmra.mxu0 %v716
        %v5111 = vpop.f32.mrf.mxu0
        %v5112 = vadd.f32 %v4954, %v5111
        %v5113 = vpop.f32.mrf.mxu0
        %5114 = vdwg.mxu0
        %v5119 = vunpack.c.l.b16 %v4650
        %v5120 = vunpack.c.l.b16 %v4651
        %v5121 = vunpack.c.l.b16 %v4652
        %v5122 = vunpack.c.l.b16 %v4653
        %v5123 = vpack.c.b16 %v5120, %v5119
        %v5124 = vpack.c.b16 %v5122, %v5121
        %5127 = vmatpush.bf16.msra.mxu0 0
        %5128 = vmatpush.bf16.msra.mxu0 0
        %5129 = vmatpush.bf16.msra.mxu0 0
        %5130 = vmatpush.bf16.msra.mxu0 0
        %5131 = vmatpush.bf16.msra.mxu0 0
        %5132 = vmatpush.bf16.msra.mxu0 0
        %5133 = vmatpush.bf16.msra.mxu0 %v5124
        %5134 = vmatpush.bf16.msra.mxu0 %v5123
        %5135 = vmatmul.bf16.gmra.mxu0 %v716
        %v5136 = vpop.f32.mrf.mxu0
        %v5137 = vadd.f32 %v4955, %v5136
        %v5138 = vpop.f32.mrf.mxu0
        %5139 = vdwg.mxu0
        %v5144 = vunpack.c.l.b16 %v4654
        %v5145 = vunpack.c.l.b16 %v4655
        %v5146 = vunpack.c.l.b16 %v4656
        %v5147 = vunpack.c.l.b16 %v4657
        %v5148 = vpack.c.b16 %v5145, %v5144
        %v5149 = vpack.c.b16 %v5147, %v5146
        %5152 = vmatpush.bf16.msra.mxu0 0
        %5153 = vmatpush.bf16.msra.mxu0 0
        %5154 = vmatpush.bf16.msra.mxu0 0
        %5155 = vmatpush.bf16.msra.mxu0 0
        %5156 = vmatpush.bf16.msra.mxu0 0
        %5157 = vmatpush.bf16.msra.mxu0 0
        %5158 = vmatpush.bf16.msra.mxu0 %v5149
        %5159 = vmatpush.bf16.msra.mxu0 %v5148
        %5160 = vmatmul.bf16.gmra.mxu0 %v716
        %v5161 = vpop.f32.mrf.mxu0
        %v5162 = vadd.f32 %v4956, %v5161
        %v5163 = vpop.f32.mrf.mxu0
        %5164 = vdwg.mxu0
        %v5165 = vpack.c.bf16 %v4987, %v4987
        %v5166 = vpack.c.bf16 %v5012, %v5012
        %v5167 = vpack.c.bf16 %v5037, %v5037
        %v5168 = vpack.c.bf16 %v5062, %v5062
        %v5169 = vpack.c.bf16 %v5087, %v5087
        %v5170 = vpack.c.bf16 %v5112, %v5112
        %v5171 = vpack.c.bf16 %v5137, %v5137
        %v5172 = vpack.c.bf16 %v5162, %v5162
        %v5174 = vrot.slane %v4702, 1
        %v5175 = vrot.slane %v4702, 2
        %v5176 = vrot.slane %v4702, 3
        %v5177 = vrot.slane %v4702, 4
        %v5178 = vrot.slane %v4702, 5
        %v5179 = vrot.slane %v4702, 6
        %v5180 = vrot.slane %v4702, 7
        %v5181 = vperm.slane %v4702, 0
        %v5182 = vperm.slane %v5174, 0
        %v5183 = vperm.slane %v5175, 0
        %v5184 = vperm.slane %v5176, 0
        %v5185 = vperm.slane %v5177, 0
        %v5186 = vperm.slane %v5178, 0
        %v5187 = vperm.slane %v5179, 0
        %v5188 = vperm.slane %v5180, 0
        %v5201 = vunpack.c.l.b16 %v4658
        %v5202 = vunpack.c.l.b16 %v4659
        %v5203 = vunpack.c.l.b16 %v4660
        %v5204 = vunpack.c.l.b16 %v4661
        %v5205 = vpack.c.b16 %v5202, %v5201
        %v5206 = vpack.c.b16 %v5204, %v5203
        %5209 = vmatpush.bf16.msra.mxu0 0
        %5210 = vmatpush.bf16.msra.mxu0 0
        %5211 = vmatpush.bf16.msra.mxu0 0
        %5212 = vmatpush.bf16.msra.mxu0 0
        %5213 = vmatpush.bf16.msra.mxu0 0
        %5214 = vmatpush.bf16.msra.mxu0 0
        %5215 = vmatpush.bf16.msra.mxu0 %v5206
        %5216 = vmatpush.bf16.msra.mxu0 %v5205
        %5217 = vmatmul.bf16.gmra.mxu0 %v716
        %v5218 = vpop.f32.mrf.mxu0
        %v5219 = vadd.f32 %v5181, %v5218
        %v5220 = vpop.f32.mrf.mxu0
        %5221 = vdwg.mxu0
        %v5226 = vunpack.c.l.b16 %v4662
        %v5227 = vunpack.c.l.b16 %v4663
        %v5228 = vunpack.c.l.b16 %v4664
        %v5229 = vunpack.c.l.b16 %v4665
        %v5230 = vpack.c.b16 %v5227, %v5226
        %v5231 = vpack.c.b16 %v5229, %v5228
        %5234 = vmatpush.bf16.msra.mxu0 0
        %5235 = vmatpush.bf16.msra.mxu0 0
        %5236 = vmatpush.bf16.msra.mxu0 0
        %5237 = vmatpush.bf16.msra.mxu0 0
        %5238 = vmatpush.bf16.msra.mxu0 0
        %5239 = vmatpush.bf16.msra.mxu0 0
        %5240 = vmatpush.bf16.msra.mxu0 %v5231
        %5241 = vmatpush.bf16.msra.mxu0 %v5230
        %5242 = vmatmul.bf16.gmra.mxu0 %v716
        %v5243 = vpop.f32.mrf.mxu0
        %v5244 = vadd.f32 %v5182, %v5243
        %v5245 = vpop.f32.mrf.mxu0
        %5246 = vdwg.mxu0
        %v5251 = vunpack.c.l.b16 %v4666
        %v5252 = vunpack.c.l.b16 %v4667
        %v5253 = vunpack.c.l.b16 %v4668
        %v5254 = vunpack.c.l.b16 %v4669
        %v5255 = vpack.c.b16 %v5252, %v5251
        %v5256 = vpack.c.b16 %v5254, %v5253
        %5259 = vmatpush.bf16.msra.mxu0 0
        %5260 = vmatpush.bf16.msra.mxu0 0
        %5261 = vmatpush.bf16.msra.mxu0 0
        %5262 = vmatpush.bf16.msra.mxu0 0
        %5263 = vmatpush.bf16.msra.mxu0 0
        %5264 = vmatpush.bf16.msra.mxu0 0
        %5265 = vmatpush.bf16.msra.mxu0 %v5256
        %5266 = vmatpush.bf16.msra.mxu0 %v5255
        %5267 = vmatmul.bf16.gmra.mxu0 %v716
        %v5268 = vpop.f32.mrf.mxu0
        %v5269 = vadd.f32 %v5183, %v5268
        %v5270 = vpop.f32.mrf.mxu0
        %5271 = vdwg.mxu0
        %v5276 = vunpack.c.l.b16 %v4670
        %v5277 = vunpack.c.l.b16 %v4671
        %v5278 = vunpack.c.l.b16 %v4672
        %v5279 = vunpack.c.l.b16 %v4673
        %v5280 = vpack.c.b16 %v5277, %v5276
        %v5281 = vpack.c.b16 %v5279, %v5278
        %5284 = vmatpush.bf16.msra.mxu0 0
        %5285 = vmatpush.bf16.msra.mxu0 0
        %5286 = vmatpush.bf16.msra.mxu0 0
        %5287 = vmatpush.bf16.msra.mxu0 0
        %5288 = vmatpush.bf16.msra.mxu0 0
        %5289 = vmatpush.bf16.msra.mxu0 0
        %5290 = vmatpush.bf16.msra.mxu0 %v5281
        %5291 = vmatpush.bf16.msra.mxu0 %v5280
        %5292 = vmatmul.bf16.gmra.mxu0 %v716
        %v5293 = vpop.f32.mrf.mxu0
        %v5294 = vadd.f32 %v5184, %v5293
        %v5295 = vpop.f32.mrf.mxu0
        %5296 = vdwg.mxu0
        %v5301 = vunpack.c.l.b16 %v4674
        %v5302 = vunpack.c.l.b16 %v4675
        %v5303 = vunpack.c.l.b16 %v4676
        %v5304 = vunpack.c.l.b16 %v4677
        %v5305 = vpack.c.b16 %v5302, %v5301
        %v5306 = vpack.c.b16 %v5304, %v5303
        %5309 = vmatpush.bf16.msra.mxu0 0
        %5310 = vmatpush.bf16.msra.mxu0 0
        %5311 = vmatpush.bf16.msra.mxu0 0
        %5312 = vmatpush.bf16.msra.mxu0 0
        %5313 = vmatpush.bf16.msra.mxu0 0
        %5314 = vmatpush.bf16.msra.mxu0 0
        %5315 = vmatpush.bf16.msra.mxu0 %v5306
        %5316 = vmatpush.bf16.msra.mxu0 %v5305
        %5317 = vmatmul.bf16.gmra.mxu0 %v716
        %v5318 = vpop.f32.mrf.mxu0
        %v5319 = vadd.f32 %v5185, %v5318
        %v5320 = vpop.f32.mrf.mxu0
        %5321 = vdwg.mxu0
        %v5326 = vunpack.c.l.b16 %v4678
        %v5327 = vunpack.c.l.b16 %v4679
        %v5328 = vunpack.c.l.b16 %v4680
        %v5329 = vunpack.c.l.b16 %v4681
        %v5330 = vpack.c.b16 %v5327, %v5326
        %v5331 = vpack.c.b16 %v5329, %v5328
        %5334 = vmatpush.bf16.msra.mxu0 0
        %5335 = vmatpush.bf16.msra.mxu0 0
        %5336 = vmatpush.bf16.msra.mxu0 0
        %5337 = vmatpush.bf16.msra.mxu0 0
        %5338 = vmatpush.bf16.msra.mxu0 0
        %5339 = vmatpush.bf16.msra.mxu0 0
        %5340 = vmatpush.bf16.msra.mxu0 %v5331
        %5341 = vmatpush.bf16.msra.mxu0 %v5330
        %5342 = vmatmul.bf16.gmra.mxu0 %v716
        %v5343 = vpop.f32.mrf.mxu0
        %v5344 = vadd.f32 %v5186, %v5343
        %v5345 = vpop.f32.mrf.mxu0
        %5346 = vdwg.mxu0
        %v5351 = vunpack.c.l.b16 %v4682
        %v5352 = vunpack.c.l.b16 %v4683
        %v5353 = vunpack.c.l.b16 %v4684
        %v5354 = vunpack.c.l.b16 %v4685
        %v5355 = vpack.c.b16 %v5352, %v5351
        %v5356 = vpack.c.b16 %v5354, %v5353
        %5359 = vmatpush.bf16.msra.mxu0 0
        %5360 = vmatpush.bf16.msra.mxu0 0
        %5361 = vmatpush.bf16.msra.mxu0 0
        %5362 = vmatpush.bf16.msra.mxu0 0
        %5363 = vmatpush.bf16.msra.mxu0 0
        %5364 = vmatpush.bf16.msra.mxu0 0
        %5365 = vmatpush.bf16.msra.mxu0 %v5356
        %5366 = vmatpush.bf16.msra.mxu0 %v5355
        %5367 = vmatmul.bf16.gmra.mxu0 %v716
        %v5368 = vpop.f32.mrf.mxu0
        %v5369 = vadd.f32 %v5187, %v5368
        %v5370 = vpop.f32.mrf.mxu0
        %5371 = vdwg.mxu0
        %v5376 = vunpack.c.l.b16 %v4686
        %v5377 = vunpack.c.l.b16 %v4687
        %v5378 = vunpack.c.l.b16 %v4688
        %v5379 = vunpack.c.l.b16 %v4689
        %v5380 = vpack.c.b16 %v5377, %v5376
        %v5381 = vpack.c.b16 %v5379, %v5378
        %5384 = vmatpush.bf16.msra.mxu0 0
        %5385 = vmatpush.bf16.msra.mxu0 0
        %5386 = vmatpush.bf16.msra.mxu0 0
        %5387 = vmatpush.bf16.msra.mxu0 0
        %5388 = vmatpush.bf16.msra.mxu0 0
        %5389 = vmatpush.bf16.msra.mxu0 0
        %5390 = vmatpush.bf16.msra.mxu0 %v5381
        %5391 = vmatpush.bf16.msra.mxu0 %v5380
        %5392 = vmatmul.bf16.gmra.mxu0 %v716
        %v5393 = vpop.f32.mrf.mxu0
        %v5394 = vadd.f32 %v5188, %v5393
        %v5395 = vpop.f32.mrf.mxu0
        %5396 = vdwg.mxu0
        %v5397 = vpack.c.bf16 %v5219, %v5219
        %v5398 = vpack.c.bf16 %v5244, %v5244
        %v5399 = vpack.c.bf16 %v5269, %v5269
        %v5400 = vpack.c.bf16 %v5294, %v5294
        %v5401 = vpack.c.bf16 %v5319, %v5319
        %v5402 = vpack.c.bf16 %v5344, %v5344
        %v5403 = vpack.c.bf16 %v5369, %v5369
        %v5404 = vpack.c.bf16 %v5394, %v5394
        %v5406 = vsel %vm1146, %v4933, 0
        %v5409 = vsel %vm1146, %v5165, 0
        %5411 = vmatpush.bf16.xpose.msra.mxu0 0
        %5412 = vmatpush.bf16.xpose.msra.mxu0 0
        %5413 = vmatpush.bf16.xpose.msra.mxu0 0
        %5414 = vmatpush.bf16.xpose.msra.mxu0 0
        %5415 = vmatpush.bf16.xpose.msra.mxu0 0
        %5416 = vmatpush.bf16.xpose.msra.mxu0 0
        %5417 = vmatpush.bf16.xpose.msra.mxu0 0
        %5418 = vmatpush.bf16.xpose.msra.mxu0 %v5409
        %5419 = vmatmul.bf16.gmra.mxu0 %v5406
        %v5420 = vpop.f32.mrf.mxu0
        %v5421 = vadd.f32 0.0, %v5420
        %v5422 = vpop.f32.mrf.mxu0
        %5423 = vdwg.mxu0
        %v5425 = vsel %vm1146, %v4934, 0
        %v5428 = vsel %vm1146, %v5166, 0
        %5430 = vmatpush.bf16.xpose.msra.mxu0 0
        %5431 = vmatpush.bf16.xpose.msra.mxu0 0
        %5432 = vmatpush.bf16.xpose.msra.mxu0 0
        %5433 = vmatpush.bf16.xpose.msra.mxu0 0
        %5434 = vmatpush.bf16.xpose.msra.mxu0 0
        %5435 = vmatpush.bf16.xpose.msra.mxu0 0
        %5436 = vmatpush.bf16.xpose.msra.mxu0 0
        %5437 = vmatpush.bf16.xpose.msra.mxu0 %v5428
        %5438 = vmatmul.bf16.gmra.mxu0 %v5425
        %v5439 = vpop.f32.mrf.mxu0
        %v5440 = vadd.f32 0.0, %v5439
        %v5441 = vpop.f32.mrf.mxu0
        %5442 = vdwg.mxu0
        %v5444 = vsel %vm1146, %v4935, 0
        %v5447 = vsel %vm1146, %v5167, 0
        %5449 = vmatpush.bf16.xpose.msra.mxu0 0
        %5450 = vmatpush.bf16.xpose.msra.mxu0 0
        %5451 = vmatpush.bf16.xpose.msra.mxu0 0
        %5452 = vmatpush.bf16.xpose.msra.mxu0 0
        %5453 = vmatpush.bf16.xpose.msra.mxu0 0
        %5454 = vmatpush.bf16.xpose.msra.mxu0 0
        %5455 = vmatpush.bf16.xpose.msra.mxu0 0
        %5456 = vmatpush.bf16.xpose.msra.mxu0 %v5447
        %5457 = vmatmul.bf16.gmra.mxu0 %v5444
        %v5458 = vpop.f32.mrf.mxu0
        %v5459 = vadd.f32 0.0, %v5458
        %v5460 = vpop.f32.mrf.mxu0
        %5461 = vdwg.mxu0
        %v5463 = vsel %vm1146, %v4936, 0
        %v5466 = vsel %vm1146, %v5168, 0
        %5468 = vmatpush.bf16.xpose.msra.mxu0 0
        %5469 = vmatpush.bf16.xpose.msra.mxu0 0
        %5470 = vmatpush.bf16.xpose.msra.mxu0 0
        %5471 = vmatpush.bf16.xpose.msra.mxu0 0
        %5472 = vmatpush.bf16.xpose.msra.mxu0 0
        %5473 = vmatpush.bf16.xpose.msra.mxu0 0
        %5474 = vmatpush.bf16.xpose.msra.mxu0 0
        %5475 = vmatpush.bf16.xpose.msra.mxu0 %v5466
        %5476 = vmatmul.bf16.gmra.mxu0 %v5463
        %v5477 = vpop.f32.mrf.mxu0
        %v5478 = vadd.f32 0.0, %v5477
        %v5479 = vpop.f32.mrf.mxu0
        %5480 = vdwg.mxu0
        %v5482 = vsel %vm1146, %v4937, 0
        %v5485 = vsel %vm1146, %v5169, 0
        %5487 = vmatpush.bf16.xpose.msra.mxu0 0
        %5488 = vmatpush.bf16.xpose.msra.mxu0 0
        %5489 = vmatpush.bf16.xpose.msra.mxu0 0
        %5490 = vmatpush.bf16.xpose.msra.mxu0 0
        %5491 = vmatpush.bf16.xpose.msra.mxu0 0
        %5492 = vmatpush.bf16.xpose.msra.mxu0 0
        %5493 = vmatpush.bf16.xpose.msra.mxu0 0
        %5494 = vmatpush.bf16.xpose.msra.mxu0 %v5485
        %5495 = vmatmul.bf16.gmra.mxu0 %v5482
        %v5496 = vpop.f32.mrf.mxu0
        %v5497 = vadd.f32 0.0, %v5496
        %v5498 = vpop.f32.mrf.mxu0
        %5499 = vdwg.mxu0
        %v5501 = vsel %vm1146, %v4938, 0
        %v5504 = vsel %vm1146, %v5170, 0
        %5506 = vmatpush.bf16.xpose.msra.mxu0 0
        %5507 = vmatpush.bf16.xpose.msra.mxu0 0
        %5508 = vmatpush.bf16.xpose.msra.mxu0 0
        %5509 = vmatpush.bf16.xpose.msra.mxu0 0
        %5510 = vmatpush.bf16.xpose.msra.mxu0 0
        %5511 = vmatpush.bf16.xpose.msra.mxu0 0
        %5512 = vmatpush.bf16.xpose.msra.mxu0 0
        %5513 = vmatpush.bf16.xpose.msra.mxu0 %v5504
        %5514 = vmatmul.bf16.gmra.mxu0 %v5501
        %v5515 = vpop.f32.mrf.mxu0
        %v5516 = vadd.f32 0.0, %v5515
        %v5517 = vpop.f32.mrf.mxu0
        %5518 = vdwg.mxu0
        %v5520 = vsel %vm1146, %v4939, 0
        %v5523 = vsel %vm1146, %v5171, 0
        %5525 = vmatpush.bf16.xpose.msra.mxu0 0
        %5526 = vmatpush.bf16.xpose.msra.mxu0 0
        %5527 = vmatpush.bf16.xpose.msra.mxu0 0
        %5528 = vmatpush.bf16.xpose.msra.mxu0 0
        %5529 = vmatpush.bf16.xpose.msra.mxu0 0
        %5530 = vmatpush.bf16.xpose.msra.mxu0 0
        %5531 = vmatpush.bf16.xpose.msra.mxu0 0
        %5532 = vmatpush.bf16.xpose.msra.mxu0 %v5523
        %5533 = vmatmul.bf16.gmra.mxu0 %v5520
        %v5534 = vpop.f32.mrf.mxu0
        %v5535 = vadd.f32 0.0, %v5534
        %v5536 = vpop.f32.mrf.mxu0
        %5537 = vdwg.mxu0
        %v5539 = vsel %vm1146, %v4940, 0
        %v5542 = vsel %vm1146, %v5172, 0
        %5544 = vmatpush.bf16.xpose.msra.mxu0 0
        %5545 = vmatpush.bf16.xpose.msra.mxu0 0
        %5546 = vmatpush.bf16.xpose.msra.mxu0 0
        %5547 = vmatpush.bf16.xpose.msra.mxu0 0
        %5548 = vmatpush.bf16.xpose.msra.mxu0 0
        %5549 = vmatpush.bf16.xpose.msra.mxu0 0
        %5550 = vmatpush.bf16.xpose.msra.mxu0 0
        %5551 = vmatpush.bf16.xpose.msra.mxu0 %v5542
        %5552 = vmatmul.bf16.gmra.mxu0 %v5539
        %v5553 = vpop.f32.mrf.mxu0
        %v5554 = vadd.f32 0.0, %v5553
        %v5555 = vpop.f32.mrf.mxu0
        %5556 = vdwg.mxu0
        %v5557 = vsel %vm1299, %v5421, -inf
        %5558 = vmax.xlane.f32.xlu0 %v5557
        %v5559 = vpop.xlane.xlu0 %5558
        %v5560 = vsel %vm1299, %v5440, -inf
        %5561 = vmax.xlane.f32.xlu0 %v5560
        %v5562 = vpop.xlane.xlu0 %5561
        %v5563 = vsel %vm1299, %v5459, -inf
        %5564 = vmax.xlane.f32.xlu0 %v5563
        %v5565 = vpop.xlane.xlu0 %5564
        %v5566 = vsel %vm1299, %v5478, -inf
        %5567 = vmax.xlane.f32.xlu0 %v5566
        %v5568 = vpop.xlane.xlu0 %5567
        %v5569 = vsel %vm1299, %v5497, -inf
        %5570 = vmax.xlane.f32.xlu0 %v5569
        %v5571 = vpop.xlane.xlu0 %5570
        %v5572 = vsel %vm1299, %v5516, -inf
        %5573 = vmax.xlane.f32.xlu0 %v5572
        %v5574 = vpop.xlane.xlu0 %5573
        %v5575 = vsel %vm1299, %v5535, -inf
        %5576 = vmax.xlane.f32.xlu0 %v5575
        %v5577 = vpop.xlane.xlu0 %5576
        %v5578 = vsel %vm1299, %v5554, -inf
        %5579 = vmax.xlane.f32.xlu0 %v5578
        %v5580 = vpop.xlane.xlu0 %5579
        %v5581 = vsub.f32 %v5421, %v5559
        %v5582 = vsub.f32 %v5440, %v5562
        %v5583 = vsub.f32 %v5459, %v5565
        %v5584 = vsub.f32 %v5478, %v5568
        %v5585 = vsub.f32 %v5497, %v5571
        %v5586 = vsub.f32 %v5516, %v5574
        %v5587 = vsub.f32 %v5535, %v5577
        %v5588 = vsub.f32 %v5554, %v5580
        %v5589 = vmul.f32 %v5581, 1.442695
        %v5590 = vpow.pop %v5589
        %v5591 = vmul.f32 %v5582, 1.442695
        %v5592 = vpow.pop %v5591
        %v5593 = vmul.f32 %v5583, 1.442695
        %v5594 = vpow.pop %v5593
        %v5595 = vmul.f32 %v5584, 1.442695
        %v5596 = vpow.pop %v5595
        %v5597 = vmul.f32 %v5585, 1.442695
        %v5598 = vpow.pop %v5597
        %v5599 = vmul.f32 %v5586, 1.442695
        %v5600 = vpow.pop %v5599
        %v5601 = vmul.f32 %v5587, 1.442695
        %v5602 = vpow.pop %v5601
        %v5603 = vmul.f32 %v5588, 1.442695
        %v5604 = vpow.pop %v5603
        %v5605 = vsel %vm1299, %v5590, 0.0
        %5606 = vadd.xlane.f32.xlu0 %v5605
        %v5607 = vpop.xlane.xlu0 %5606
        %v5608 = vsel %vm1299, %v5592, 0.0
        %5609 = vadd.xlane.f32.xlu0 %v5608
        %v5610 = vpop.xlane.xlu0 %5609
        %v5611 = vsel %vm1299, %v5594, 0.0
        %5612 = vadd.xlane.f32.xlu0 %v5611
        %v5613 = vpop.xlane.xlu0 %5612
        %v5614 = vsel %vm1299, %v5596, 0.0
        %5615 = vadd.xlane.f32.xlu0 %v5614
        %v5616 = vpop.xlane.xlu0 %5615
        %v5617 = vsel %vm1299, %v5598, 0.0
        %5618 = vadd.xlane.f32.xlu0 %v5617
        %v5619 = vpop.xlane.xlu0 %5618
        %v5620 = vsel %vm1299, %v5600, 0.0
        %5621 = vadd.xlane.f32.xlu0 %v5620
        %v5622 = vpop.xlane.xlu0 %5621
        %v5623 = vsel %vm1299, %v5602, 0.0
        %5624 = vadd.xlane.f32.xlu0 %v5623
        %v5625 = vpop.xlane.xlu0 %5624
        %v5626 = vsel %vm1299, %v5604, 0.0
        %5627 = vadd.xlane.f32.xlu0 %v5626
        %v5628 = vpop.xlane.xlu0 %5627
        %v5629 = vpack.c.bf16 %v5590, %v5590
        %v5630 = vpack.c.bf16 %v5592, %v5592
        %v5631 = vpack.c.bf16 %v5594, %v5594
        %v5632 = vpack.c.bf16 %v5596, %v5596
        %v5633 = vpack.c.bf16 %v5598, %v5598
        %v5634 = vpack.c.bf16 %v5600, %v5600
        %v5635 = vpack.c.bf16 %v5602, %v5602
        %v5636 = vpack.c.bf16 %v5604, %v5604
        %v5638 = vsel %vm1299, %v5629, 0
        %v5641 = vsel %vm1383, %v5397, 0
        %5643 = vmatpush.bf16.msra.mxu0 0
        %5644 = vmatpush.bf16.msra.mxu0 0
        %5645 = vmatpush.bf16.msra.mxu0 0
        %5646 = vmatpush.bf16.msra.mxu0 0
        %5647 = vmatpush.bf16.msra.mxu0 0
        %5648 = vmatpush.bf16.msra.mxu0 0
        %5649 = vmatpush.bf16.msra.mxu0 0
        %5650 = vmatpush.bf16.msra.mxu0 %v5641
        %5651 = vmatmul.bf16.gmra.mxu0 %v5638
        %v5652 = vpop.f32.mrf.mxu0
        %v5653 = vadd.f32 0.0, %v5652
        %v5654 = vpop.f32.mrf.mxu0
        %5655 = vdwg.mxu0
        %v5657 = vsel %vm1299, %v5630, 0
        %v5660 = vsel %vm1383, %v5398, 0
        %5662 = vmatpush.bf16.msra.mxu0 0
        %5663 = vmatpush.bf16.msra.mxu0 0
        %5664 = vmatpush.bf16.msra.mxu0 0
        %5665 = vmatpush.bf16.msra.mxu0 0
        %5666 = vmatpush.bf16.msra.mxu0 0
        %5667 = vmatpush.bf16.msra.mxu0 0
        %5668 = vmatpush.bf16.msra.mxu0 0
        %5669 = vmatpush.bf16.msra.mxu0 %v5660
        %5670 = vmatmul.bf16.gmra.mxu0 %v5657
        %v5671 = vpop.f32.mrf.mxu0
        %v5672 = vadd.f32 0.0, %v5671
        %v5673 = vpop.f32.mrf.mxu0
        %5674 = vdwg.mxu0
        %v5676 = vsel %vm1299, %v5631, 0
        %v5679 = vsel %vm1383, %v5399, 0
        %5681 = vmatpush.bf16.msra.mxu0 0
        %5682 = vmatpush.bf16.msra.mxu0 0
        %5683 = vmatpush.bf16.msra.mxu0 0
        %5684 = vmatpush.bf16.msra.mxu0 0
        %5685 = vmatpush.bf16.msra.mxu0 0
        %5686 = vmatpush.bf16.msra.mxu0 0
        %5687 = vmatpush.bf16.msra.mxu0 0
        %5688 = vmatpush.bf16.msra.mxu0 %v5679
        %5689 = vmatmul.bf16.gmra.mxu0 %v5676
        %v5690 = vpop.f32.mrf.mxu0
        %v5691 = vadd.f32 0.0, %v5690
        %v5692 = vpop.f32.mrf.mxu0
        %5693 = vdwg.mxu0
        %v5695 = vsel %vm1299, %v5632, 0
        %v5698 = vsel %vm1383, %v5400, 0
        %5700 = vmatpush.bf16.msra.mxu0 0
        %5701 = vmatpush.bf16.msra.mxu0 0
        %5702 = vmatpush.bf16.msra.mxu0 0
        %5703 = vmatpush.bf16.msra.mxu0 0
        %5704 = vmatpush.bf16.msra.mxu0 0
        %5705 = vmatpush.bf16.msra.mxu0 0
        %5706 = vmatpush.bf16.msra.mxu0 0
        %5707 = vmatpush.bf16.msra.mxu0 %v5698
        %5708 = vmatmul.bf16.gmra.mxu0 %v5695
        %v5709 = vpop.f32.mrf.mxu0
        %v5710 = vadd.f32 0.0, %v5709
        %v5711 = vpop.f32.mrf.mxu0
        %5712 = vdwg.mxu0
        %v5714 = vsel %vm1299, %v5633, 0
        %v5717 = vsel %vm1383, %v5401, 0
        %5719 = vmatpush.bf16.msra.mxu0 0
        %5720 = vmatpush.bf16.msra.mxu0 0
        %5721 = vmatpush.bf16.msra.mxu0 0
        %5722 = vmatpush.bf16.msra.mxu0 0
        %5723 = vmatpush.bf16.msra.mxu0 0
        %5724 = vmatpush.bf16.msra.mxu0 0
        %5725 = vmatpush.bf16.msra.mxu0 0
        %5726 = vmatpush.bf16.msra.mxu0 %v5717
        %5727 = vmatmul.bf16.gmra.mxu0 %v5714
        %v5728 = vpop.f32.mrf.mxu0
        %v5729 = vadd.f32 0.0, %v5728
        %v5730 = vpop.f32.mrf.mxu0
        %5731 = vdwg.mxu0
        %v5733 = vsel %vm1299, %v5634, 0
        %v5736 = vsel %vm1383, %v5402, 0
        %5738 = vmatpush.bf16.msra.mxu0 0
        %5739 = vmatpush.bf16.msra.mxu0 0
        %5740 = vmatpush.bf16.msra.mxu0 0
        %5741 = vmatpush.bf16.msra.mxu0 0
        %5742 = vmatpush.bf16.msra.mxu0 0
        %5743 = vmatpush.bf16.msra.mxu0 0
        %5744 = vmatpush.bf16.msra.mxu0 0
        %5745 = vmatpush.bf16.msra.mxu0 %v5736
        %5746 = vmatmul.bf16.gmra.mxu0 %v5733
        %v5747 = vpop.f32.mrf.mxu0
        %v5748 = vadd.f32 0.0, %v5747
        %v5749 = vpop.f32.mrf.mxu0
        %5750 = vdwg.mxu0
        %v5752 = vsel %vm1299, %v5635, 0
        %v5755 = vsel %vm1383, %v5403, 0
        %5757 = vmatpush.bf16.msra.mxu0 0
        %5758 = vmatpush.bf16.msra.mxu0 0
        %5759 = vmatpush.bf16.msra.mxu0 0
        %5760 = vmatpush.bf16.msra.mxu0 0
        %5761 = vmatpush.bf16.msra.mxu0 0
        %5762 = vmatpush.bf16.msra.mxu0 0
        %5763 = vmatpush.bf16.msra.mxu0 0
        %5764 = vmatpush.bf16.msra.mxu0 %v5755
        %5765 = vmatmul.bf16.gmra.mxu0 %v5752
        %v5766 = vpop.f32.mrf.mxu0
        %v5767 = vadd.f32 0.0, %v5766
        %v5768 = vpop.f32.mrf.mxu0
        %5769 = vdwg.mxu0
        %v5771 = vsel %vm1299, %v5636, 0
        %v5774 = vsel %vm1383, %v5404, 0
        %5776 = vmatpush.bf16.msra.mxu0 0
        %5777 = vmatpush.bf16.msra.mxu0 0
        %5778 = vmatpush.bf16.msra.mxu0 0
        %5779 = vmatpush.bf16.msra.mxu0 0
        %5780 = vmatpush.bf16.msra.mxu0 0
        %5781 = vmatpush.bf16.msra.mxu0 0
        %5782 = vmatpush.bf16.msra.mxu0 0
        %5783 = vmatpush.bf16.msra.mxu0 %v5774
        %5784 = vmatmul.bf16.gmra.mxu0 %v5771
        %v5785 = vpop.f32.mrf.mxu0
        %v5786 = vadd.f32 0.0, %v5785
        %v5787 = vpop.f32.mrf.mxu0
        %5788 = vdwg.mxu0
        %v5789 = vrcp.pop %v5607
        %v5790 = vrcp.pop %v5610
        %v5791 = vrcp.pop %v5613
        %v5792 = vrcp.pop %v5616
        %v5793 = vrcp.pop %v5619
        %v5794 = vrcp.pop %v5622
        %v5795 = vrcp.pop %v5625
        %v5796 = vrcp.pop %v5628
        %v5797 = vmul.f32 %v5653, %v5789
        %v5798 = vmul.f32 %v5672, %v5790
        %v5799 = vmul.f32 %v5691, %v5791
        %v5800 = vmul.f32 %v5710, %v5792
        %v5801 = vmul.f32 %v5729, %v5793
        %v5802 = vmul.f32 %v5748, %v5794
        %v5803 = vmul.f32 %v5767, %v5795
        %v5804 = vmul.f32 %v5786, %v5796
        %v5805 = vpack.c.bf16 %v5797, %v5797
        %v5806 = vpack.c.bf16 %v5798, %v5798
        %v5807 = vpack.c.bf16 %v5799, %v5799
        %v5808 = vpack.c.bf16 %v5800, %v5800
        %v5809 = vpack.c.bf16 %v5801, %v5801
        %v5810 = vpack.c.bf16 %v5802, %v5802
        %v5811 = vpack.c.bf16 %v5803, %v5803
        %v5812 = vpack.c.bf16 %v5804, %v5804
        %v5814 = vsel %vm1146, %v5805, 0
        %v5817 = vsel %vm1560, %v4691, 0
        %5819 = vmatpush.bf16.msra.mxu0 0
        %5820 = vmatpush.bf16.msra.mxu0 0
        %5821 = vmatpush.bf16.msra.mxu0 0
        %5822 = vmatpush.bf16.msra.mxu0 0
        %5823 = vmatpush.bf16.msra.mxu0 0
        %5824 = vmatpush.bf16.msra.mxu0 0
        %5825 = vmatpush.bf16.msra.mxu0 0
        %5826 = vmatpush.bf16.msra.mxu0 %v5817
        %5827 = vmatmul.bf16.gmra.mxu0 %v5814
        %v5828 = vpop.f32.mrf.mxu0
        %v5829 = vadd.f32 0.0, %v5828
        %v5830 = vpop.f32.mrf.mxu0
        %5831 = vdwg.mxu0
        %v5833 = vsel %vm1146, %v5806, 0
        %v5836 = vsel %vm1560, %v4692, 0
        %5838 = vmatpush.bf16.msra.mxu0 0
        %5839 = vmatpush.bf16.msra.mxu0 0
        %5840 = vmatpush.bf16.msra.mxu0 0
        %5841 = vmatpush.bf16.msra.mxu0 0
        %5842 = vmatpush.bf16.msra.mxu0 0
        %5843 = vmatpush.bf16.msra.mxu0 0
        %5844 = vmatpush.bf16.msra.mxu0 0
        %5845 = vmatpush.bf16.msra.mxu0 %v5836
        %5846 = vmatmul.bf16.gmra.mxu0 %v5833
        %v5847 = vpop.f32.mrf.mxu0
        %v5848 = vadd.f32 0.0, %v5847
        %v5849 = vpop.f32.mrf.mxu0
        %5850 = vdwg.mxu0
        %v5852 = vsel %vm1146, %v5807, 0
        %v5855 = vsel %vm1560, %v4693, 0
        %5857 = vmatpush.bf16.msra.mxu0 0
        %5858 = vmatpush.bf16.msra.mxu0 0
        %5859 = vmatpush.bf16.msra.mxu0 0
        %5860 = vmatpush.bf16.msra.mxu0 0
        %5861 = vmatpush.bf16.msra.mxu0 0
        %5862 = vmatpush.bf16.msra.mxu0 0
        %5863 = vmatpush.bf16.msra.mxu0 0
        %5864 = vmatpush.bf16.msra.mxu0 %v5855
        %5865 = vmatmul.bf16.gmra.mxu0 %v5852
        %v5866 = vpop.f32.mrf.mxu0
        %v5867 = vadd.f32 0.0, %v5866
        %v5868 = vpop.f32.mrf.mxu0
        %5869 = vdwg.mxu0
        %v5871 = vsel %vm1146, %v5808, 0
        %v5874 = vsel %vm1560, %v4694, 0
        %5876 = vmatpush.bf16.msra.mxu0 0
        %5877 = vmatpush.bf16.msra.mxu0 0
        %5878 = vmatpush.bf16.msra.mxu0 0
        %5879 = vmatpush.bf16.msra.mxu0 0
        %5880 = vmatpush.bf16.msra.mxu0 0
        %5881 = vmatpush.bf16.msra.mxu0 0
        %5882 = vmatpush.bf16.msra.mxu0 0
        %5883 = vmatpush.bf16.msra.mxu0 %v5874
        %5884 = vmatmul.bf16.gmra.mxu0 %v5871
        %v5885 = vpop.f32.mrf.mxu0
        %v5886 = vadd.f32 0.0, %v5885
        %v5887 = vpop.f32.mrf.mxu0
        %5888 = vdwg.mxu0
        %v5890 = vsel %vm1146, %v5809, 0
        %v5893 = vsel %vm1560, %v4695, 0
        %5895 = vmatpush.bf16.msra.mxu0 0
        %5896 = vmatpush.bf16.msra.mxu0 0
        %5897 = vmatpush.bf16.msra.mxu0 0
        %5898 = vmatpush.bf16.msra.mxu0 0
        %5899 = vmatpush.bf16.msra.mxu0 0
        %5900 = vmatpush.bf16.msra.mxu0 0
        %5901 = vmatpush.bf16.msra.mxu0 0
        %5902 = vmatpush.bf16.msra.mxu0 %v5893
        %5903 = vmatmul.bf16.gmra.mxu0 %v5890
        %v5904 = vpop.f32.mrf.mxu0
        %v5905 = vadd.f32 0.0, %v5904
        %v5906 = vpop.f32.mrf.mxu0
        %5907 = vdwg.mxu0
        %v5909 = vsel %vm1146, %v5810, 0
        %v5912 = vsel %vm1560, %v4696, 0
        %5914 = vmatpush.bf16.msra.mxu0 0
        %5915 = vmatpush.bf16.msra.mxu0 0
        %5916 = vmatpush.bf16.msra.mxu0 0
        %5917 = vmatpush.bf16.msra.mxu0 0
        %5918 = vmatpush.bf16.msra.mxu0 0
        %5919 = vmatpush.bf16.msra.mxu0 0
        %5920 = vmatpush.bf16.msra.mxu0 0
        %5921 = vmatpush.bf16.msra.mxu0 %v5912
        %5922 = vmatmul.bf16.gmra.mxu0 %v5909
        %v5923 = vpop.f32.mrf.mxu0
        %v5924 = vadd.f32 0.0, %v5923
        %v5925 = vpop.f32.mrf.mxu0
        %5926 = vdwg.mxu0
        %v5928 = vsel %vm1146, %v5811, 0
        %v5931 = vsel %vm1560, %v4697, 0
        %5933 = vmatpush.bf16.msra.mxu0 0
        %5934 = vmatpush.bf16.msra.mxu0 0
        %5935 = vmatpush.bf16.msra.mxu0 0
        %5936 = vmatpush.bf16.msra.mxu0 0
        %5937 = vmatpush.bf16.msra.mxu0 0
        %5938 = vmatpush.bf16.msra.mxu0 0
        %5939 = vmatpush.bf16.msra.mxu0 0
        %5940 = vmatpush.bf16.msra.mxu0 %v5931
        %5941 = vmatmul.bf16.gmra.mxu0 %v5928
        %v5942 = vpop.f32.mrf.mxu0
        %v5943 = vadd.f32 0.0, %v5942
        %v5944 = vpop.f32.mrf.mxu0
        %5945 = vdwg.mxu0
        %v5947 = vsel %vm1146, %v5812, 0
        %v5950 = vsel %vm1560, %v4698, 0
        %5952 = vmatpush.bf16.msra.mxu0 0
        %5953 = vmatpush.bf16.msra.mxu0 0
        %5954 = vmatpush.bf16.msra.mxu0 0
        %5955 = vmatpush.bf16.msra.mxu0 0
        %5956 = vmatpush.bf16.msra.mxu0 0
        %5957 = vmatpush.bf16.msra.mxu0 0
        %5958 = vmatpush.bf16.msra.mxu0 0
        %5959 = vmatpush.bf16.msra.mxu0 %v5950
        %5960 = vmatmul.bf16.gmra.mxu0 %v5947
        %v5961 = vpop.f32.mrf.mxu0
        %v5962 = vadd.f32 0.0, %v5961
        %v5963 = vpop.f32.mrf.mxu0
        %5964 = vdwg.mxu0
        %v5965 = vsel %vm479, %v5829, 0.0
        %v5966 = vsel %vm479, %v5848, 0.0
        %v5967 = vadd.f32 %v5965, %v5966
        %v5968 = vsel %vm479, %v5867, 0.0
        %v5969 = vadd.f32 %v5967, %v5968
        %v5970 = vsel %vm479, %v5886, 0.0
        %v5971 = vadd.f32 %v5969, %v5970
        %v5972 = vsel %vm479, %v5905, 0.0
        %v5973 = vadd.f32 %v5971, %v5972
        %v5974 = vsel %vm479, %v5924, 0.0
        %v5975 = vadd.f32 %v5973, %v5974
        %v5976 = vsel %vm479, %v5943, 0.0
        %v5977 = vadd.f32 %v5975, %v5976
        %v5978 = vsel %vm479, %v5962, 0.0
        %v5979 = vadd.f32 %v5977, %v5978
        %v5980 = vperm.slane %v4704, 0
        %v5981 = vadd.f32 %v5979, %v5980
        %v5982 = vadd.f32 %v4592, %v5981
        %v5983 = vsel %vm479, %v5982, 0.0
        %5984 = vadd.xlane.f32.xlu0 %v5983
        %v5985 = vpop.xlane.xlu0 %5984
        %v5986 = vmul.f32 %v5985, %v1737
        %v5987 = vsub.f32 %v5982, %v5986
        %v5988 = vmul.f32 %v5987, %v5987
        %v5989 = vsel %vm479, %v5988, 0.0
        %5990 = vadd.xlane.f32.xlu0 %v5989
        %v5991 = vpop.xlane.xlu0 %5990
        %v5992 = vmul.f32 %v5991, %v1737
        %v5993 = vadd.f32 %v5992, 1e-05
        %v5994 = vrsqrt.pop %v5993
        %v5995 = vmul.f32 %v5994, %v5993
        %v5996 = vmul.f32 %v5995, %v5994
        %v5997 = vmul.f32 0.5, %v5996
        %v5998 = vsub.f32 1.5, %v5997
        %v5999 = vmul.f32 %v5994, %v5998
        %vm6000 = vweird.f32 %v5993
        %vm6001 = vweird.f32 %v5994
        %vm6002 = vmor %vm6000, %vm6001
        %v6003 = vsel %vm6002, %v5994, %v5999
        %v6004 = vmul.f32 %v5987, %v6003
        %v6005 = vperm.slane %v4704, 1
        %v6006 = vmul.f32 %v6004, %v6005
        %v6007 = vperm.slane %v4704, 2
        %v6008 = vadd.f32 %v6006, %v6007
        %6009 = vst.msk [vmem:[%s296] sm:$0xff] %vm479, %v6008
        %s6010 = sand.u32 %s203, 1
        %s6011 = scalar_lea.sflag [#allocation3], %s6010
        %s6012 = sand.u32 %s203, 1
        %s6013 = smul.addr %s6012, 8
        %s6014 = scalar_lea.vmem [#allocation2], %s6013
        // Predicated region
        $region53: #{tpu_custom_call.1} parent=51 // pred_check
          %p6015 = pneg %p213
        $region54: #{tpu_custom_call.1} parent=51 // pred_check_branch
          %6017 = sbr.rel (%p6015) target = $region56
        $region55: #{tpu_custom_call.1} parent=51 // pred_region
          %6019 = vsyncadd %s6011, 0
          %s6020 = smul.addr %s22, 8
          %s6021 = scalar_lea.hbm %s8, %s6020
          %s6023 = sshll.u32 %s6014, 4
          %s6024 = int_to_ptr.vmem [resolvable:$true] %s6023
          %s6025 = sshll.u32 %s6021, 4
          %s6026 = int_to_ptr.hbm [resolvable:$true] %s6025
          %6028 = dma.vmem_to_hbm [thread:$0]  %s6024, 128, %s6026, %s6011
        $region56: #{tpu_custom_call.1} parent=51 // pred_fallthru
          _
      $region52: #{tpu_custom_call.1} parent=5 // pred_fallthru
        _
      %p6029 = scmp.le.s32.totalorder 2, %s17
      // Predicated region
      $region57: #{tpu_custom_call.1} parent=5 // pred_check
        %p6030 = pneg %p6029
      $region58: #{tpu_custom_call.1} parent=5 // pred_check_branch
        %6032 = sbr.rel (%p6030) target = $region60
      $region59: #{tpu_custom_call.1} parent=5 // pred_region
        %s6033 = ssub.s32 %s17, 2
        // Predicated region
        $region61: #{tpu_custom_call.1} parent=59 // pred_check
          %p6034 = pneg %p219
        $region62: #{tpu_custom_call.1} parent=59 // pred_check_branch
          %6036 = sbr.rel (%p6034) target = $region64
        $region63: #{tpu_custom_call.1} parent=59 // pred_region
          %s6037 = sand.u32 %s204, 1
          %s6038 = scalar_lea.sflag [#allocation3], %s6037
          %s6039 = sand.u32 %s204, 1
          %s6040 = smul.addr %s6039, 8
          %s6041 = scalar_lea.vmem [#allocation2], %s6040
          %6043 = dma.done %s6038, 128
        $region64: #{tpu_custom_call.1} parent=59 // pred_fallthru
          _
      $region60: #{tpu_custom_call.1} parent=5 // pred_fallthru
        _
    $region6: #{tpu_custom_call.1} parent=1 // loop_footer
      %s21 = sadd.s32 1, %s17
    $region7: #{tpu_custom_call.1} parent=1 // loop_footer_branch
      %16 = sbr.rel target = $region3
    $region8: #{tpu_custom_call.1} parent=1 // loop_exit
      _
    %6044 = vsyncpa [#allocation3], 1
    %s6045 = scalar_lea.sflag [#allocation3], 1
    %6046 = vsyncpa %s6045, 1

</llo_original>
